<compile_context>
chip_gen: v7x
topology: tpu7x:2x2x1
jax: 0.10.0
libtpu: 0.0.40
codegen_flags: <defaults>
</compile_context>

<pallas_src>
import functools

import jax
import jax.numpy as jnp
from jax.experimental import pallas as pl
from jax.experimental.pallas import tpu as pltpu

INPUT_SIZE = 29
HIDDEN_SIZE = 100
NUM_LAYERS = 3

HP = 128     # padded hidden size (lane aligned); fused gate width = 4*HP = 512
IP = 128     # padded input feature size
OP = 128     # padded linear-head output size
BTILE = 8    # sublane tile; batch is padded to a multiple of this


# ------------------------- Fused model kernel -------------------------------
def _sales_kernel(x_ref,
                  wih0_ref, whh0_ref, b0_ref,
                  w1_ref, b1_ref,
                  w2_ref, b2_ref,
                  wlin_ref, blin_ref,
                  out_ref,
                  gin_sc,
                  *, seq_len, batch_p):
    """Fused 3-layer LSTM + Linear forward (single invocation, no grid).

    x_ref    : (T*BP, IP)     time-major, batch- and lane-padded input
    wih0_ref : (IP, 4*HP)     layer-0 fused input weights, gates [i|f|g|o]
    whh0_ref : (HP, 4*HP)     layer-0 fused recurrent weights
    w1_ref   : (2*HP, 4*HP)   layer-1 fused [W_ih ; W_hh]  (K = 256)
    w2_ref   : (2*HP, 4*HP)   layer-2 fused [W_ih ; W_hh]
    b*_ref   : (1, 4*HP)      combined bias b_ih + b_hh (zero in padded lanes)
    wlin_ref : (HP, OP)       linear head weight (transposed, zero padded)
    blin_ref : (1, OP)
    out_ref  : (T*BP, OP)
    gin_sc   : (T*BP, 4*HP)   scratch: hoisted layer-0 input projection
    """
    T, BP, L = seq_len, batch_p, NUM_LAYERS

    # Hoisted layer-0 input projection + bias for ALL time steps: one matmul,
    # off the recurrent chain.  Per-step reads below are full 8-row-aligned
    # (BP, 4*HP) tiles.
    gin_sc[...] = jnp.dot(x_ref[...], wih0_ref[...],
                          preferred_element_type=jnp.float32) + b0_ref[...]

    def lstm_cell(g, c_prev):
        # PyTorch gate order: i, f, g, o (each HP lanes, 128-aligned slices).
        i_g = jax.nn.sigmoid(g[:, 0 * HP:1 * HP])
        f_g = jax.nn.sigmoid(g[:, 1 * HP:2 * HP])
        g_g = jnp.tanh(g[:, 2 * HP:3 * HP])
        o_g = jax.nn.sigmoid(g[:, 3 * HP:4 * HP])
        c_new = f_g * c_prev + i_g * g_g
        h_new = o_g * jnp.tanh(c_new)
        return h_new, c_new

    zeros = jnp.zeros((BP, HP), jnp.float32)
    h = [zeros] * L
    c = [zeros] * L
    out = [[None] * T for _ in range(L)]
    fused_w = {1: (w1_ref, b1_ref), 2: (w2_ref, b2_ref)}

    # Wavefront (diagonal) schedule over (layer, t): cells with equal t + l are
    # independent, so the dependent chain is T + L - 1 cells instead of T * L.
    for wave in range(T + L - 1):
        for l in range(L):
            t = wave - l
            if t < 0 or t >= T:
                continue
            if l == 0:
                g = gin_sc[t * BP:(t + 1) * BP, :] + jnp.dot(
                    h[0], whh0_ref[...], preferred_element_type=jnp.float32)
            else:
                w_ref, b_ref = fused_w[l]
                # (BP, 2*HP) lane-concat of the layer-below output and h_{t-1}.
                lhs = jnp.concatenate([out[l - 1][t], h[l]], axis=1)
                g = jnp.dot(lhs, w_ref[...],
                            preferred_element_type=jnp.float32) + b_ref[...]
            h[l], c[l] = lstm_cell(g, c[l])
            out[l][t] = h[l]

    # Linear head on the full layer-2 sequence: one lane-dense (T*BP, OP) store.
    seq = jnp.concatenate(out[L - 1], axis=0)  # (T*BP, HP)
    out_ref[...] = jnp.dot(seq, wlin_ref[...],
                           preferred_element_type=jnp.float32) + blin_ref[...]


# ------------------------- Parameter prep ------------------------------------
def _fuse_gates(w, rows_pad):
    """PyTorch (4H, in) -> (rows_pad, 4*HP): transposed, per-gate lane-aligned,
    zero-padded rows/cols."""
    H = HIDDEN_SIZE
    in_size = w.shape[1]
    gates = w.reshape(4, H, in_size)                        # (4, H, in)
    cols = [jnp.pad(gates[k].T, ((0, rows_pad - in_size), (0, HP - H)))
            for k in range(4)]                               # each (rows_pad, HP)
    return jnp.concatenate(cols, axis=1)                     # (rows_pad, 4*HP)


def _fuse_bias(b_ih, b_hh):
    H = HIDDEN_SIZE
    b = (b_ih + b_hh).reshape(4, H)
    return jnp.concatenate(
        [jnp.pad(b[k], (0, HP - H)) for k in range(4)]).reshape(1, 4 * HP)


def _prep_layer0(w_ih, w_hh, b_ih, b_hh):
    return _fuse_gates(w_ih, IP), _fuse_gates(w_hh, HP), _fuse_bias(b_ih, b_hh)


def _prep_fused_layer(w_ih, w_hh, b_ih, b_hh):
    """Layers 1/2: stack [W_ih ; W_hh] along K -> (2*HP, 4*HP)."""
    w = jnp.concatenate([_fuse_gates(w_ih, HP), _fuse_gates(w_hh, HP)], axis=0)
    return w, _fuse_bias(b_ih, b_hh)


def _prep_linear(w, b):
    """PyTorch Linear(100 -> 29): weight (29, 100), bias (29,)."""
    w_f = jnp.pad(w.T, ((0, HP - HIDDEN_SIZE), (0, OP - INPUT_SIZE)))  # (HP, OP)
    b_f = jnp.pad(b, (0, OP - INPUT_SIZE)).reshape(1, OP)
    return w_f, b_f


def init_params(key):
    """Deterministic init matching PyTorch LSTM/Linear param shapes."""
    params = {"lstm": [], "linear": None}
    bound = 1.0 / jnp.sqrt(float(HIDDEN_SIZE))
    for layer in range(NUM_LAYERS):
        in_size = INPUT_SIZE if layer == 0 else HIDDEN_SIZE
        key, k1, k2, k3, k4 = jax.random.split(key, 5)
        w_ih = jax.random.uniform(k1, (4 * HIDDEN_SIZE, in_size),
                                  minval=-bound, maxval=bound, dtype=jnp.float32)
        w_hh = jax.random.uniform(k2, (4 * HIDDEN_SIZE, HIDDEN_SIZE),
                                  minval=-bound, maxval=bound, dtype=jnp.float32)
        b_ih = jax.random.uniform(k3, (4 * HIDDEN_SIZE,),
                                  minval=-bound, maxval=bound, dtype=jnp.float32)
        b_hh = jax.random.uniform(k4, (4 * HIDDEN_SIZE,),
                                  minval=-bound, maxval=bound, dtype=jnp.float32)
        params["lstm"].append((w_ih, w_hh, b_ih, b_hh))
    key, k1, k2 = jax.random.split(key, 3)
    w = jax.random.uniform(k1, (INPUT_SIZE, HIDDEN_SIZE),
                           minval=-bound, maxval=bound, dtype=jnp.float32)
    b = jax.random.uniform(k2, (INPUT_SIZE,),
                           minval=-bound, maxval=bound, dtype=jnp.float32)
    params["linear"] = (w, b)
    return params


# ------------------------- Forward pass --------------------------------------
def sales_model_forward(x, params):
    """x: (B, T, 29) float32 -> (B, T, 29) float32."""
    B, T, F = x.shape
    BP = ((B + BTILE - 1) // BTILE) * BTILE   # pad batch to full sublane tiles

    # Time-major layout (row = t*BP + b) with zero batch/lane padding so every
    # per-time-step block is a whole (8,128)-aligned tile.
    x_tb = jnp.transpose(x, (1, 0, 2))                           # (T, B, F)
    x_p = jnp.pad(x_tb, ((0, 0), (0, BP - B), (0, IP - F)))      # (T, BP, IP)
    x_flat = x_p.reshape(T * BP, IP)

    wih0, whh0, b0 = _prep_layer0(*params["lstm"][0])
    w1, b1 = _prep_fused_layer(*params["lstm"][1])
    w2, b2 = _prep_fused_layer(*params["lstm"][2])
    w_lin, b_lin = _prep_linear(*params["linear"])

    kernel = functools.partial(_sales_kernel, seq_len=T, batch_p=BP)
    vmem_spec = pl.BlockSpec(memory_space=pltpu.MemorySpace.VMEM)

    out_p = pl.pallas_call(
        kernel,
        out_shape=jax.ShapeDtypeStruct((T * BP, OP), jnp.float32),
        in_specs=[vmem_spec] * 10,
        out_specs=vmem_spec,
        scratch_shapes=[pltpu.VMEM((T * BP, 4 * HP), jnp.float32)],
    )(x_flat, wih0, whh0, b0, w1, b1, w2, b2, w_lin, b_lin)

    y = out_p.reshape(T, BP, OP)[:, :B, :INPUT_SIZE]             # drop padding
    return jnp.transpose(y, (1, 0, 2))


# ------------------------- Pure-JAX reference --------------------------------
def _reference_forward(x, params):
    B, T, _ = x.shape
    h_seq = x
    for (w_ih, w_hh, b_ih, b_hh) in params["lstm"]:
        H = HIDDEN_SIZE
        h = jnp.zeros((B, H), jnp.float32)
        c = jnp.zeros((B, H), jnp.float32)
        outs = []
        for t in range(T):
            gates = h_seq[:, t, :] @ w_ih.T + b_ih + h @ w_hh.T + b_hh
            i = jax.nn.sigmoid(gates[:, 0:H])
            f = jax.nn.sigmoid(gates[:, H:2 * H])
            g = jnp.tanh(gates[:, 2 * H:3 * H])
            o = jax.nn.sigmoid(gates[:, 3 * H:4 * H])
            c = f * c + i * g
            h = o * jnp.tanh(c)
            outs.append(h)
        h_seq = jnp.stack(outs, axis=1)
    w, b = params["linear"]
    return h_seq @ w.T + b


# ------------------------- Main ----------------------------------------------
if __name__ == "__main__":
    key = jax.random.PRNGKey(0)
    key, pkey, xkey = jax.random.split(key, 3)

    params = init_params(pkey)

    B, T = 2, 8
    x = jax.random.normal(xkey, (B, T, INPUT_SIZE), dtype=jnp.float32)

    y = jax.jit(sales_model_forward)(x, params)
    y = jax.block_until_ready(y)

    y_ref = _reference_forward(x, params)
    assert y.shape == (B, T, INPUT_SIZE)
    # Slightly relaxed tolerance: kernel fuses the K=256 contraction per cell,
    # so MXU rounding/accumulation order differs marginally from the reference.
    assert jnp.allclose(y, y_ref, atol=5e-4, rtol=5e-4), "mismatch vs reference"

    print("KERNEL_OK")
</pallas_src>

<mosaic_0001>
module attributes {stable_mosaic.version = 11 : i64} {
  func.func @_sales_kernel(%arg0: memref<64x128xf32, #tpu.memory_space<vmem>>, %arg1: memref<128x512xf32, #tpu.memory_space<vmem>>, %arg2: memref<128x512xf32, #tpu.memory_space<vmem>>, %arg3: memref<1x512xf32, #tpu.memory_space<vmem>>, %arg4: memref<256x512xf32, #tpu.memory_space<vmem>>, %arg5: memref<1x512xf32, #tpu.memory_space<vmem>>, %arg6: memref<256x512xf32, #tpu.memory_space<vmem>>, %arg7: memref<1x512xf32, #tpu.memory_space<vmem>>, %arg8: memref<128x128xf32, #tpu.memory_space<vmem>>, %arg9: memref<1x128xf32, #tpu.memory_space<vmem>>, %arg10: memref<64x128xf32, #tpu.memory_space<vmem>>, %arg11: memref<64x512xf32, #tpu.memory_space<vmem>>) attributes {dimension_semantics = [], scalar_prefetch = 0 : i64, scratch_operands = 1 : i64, tpu.core_type = #tpu.core_type<tc>} {
    %c0 = arith.constant 0 : index
    %c0_0 = arith.constant 0 : index
    %0 = vector.load %arg0[%c0, %c0_0] : memref<64x128xf32, #tpu.memory_space<vmem>>, vector<64x128xf32>
    %c0_1 = arith.constant 0 : index
    %c0_2 = arith.constant 0 : index
    %1 = vector.load %arg1[%c0_1, %c0_2] : memref<128x512xf32, #tpu.memory_space<vmem>>, vector<128x512xf32>
    %cst = arith.constant dense<0.000000e+00> : vector<64x512xf32>
    %2 = tpu.matmul %0, %1, %cst {dimension_numbers = #tpu.dot_dimension_numbers<[1], [0], [0], [1], [0, 0, 1, 1], [], []>} : vector<64x128xf32>, vector<128x512xf32>, vector<64x512xf32> -> vector<64x512xf32>
    %c0_3 = arith.constant 0 : index
    %c0_4 = arith.constant 0 : index
    %3 = vector.load %arg3[%c0_3, %c0_4] : memref<1x512xf32, #tpu.memory_space<vmem>>, vector<1x512xf32>
    %4 = vector.broadcast %3 : vector<1x512xf32> to vector<64x512xf32>
    %5 = arith.addf %2, %4 : vector<64x512xf32>
    %c0_5 = arith.constant 0 : index
    %c0_6 = arith.constant 0 : index
    %6 = vector.load %arg11[%c0_5, %c0_6] : memref<64x512xf32, #tpu.memory_space<vmem>>, vector<64x512xf32>
    tpu.vector_store %arg11[%c0_5, %c0_6], %5 {strides = array<i32>} : memref<64x512xf32, #tpu.memory_space<vmem>>, vector<64x512xf32>,
    %cst_7 = arith.constant 0.000000e+00 : f32
    %7 = vector.broadcast %cst_7 : f32 to vector<8x128xf32>
    %c0_8 = arith.constant 0 : index
    %c0_9 = arith.constant 0 : index
    %8 = vector.load %arg11[%c0_8, %c0_9] : memref<64x512xf32, #tpu.memory_space<vmem>>, vector<8x512xf32>
    %c0_10 = arith.constant 0 : index
    %c0_11 = arith.constant 0 : index
    %9 = vector.load %arg2[%c0_10, %c0_11] : memref<128x512xf32, #tpu.memory_space<vmem>>, vector<128x512xf32>
    %cst_12 = arith.constant dense<0.000000e+00> : vector<8x512xf32>
    %10 = tpu.matmul %7, %9, %cst_12 {dimension_numbers = #tpu.dot_dimension_numbers<[1], [0], [0], [1], [0, 0, 1, 1], [], []>} : vector<8x128xf32>, vector<128x512xf32>, vector<8x512xf32> -> vector<8x512xf32>
    %11 = arith.addf %8, %10 : vector<8x512xf32>
    %12 = vector.extract_strided_slice %11 {offsets = [0, 0], sizes = [8, 128], strides = [1, 1]} : vector<8x512xf32> to vector<8x128xf32>
    %13 = arith.negf %12 : vector<8x128xf32>
    %14 = math.exp %13 : vector<8x128xf32>
    %cst_13 = arith.constant 1.000000e+00 : f32
    %15 = vector.broadcast %cst_13 : f32 to vector<8x128xf32>
    %16 = arith.addf %15, %14 : vector<8x128xf32>
    %17 = arith.divf %15, %16 : vector<8x128xf32>
    %18 = vector.extract_strided_slice %11 {offsets = [0, 128], sizes = [8, 128], strides = [1, 1]} : vector<8x512xf32> to vector<8x128xf32>
    %19 = arith.negf %18 : vector<8x128xf32>
    %20 = math.exp %19 : vector<8x128xf32>
    %cst_14 = arith.constant 1.000000e+00 : f32
    %21 = vector.broadcast %cst_14 : f32 to vector<8x128xf32>
    %22 = arith.addf %21, %20 : vector<8x128xf32>
    %23 = arith.divf %21, %22 : vector<8x128xf32>
    %24 = vector.extract_strided_slice %11 {offsets = [0, 256], sizes = [8, 128], strides = [1, 1]} : vector<8x512xf32> to vector<8x128xf32>
    %25 = math.tanh %24 : vector<8x128xf32>
    %26 = vector.extract_strided_slice %11 {offsets = [0, 384], sizes = [8, 128], strides = [1, 1]} : vector<8x512xf32> to vector<8x128xf32>
    %27 = arith.negf %26 : vector<8x128xf32>
    %28 = math.exp %27 : vector<8x128xf32>
    %cst_15 = arith.constant 1.000000e+00 : f32
    %29 = vector.broadcast %cst_15 : f32 to vector<8x128xf32>
    %30 = arith.addf %29, %28 : vector<8x128xf32>
    %31 = arith.divf %29, %30 : vector<8x128xf32>
    %32 = arith.mulf %23, %7 : vector<8x128xf32>
    %33 = arith.mulf %17, %25 : vector<8x128xf32>
    %34 = arith.addf %32, %33 : vector<8x128xf32>
    %35 = math.tanh %34 : vector<8x128xf32>
    %36 = arith.mulf %31, %35 : vector<8x128xf32>
    %c8 = arith.constant 8 : index
    %c0_16 = arith.constant 0 : index
    %37 = vector.load %arg11[%c8, %c0_16] : memref<64x512xf32, #tpu.memory_space<vmem>>, vector<8x512xf32>
    %c0_17 = arith.constant 0 : index
    %c0_18 = arith.constant 0 : index
    %38 = vector.load %arg2[%c0_17, %c0_18] : memref<128x512xf32, #tpu.memory_space<vmem>>, vector<128x512xf32>
    %cst_19 = arith.constant dense<0.000000e+00> : vector<8x512xf32>
    %39 = tpu.matmul %36, %38, %cst_19 {dimension_numbers = #tpu.dot_dimension_numbers<[1], [0], [0], [1], [0, 0, 1, 1], [], []>} : vector<8x128xf32>, vector<128x512xf32>, vector<8x512xf32> -> vector<8x512xf32>
    %40 = arith.addf %37, %39 : vector<8x512xf32>
    %41 = vector.extract_strided_slice %40 {offsets = [0, 0], sizes = [8, 128], strides = [1, 1]} : vector<8x512xf32> to vector<8x128xf32>
    %42 = arith.negf %41 : vector<8x128xf32>
    %43 = math.exp %42 : vector<8x128xf32>
    %cst_20 = arith.constant 1.000000e+00 : f32
    %44 = vector.broadcast %cst_20 : f32 to vector<8x128xf32>
    %45 = arith.addf %44, %43 : vector<8x128xf32>
    %46 = arith.divf %44, %45 : vector<8x128xf32>
    %47 = vector.extract_strided_slice %40 {offsets = [0, 128], sizes = [8, 128], strides = [1, 1]} : vector<8x512xf32> to vector<8x128xf32>
    %48 = arith.negf %47 : vector<8x128xf32>
    %49 = math.exp %48 : vector<8x128xf32>
    %cst_21 = arith.constant 1.000000e+00 : f32
    %50 = vector.broadcast %cst_21 : f32 to vector<8x128xf32>
    %51 = arith.addf %50, %49 : vector<8x128xf32>
    %52 = arith.divf %50, %51 : vector<8x128xf32>
    %53 = vector.extract_strided_slice %40 {offsets = [0, 256], sizes = [8, 128], strides = [1, 1]} : vector<8x512xf32> to vector<8x128xf32>
    %54 = math.tanh %53 : vector<8x128xf32>
    %55 = vector.extract_strided_slice %40 {offsets = [0, 384], sizes = [8, 128], strides = [1, 1]} : vector<8x512xf32> to vector<8x128xf32>
    %56 = arith.negf %55 : vector<8x128xf32>
    %57 = math.exp %56 : vector<8x128xf32>
    %cst_22 = arith.constant 1.000000e+00 : f32
    %58 = vector.broadcast %cst_22 : f32 to vector<8x128xf32>
    %59 = arith.addf %58, %57 : vector<8x128xf32>
    %60 = arith.divf %58, %59 : vector<8x128xf32>
    %61 = arith.mulf %52, %34 : vector<8x128xf32>
    %62 = arith.mulf %46, %54 : vector<8x128xf32>
    %63 = arith.addf %61, %62 : vector<8x128xf32>
    %64 = math.tanh %63 : vector<8x128xf32>
    %65 = arith.mulf %60, %64 : vector<8x128xf32>
    %66 = tpu.concatenate %36, %7 in 1 : vector<8x128xf32>, vector<8x128xf32> -> vector<8x256xf32>
    %c0_23 = arith.constant 0 : index
    %c0_24 = arith.constant 0 : index
    %67 = vector.load %arg4[%c0_23, %c0_24] : memref<256x512xf32, #tpu.memory_space<vmem>>, vector<256x512xf32>
    %cst_25 = arith.constant dense<0.000000e+00> : vector<8x512xf32>
    %68 = tpu.matmul %66, %67, %cst_25 {dimension_numbers = #tpu.dot_dimension_numbers<[1], [0], [0], [1], [0, 0, 1, 1], [], []>} : vector<8x256xf32>, vector<256x512xf32>, vector<8x512xf32> -> vector<8x512xf32>
    %c0_26 = arith.constant 0 : index
    %c0_27 = arith.constant 0 : index
    %69 = vector.load %arg5[%c0_26, %c0_27] : memref<1x512xf32, #tpu.memory_space<vmem>>, vector<1x512xf32>
    %70 = vector.broadcast %69 : vector<1x512xf32> to vector<8x512xf32>
    %71 = arith.addf %68, %70 : vector<8x512xf32>
    %72 = vector.extract_strided_slice %71 {offsets = [0, 0], sizes = [8, 128], strides = [1, 1]} : vector<8x512xf32> to vector<8x128xf32>
    %73 = arith.negf %72 : vector<8x128xf32>
    %74 = math.exp %73 : vector<8x128xf32>
    %cst_28 = arith.constant 1.000000e+00 : f32
    %75 = vector.broadcast %cst_28 : f32 to vector<8x128xf32>
    %76 = arith.addf %75, %74 : vector<8x128xf32>
    %77 = arith.divf %75, %76 : vector<8x128xf32>
    %78 = vector.extract_strided_slice %71 {offsets = [0, 128], sizes = [8, 128], strides = [1, 1]} : vector<8x512xf32> to vector<8x128xf32>
    %79 = arith.negf %78 : vector<8x128xf32>
    %80 = math.exp %79 : vector<8x128xf32>
    %cst_29 = arith.constant 1.000000e+00 : f32
    %81 = vector.broadcast %cst_29 : f32 to vector<8x128xf32>
    %82 = arith.addf %81, %80 : vector<8x128xf32>
    %83 = arith.divf %81, %82 : vector<8x128xf32>
    %84 = vector.extract_strided_slice %71 {offsets = [0, 256], sizes = [8, 128], strides = [1, 1]} : vector<8x512xf32> to vector<8x128xf32>
    %85 = math.tanh %84 : vector<8x128xf32>
    %86 = vector.extract_strided_slice %71 {offsets = [0, 384], sizes = [8, 128], strides = [1, 1]} : vector<8x512xf32> to vector<8x128xf32>
    %87 = arith.negf %86 : vector<8x128xf32>
    %88 = math.exp %87 : vector<8x128xf32>
    %cst_30 = arith.constant 1.000000e+00 : f32
    %89 = vector.broadcast %cst_30 : f32 to vector<8x128xf32>
    %90 = arith.addf %89, %88 : vector<8x128xf32>
    %91 = arith.divf %89, %90 : vector<8x128xf32>
    %92 = arith.mulf %83, %7 : vector<8x128xf32>
    %93 = arith.mulf %77, %85 : vector<8x128xf32>
    %94 = arith.addf %92, %93 : vector<8x128xf32>
    %95 = math.tanh %94 : vector<8x128xf32>
    %96 = arith.mulf %91, %95 : vector<8x128xf32>
    %c16 = arith.constant 16 : index
    %c0_31 = arith.constant 0 : index
    %97 = vector.load %arg11[%c16, %c0_31] : memref<64x512xf32, #tpu.memory_space<vmem>>, vector<8x512xf32>
    %c0_32 = arith.constant 0 : index
    %c0_33 = arith.constant 0 : index
    %98 = vector.load %arg2[%c0_32, %c0_33] : memref<128x512xf32, #tpu.memory_space<vmem>>, vector<128x512xf32>
    %cst_34 = arith.constant dense<0.000000e+00> : vector<8x512xf32>
    %99 = tpu.matmul %65, %98, %cst_34 {dimension_numbers = #tpu.dot_dimension_numbers<[1], [0], [0], [1], [0, 0, 1, 1], [], []>} : vector<8x128xf32>, vector<128x512xf32>, vector<8x512xf32> -> vector<8x512xf32>
    %100 = arith.addf %97, %99 : vector<8x512xf32>
    %101 = vector.extract_strided_slice %100 {offsets = [0, 0], sizes = [8, 128], strides = [1, 1]} : vector<8x512xf32> to vector<8x128xf32>
    %102 = arith.negf %101 : vector<8x128xf32>
    %103 = math.exp %102 : vector<8x128xf32>
    %cst_35 = arith.constant 1.000000e+00 : f32
    %104 = vector.broadcast %cst_35 : f32 to vector<8x128xf32>
    %105 = arith.addf %104, %103 : vector<8x128xf32>
    %106 = arith.divf %104, %105 : vector<8x128xf32>
    %107 = vector.extract_strided_slice %100 {offsets = [0, 128], sizes = [8, 128], strides = [1, 1]} : vector<8x512xf32> to vector<8x128xf32>
    %108 = arith.negf %107 : vector<8x128xf32>
    %109 = math.exp %108 : vector<8x128xf32>
    %cst_36 = arith.constant 1.000000e+00 : f32
    %110 = vector.broadcast %cst_36 : f32 to vector<8x128xf32>
    %111 = arith.addf %110, %109 : vector<8x128xf32>
    %112 = arith.divf %110, %111 : vector<8x128xf32>
    %113 = vector.extract_strided_slice %100 {offsets = [0, 256], sizes = [8, 128], strides = [1, 1]} : vector<8x512xf32> to vector<8x128xf32>
    %114 = math.tanh %113 : vector<8x128xf32>
    %115 = vector.extract_strided_slice %100 {offsets = [0, 384], sizes = [8, 128], strides = [1, 1]} : vector<8x512xf32> to vector<8x128xf32>
    %116 = arith.negf %115 : vector<8x128xf32>
    %117 = math.exp %116 : vector<8x128xf32>
    %cst_37 = arith.constant 1.000000e+00 : f32
    %118 = vector.broadcast %cst_37 : f32 to vector<8x128xf32>
    %119 = arith.addf %118, %117 : vector<8x128xf32>
    %120 = arith.divf %118, %119 : vector<8x128xf32>
    %121 = arith.mulf %112, %63 : vector<8x128xf32>
    %122 = arith.mulf %106, %114 : vector<8x128xf32>
    %123 = arith.addf %121, %122 : vector<8x128xf32>
    %124 = math.tanh %123 : vector<8x128xf32>
    %125 = arith.mulf %120, %124 : vector<8x128xf32>
    %126 = tpu.concatenate %65, %96 in 1 : vector<8x128xf32>, vector<8x128xf32> -> vector<8x256xf32>
    %c0_38 = arith.constant 0 : index
    %c0_39 = arith.constant 0 : index
    %127 = vector.load %arg4[%c0_38, %c0_39] : memref<256x512xf32, #tpu.memory_space<vmem>>, vector<256x512xf32>
    %cst_40 = arith.constant dense<0.000000e+00> : vector<8x512xf32>
    %128 = tpu.matmul %126, %127, %cst_40 {dimension_numbers = #tpu.dot_dimension_numbers<[1], [0], [0], [1], [0, 0, 1, 1], [], []>} : vector<8x256xf32>, vector<256x512xf32>, vector<8x512xf32> -> vector<8x512xf32>
    %c0_41 = arith.constant 0 : index
    %c0_42 = arith.constant 0 : index
    %129 = vector.load %arg5[%c0_41, %c0_42] : memref<1x512xf32, #tpu.memory_space<vmem>>, vector<1x512xf32>
    %130 = vector.broadcast %129 : vector<1x512xf32> to vector<8x512xf32>
    %131 = arith.addf %128, %130 : vector<8x512xf32>
    %132 = vector.extract_strided_slice %131 {offsets = [0, 0], sizes = [8, 128], strides = [1, 1]} : vector<8x512xf32> to vector<8x128xf32>
    %133 = arith.negf %132 : vector<8x128xf32>
    %134 = math.exp %133 : vector<8x128xf32>
    %cst_43 = arith.constant 1.000000e+00 : f32
    %135 = vector.broadcast %cst_43 : f32 to vector<8x128xf32>
    %136 = arith.addf %135, %134 : vector<8x128xf32>
    %137 = arith.divf %135, %136 : vector<8x128xf32>
    %138 = vector.extract_strided_slice %131 {offsets = [0, 128], sizes = [8, 128], strides = [1, 1]} : vector<8x512xf32> to vector<8x128xf32>
    %139 = arith.negf %138 : vector<8x128xf32>
    %140 = math.exp %139 : vector<8x128xf32>
    %cst_44 = arith.constant 1.000000e+00 : f32
    %141 = vector.broadcast %cst_44 : f32 to vector<8x128xf32>
    %142 = arith.addf %141, %140 : vector<8x128xf32>
    %143 = arith.divf %141, %142 : vector<8x128xf32>
    %144 = vector.extract_strided_slice %131 {offsets = [0, 256], sizes = [8, 128], strides = [1, 1]} : vector<8x512xf32> to vector<8x128xf32>
    %145 = math.tanh %144 : vector<8x128xf32>
    %146 = vector.extract_strided_slice %131 {offsets = [0, 384], sizes = [8, 128], strides = [1, 1]} : vector<8x512xf32> to vector<8x128xf32>
    %147 = arith.negf %146 : vector<8x128xf32>
    %148 = math.exp %147 : vector<8x128xf32>
    %cst_45 = arith.constant 1.000000e+00 : f32
    %149 = vector.broadcast %cst_45 : f32 to vector<8x128xf32>
    %150 = arith.addf %149, %148 : vector<8x128xf32>
    %151 = arith.divf %149, %150 : vector<8x128xf32>
    %152 = arith.mulf %143, %94 : vector<8x128xf32>
    %153 = arith.mulf %137, %145 : vector<8x128xf32>
    %154 = arith.addf %152, %153 : vector<8x128xf32>
    %155 = math.tanh %154 : vector<8x128xf32>
    %156 = arith.mulf %151, %155 : vector<8x128xf32>
    %157 = tpu.concatenate %96, %7 in 1 : vector<8x128xf32>, vector<8x128xf32> -> vector<8x256xf32>
    %c0_46 = arith.constant 0 : index
    %c0_47 = arith.constant 0 : index
    %158 = vector.load %arg6[%c0_46, %c0_47] : memref<256x512xf32, #tpu.memory_space<vmem>>, vector<256x512xf32>
    %cst_48 = arith.constant dense<0.000000e+00> : vector<8x512xf32>
    %159 = tpu.matmul %157, %158, %cst_48 {dimension_numbers = #tpu.dot_dimension_numbers<[1], [0], [0], [1], [0, 0, 1, 1], [], []>} : vector<8x256xf32>, vector<256x512xf32>, vector<8x512xf32> -> vector<8x512xf32>
    %c0_49 = arith.constant 0 : index
    %c0_50 = arith.constant 0 : index
    %160 = vector.load %arg7[%c0_49, %c0_50] : memref<1x512xf32, #tpu.memory_space<vmem>>, vector<1x512xf32>
    %161 = vector.broadcast %160 : vector<1x512xf32> to vector<8x512xf32>
    %162 = arith.addf %159, %161 : vector<8x512xf32>
    %163 = vector.extract_strided_slice %162 {offsets = [0, 0], sizes = [8, 128], strides = [1, 1]} : vector<8x512xf32> to vector<8x128xf32>
    %164 = arith.negf %163 : vector<8x128xf32>
    %165 = math.exp %164 : vector<8x128xf32>
    %cst_51 = arith.constant 1.000000e+00 : f32
    %166 = vector.broadcast %cst_51 : f32 to vector<8x128xf32>
    %167 = arith.addf %166, %165 : vector<8x128xf32>
    %168 = arith.divf %166, %167 : vector<8x128xf32>
    %169 = vector.extract_strided_slice %162 {offsets = [0, 128], sizes = [8, 128], strides = [1, 1]} : vector<8x512xf32> to vector<8x128xf32>
    %170 = arith.negf %169 : vector<8x128xf32>
    %171 = math.exp %170 : vector<8x128xf32>
    %cst_52 = arith.constant 1.000000e+00 : f32
    %172 = vector.broadcast %cst_52 : f32 to vector<8x128xf32>
    %173 = arith.addf %172, %171 : vector<8x128xf32>
    %174 = arith.divf %172, %173 : vector<8x128xf32>
    %175 = vector.extract_strided_slice %162 {offsets = [0, 256], sizes = [8, 128], strides = [1, 1]} : vector<8x512xf32> to vector<8x128xf32>
    %176 = math.tanh %175 : vector<8x128xf32>
    %177 = vector.extract_strided_slice %162 {offsets = [0, 384], sizes = [8, 128], strides = [1, 1]} : vector<8x512xf32> to vector<8x128xf32>
    %178 = arith.negf %177 : vector<8x128xf32>
    %179 = math.exp %178 : vector<8x128xf32>
    %cst_53 = arith.constant 1.000000e+00 : f32
    %180 = vector.broadcast %cst_53 : f32 to vector<8x128xf32>
    %181 = arith.addf %180, %179 : vector<8x128xf32>
    %182 = arith.divf %180, %181 : vector<8x128xf32>
    %183 = arith.mulf %174, %7 : vector<8x128xf32>
    %184 = arith.mulf %168, %176 : vector<8x128xf32>
    %185 = arith.addf %183, %184 : vector<8x128xf32>
    %186 = math.tanh %185 : vector<8x128xf32>
    %187 = arith.mulf %182, %186 : vector<8x128xf32>
    %c24 = arith.constant 24 : index
    %c0_54 = arith.constant 0 : index
    %188 = vector.load %arg11[%c24, %c0_54] : memref<64x512xf32, #tpu.memory_space<vmem>>, vector<8x512xf32>
    %c0_55 = arith.constant 0 : index
    %c0_56 = arith.constant 0 : index
    %189 = vector.load %arg2[%c0_55, %c0_56] : memref<128x512xf32, #tpu.memory_space<vmem>>, vector<128x512xf32>
    %cst_57 = arith.constant dense<0.000000e+00> : vector<8x512xf32>
    %190 = tpu.matmul %125, %189, %cst_57 {dimension_numbers = #tpu.dot_dimension_numbers<[1], [0], [0], [1], [0, 0, 1, 1], [], []>} : vector<8x128xf32>, vector<128x512xf32>, vector<8x512xf32> -> vector<8x512xf32>
    %191 = arith.addf %188, %190 : vector<8x512xf32>
    %192 = vector.extract_strided_slice %191 {offsets = [0, 0], sizes = [8, 128], strides = [1, 1]} : vector<8x512xf32> to vector<8x128xf32>
    %193 = arith.negf %192 : vector<8x128xf32>
    %194 = math.exp %193 : vector<8x128xf32>
    %cst_58 = arith.constant 1.000000e+00 : f32
    %195 = vector.broadcast %cst_58 : f32 to vector<8x128xf32>
    %196 = arith.addf %195, %194 : vector<8x128xf32>
    %197 = arith.divf %195, %196 : vector<8x128xf32>
    %198 = vector.extract_strided_slice %191 {offsets = [0, 128], sizes = [8, 128], strides = [1, 1]} : vector<8x512xf32> to vector<8x128xf32>
    %199 = arith.negf %198 : vector<8x128xf32>
    %200 = math.exp %199 : vector<8x128xf32>
    %cst_59 = arith.constant 1.000000e+00 : f32
    %201 = vector.broadcast %cst_59 : f32 to vector<8x128xf32>
    %202 = arith.addf %201, %200 : vector<8x128xf32>
    %203 = arith.divf %201, %202 : vector<8x128xf32>
    %204 = vector.extract_strided_slice %191 {offsets = [0, 256], sizes = [8, 128], strides = [1, 1]} : vector<8x512xf32> to vector<8x128xf32>
    %205 = math.tanh %204 : vector<8x128xf32>
    %206 = vector.extract_strided_slice %191 {offsets = [0, 384], sizes = [8, 128], strides = [1, 1]} : vector<8x512xf32> to vector<8x128xf32>
    %207 = arith.negf %206 : vector<8x128xf32>
    %208 = math.exp %207 : vector<8x128xf32>
    %cst_60 = arith.constant 1.000000e+00 : f32
    %209 = vector.broadcast %cst_60 : f32 to vector<8x128xf32>
    %210 = arith.addf %209, %208 : vector<8x128xf32>
    %211 = arith.divf %209, %210 : vector<8x128xf32>
    %212 = arith.mulf %203, %123 : vector<8x128xf32>
    %213 = arith.mulf %197, %205 : vector<8x128xf32>
    %214 = arith.addf %212, %213 : vector<8x128xf32>
    %215 = math.tanh %214 : vector<8x128xf32>
    %216 = arith.mulf %211, %215 : vector<8x128xf32>
    %217 = tpu.concatenate %125, %156 in 1 : vector<8x128xf32>, vector<8x128xf32> -> vector<8x256xf32>
    %c0_61 = arith.constant 0 : index
    %c0_62 = arith.constant 0 : index
    %218 = vector.load %arg4[%c0_61, %c0_62] : memref<256x512xf32, #tpu.memory_space<vmem>>, vector<256x512xf32>
    %cst_63 = arith.constant dense<0.000000e+00> : vector<8x512xf32>
    %219 = tpu.matmul %217, %218, %cst_63 {dimension_numbers = #tpu.dot_dimension_numbers<[1], [0], [0], [1], [0, 0, 1, 1], [], []>} : vector<8x256xf32>, vector<256x512xf32>, vector<8x512xf32> -> vector<8x512xf32>
    %c0_64 = arith.constant 0 : index
    %c0_65 = arith.constant 0 : index
    %220 = vector.load %arg5[%c0_64, %c0_65] : memref<1x512xf32, #tpu.memory_space<vmem>>, vector<1x512xf32>
    %221 = vector.broadcast %220 : vector<1x512xf32> to vector<8x512xf32>
    %222 = arith.addf %219, %221 : vector<8x512xf32>
    %223 = vector.extract_strided_slice %222 {offsets = [0, 0], sizes = [8, 128], strides = [1, 1]} : vector<8x512xf32> to vector<8x128xf32>
    %224 = arith.negf %223 : vector<8x128xf32>
    %225 = math.exp %224 : vector<8x128xf32>
    %cst_66 = arith.constant 1.000000e+00 : f32
    %226 = vector.broadcast %cst_66 : f32 to vector<8x128xf32>
    %227 = arith.addf %226, %225 : vector<8x128xf32>
    %228 = arith.divf %226, %227 : vector<8x128xf32>
    %229 = vector.extract_strided_slice %222 {offsets = [0, 128], sizes = [8, 128], strides = [1, 1]} : vector<8x512xf32> to vector<8x128xf32>
    %230 = arith.negf %229 : vector<8x128xf32>
    %231 = math.exp %230 : vector<8x128xf32>
    %cst_67 = arith.constant 1.000000e+00 : f32
    %232 = vector.broadcast %cst_67 : f32 to vector<8x128xf32>
    %233 = arith.addf %232, %231 : vector<8x128xf32>
    %234 = arith.divf %232, %233 : vector<8x128xf32>
    %235 = vector.extract_strided_slice %222 {offsets = [0, 256], sizes = [8, 128], strides = [1, 1]} : vector<8x512xf32> to vector<8x128xf32>
    %236 = math.tanh %235 : vector<8x128xf32>
    %237 = vector.extract_strided_slice %222 {offsets = [0, 384], sizes = [8, 128], strides = [1, 1]} : vector<8x512xf32> to vector<8x128xf32>
    %238 = arith.negf %237 : vector<8x128xf32>
    %239 = math.exp %238 : vector<8x128xf32>
    %cst_68 = arith.constant 1.000000e+00 : f32
    %240 = vector.broadcast %cst_68 : f32 to vector<8x128xf32>
    %241 = arith.addf %240, %239 : vector<8x128xf32>
    %242 = arith.divf %240, %241 : vector<8x128xf32>
    %243 = arith.mulf %234, %154 : vector<8x128xf32>
    %244 = arith.mulf %228, %236 : vector<8x128xf32>
    %245 = arith.addf %243, %244 : vector<8x128xf32>
    %246 = math.tanh %245 : vector<8x128xf32>
    %247 = arith.mulf %242, %246 : vector<8x128xf32>
    %248 = tpu.concatenate %156, %187 in 1 : vector<8x128xf32>, vector<8x128xf32> -> vector<8x256xf32>
    %c0_69 = arith.constant 0 : index
    %c0_70 = arith.constant 0 : index
    %249 = vector.load %arg6[%c0_69, %c0_70] : memref<256x512xf32, #tpu.memory_space<vmem>>, vector<256x512xf32>
    %cst_71 = arith.constant dense<0.000000e+00> : vector<8x512xf32>
    %250 = tpu.matmul %248, %249, %cst_71 {dimension_numbers = #tpu.dot_dimension_numbers<[1], [0], [0], [1], [0, 0, 1, 1], [], []>} : vector<8x256xf32>, vector<256x512xf32>, vector<8x512xf32> -> vector<8x512xf32>
    %c0_72 = arith.constant 0 : index
    %c0_73 = arith.constant 0 : index
    %251 = vector.load %arg7[%c0_72, %c0_73] : memref<1x512xf32, #tpu.memory_space<vmem>>, vector<1x512xf32>
    %252 = vector.broadcast %251 : vector<1x512xf32> to vector<8x512xf32>
    %253 = arith.addf %250, %252 : vector<8x512xf32>
    %254 = vector.extract_strided_slice %253 {offsets = [0, 0], sizes = [8, 128], strides = [1, 1]} : vector<8x512xf32> to vector<8x128xf32>
    %255 = arith.negf %254 : vector<8x128xf32>
    %256 = math.exp %255 : vector<8x128xf32>
    %cst_74 = arith.constant 1.000000e+00 : f32
    %257 = vector.broadcast %cst_74 : f32 to vector<8x128xf32>
    %258 = arith.addf %257, %256 : vector<8x128xf32>
    %259 = arith.divf %257, %258 : vector<8x128xf32>
    %260 = vector.extract_strided_slice %253 {offsets = [0, 128], sizes = [8, 128], strides = [1, 1]} : vector<8x512xf32> to vector<8x128xf32>
    %261 = arith.negf %260 : vector<8x128xf32>
    %262 = math.exp %261 : vector<8x128xf32>
    %cst_75 = arith.constant 1.000000e+00 : f32
    %263 = vector.broadcast %cst_75 : f32 to vector<8x128xf32>
    %264 = arith.addf %263, %262 : vector<8x128xf32>
    %265 = arith.divf %263, %264 : vector<8x128xf32>
    %266 = vector.extract_strided_slice %253 {offsets = [0, 256], sizes = [8, 128], strides = [1, 1]} : vector<8x512xf32> to vector<8x128xf32>
    %267 = math.tanh %266 : vector<8x128xf32>
    %268 = vector.extract_strided_slice %253 {offsets = [0, 384], sizes = [8, 128], strides = [1, 1]} : vector<8x512xf32> to vector<8x128xf32>
    %269 = arith.negf %268 : vector<8x128xf32>
    %270 = math.exp %269 : vector<8x128xf32>
    %cst_76 = arith.constant 1.000000e+00 : f32
    %271 = vector.broadcast %cst_76 : f32 to vector<8x128xf32>
    %272 = arith.addf %271, %270 : vector<8x128xf32>
    %273 = arith.divf %271, %272 : vector<8x128xf32>
    %274 = arith.mulf %265, %185 : vector<8x128xf32>
    %275 = arith.mulf %259, %267 : vector<8x128xf32>
    %276 = arith.addf %274, %275 : vector<8x128xf32>
    %277 = math.tanh %276 : vector<8x128xf32>
    %278 = arith.mulf %273, %277 : vector<8x128xf32>
    %c32 = arith.constant 32 : index
    %c0_77 = arith.constant 0 : index
    %279 = vector.load %arg11[%c32, %c0_77] : memref<64x512xf32, #tpu.memory_space<vmem>>, vector<8x512xf32>
    %c0_78 = arith.constant 0 : index
    %c0_79 = arith.constant 0 : index
    %280 = vector.load %arg2[%c0_78, %c0_79] : memref<128x512xf32, #tpu.memory_space<vmem>>, vector<128x512xf32>
    %cst_80 = arith.constant dense<0.000000e+00> : vector<8x512xf32>
    %281 = tpu.matmul %216, %280, %cst_80 {dimension_numbers = #tpu.dot_dimension_numbers<[1], [0], [0], [1], [0, 0, 1, 1], [], []>} : vector<8x128xf32>, vector<128x512xf32>, vector<8x512xf32> -> vector<8x512xf32>
    %282 = arith.addf %279, %281 : vector<8x512xf32>
    %283 = vector.extract_strided_slice %282 {offsets = [0, 0], sizes = [8, 128], strides = [1, 1]} : vector<8x512xf32> to vector<8x128xf32>
    %284 = arith.negf %283 : vector<8x128xf32>
    %285 = math.exp %284 : vector<8x128xf32>
    %cst_81 = arith.constant 1.000000e+00 : f32
    %286 = vector.broadcast %cst_81 : f32 to vector<8x128xf32>
    %287 = arith.addf %286, %285 : vector<8x128xf32>
    %288 = arith.divf %286, %287 : vector<8x128xf32>
    %289 = vector.extract_strided_slice %282 {offsets = [0, 128], sizes = [8, 128], strides = [1, 1]} : vector<8x512xf32> to vector<8x128xf32>
    %290 = arith.negf %289 : vector<8x128xf32>
    %291 = math.exp %290 : vector<8x128xf32>
    %cst_82 = arith.constant 1.000000e+00 : f32
    %292 = vector.broadcast %cst_82 : f32 to vector<8x128xf32>
    %293 = arith.addf %292, %291 : vector<8x128xf32>
    %294 = arith.divf %292, %293 : vector<8x128xf32>
    %295 = vector.extract_strided_slice %282 {offsets = [0, 256], sizes = [8, 128], strides = [1, 1]} : vector<8x512xf32> to vector<8x128xf32>
    %296 = math.tanh %295 : vector<8x128xf32>
    %297 = vector.extract_strided_slice %282 {offsets = [0, 384], sizes = [8, 128], strides = [1, 1]} : vector<8x512xf32> to vector<8x128xf32>
    %298 = arith.negf %297 : vector<8x128xf32>
    %299 = math.exp %298 : vector<8x128xf32>
    %cst_83 = arith.constant 1.000000e+00 : f32
    %300 = vector.broadcast %cst_83 : f32 to vector<8x128xf32>
    %301 = arith.addf %300, %299 : vector<8x128xf32>
    %302 = arith.divf %300, %301 : vector<8x128xf32>
    %303 = arith.mulf %294, %214 : vector<8x128xf32>
    %304 = arith.mulf %288, %296 : vector<8x128xf32>
    %305 = arith.addf %303, %304 : vector<8x128xf32>
    %306 = math.tanh %305 : vector<8x128xf32>
    %307 = arith.mulf %302, %306 : vector<8x128xf32>
    %308 = tpu.concatenate %216, %247 in 1 : vector<8x128xf32>, vector<8x128xf32> -> vector<8x256xf32>
    %c0_84 = arith.constant 0 : index
    %c0_85 = arith.constant 0 : index
    %309 = vector.load %arg4[%c0_84, %c0_85] : memref<256x512xf32, #tpu.memory_space<vmem>>, vector<256x512xf32>
    %cst_86 = arith.constant dense<0.000000e+00> : vector<8x512xf32>
    %310 = tpu.matmul %308, %309, %cst_86 {dimension_numbers = #tpu.dot_dimension_numbers<[1], [0], [0], [1], [0, 0, 1, 1], [], []>} : vector<8x256xf32>, vector<256x512xf32>, vector<8x512xf32> -> vector<8x512xf32>
    %c0_87 = arith.constant 0 : index
    %c0_88 = arith.constant 0 : index
    %311 = vector.load %arg5[%c0_87, %c0_88] : memref<1x512xf32, #tpu.memory_space<vmem>>, vector<1x512xf32>
    %312 = vector.broadcast %311 : vector<1x512xf32> to vector<8x512xf32>
    %313 = arith.addf %310, %312 : vector<8x512xf32>
    %314 = vector.extract_strided_slice %313 {offsets = [0, 0], sizes = [8, 128], strides = [1, 1]} : vector<8x512xf32> to vector<8x128xf32>
    %315 = arith.negf %314 : vector<8x128xf32>
    %316 = math.exp %315 : vector<8x128xf32>
    %cst_89 = arith.constant 1.000000e+00 : f32
    %317 = vector.broadcast %cst_89 : f32 to vector<8x128xf32>
    %318 = arith.addf %317, %316 : vector<8x128xf32>
    %319 = arith.divf %317, %318 : vector<8x128xf32>
    %320 = vector.extract_strided_slice %313 {offsets = [0, 128], sizes = [8, 128], strides = [1, 1]} : vector<8x512xf32> to vector<8x128xf32>
    %321 = arith.negf %320 : vector<8x128xf32>
    %322 = math.exp %321 : vector<8x128xf32>
    %cst_90 = arith.constant 1.000000e+00 : f32
    %323 = vector.broadcast %cst_90 : f32 to vector<8x128xf32>
    %324 = arith.addf %323, %322 : vector<8x128xf32>
    %325 = arith.divf %323, %324 : vector<8x128xf32>
    %326 = vector.extract_strided_slice %313 {offsets = [0, 256], sizes = [8, 128], strides = [1, 1]} : vector<8x512xf32> to vector<8x128xf32>
    %327 = math.tanh %326 : vector<8x128xf32>
    %328 = vector.extract_strided_slice %313 {offsets = [0, 384], sizes = [8, 128], strides = [1, 1]} : vector<8x512xf32> to vector<8x128xf32>
    %329 = arith.negf %328 : vector<8x128xf32>
    %330 = math.exp %329 : vector<8x128xf32>
    %cst_91 = arith.constant 1.000000e+00 : f32
    %331 = vector.broadcast %cst_91 : f32 to vector<8x128xf32>
    %332 = arith.addf %331, %330 : vector<8x128xf32>
    %333 = arith.divf %331, %332 : vector<8x128xf32>
    %334 = arith.mulf %325, %245 : vector<8x128xf32>
    %335 = arith.mulf %319, %327 : vector<8x128xf32>
    %336 = arith.addf %334, %335 : vector<8x128xf32>
    %337 = math.tanh %336 : vector<8x128xf32>
    %338 = arith.mulf %333, %337 : vector<8x128xf32>
    %339 = tpu.concatenate %247, %278 in 1 : vector<8x128xf32>, vector<8x128xf32> -> vector<8x256xf32>
    %c0_92 = arith.constant 0 : index
    %c0_93 = arith.constant 0 : index
    %340 = vector.load %arg6[%c0_92, %c0_93] : memref<256x512xf32, #tpu.memory_space<vmem>>, vector<256x512xf32>
    %cst_94 = arith.constant dense<0.000000e+00> : vector<8x512xf32>
    %341 = tpu.matmul %339, %340, %cst_94 {dimension_numbers = #tpu.dot_dimension_numbers<[1], [0], [0], [1], [0, 0, 1, 1], [], []>} : vector<8x256xf32>, vector<256x512xf32>, vector<8x512xf32> -> vector<8x512xf32>
    %c0_95 = arith.constant 0 : index
    %c0_96 = arith.constant 0 : index
    %342 = vector.load %arg7[%c0_95, %c0_96] : memref<1x512xf32, #tpu.memory_space<vmem>>, vector<1x512xf32>
    %343 = vector.broadcast %342 : vector<1x512xf32> to vector<8x512xf32>
    %344 = arith.addf %341, %343 : vector<8x512xf32>
    %345 = vector.extract_strided_slice %344 {offsets = [0, 0], sizes = [8, 128], strides = [1, 1]} : vector<8x512xf32> to vector<8x128xf32>
    %346 = arith.negf %345 : vector<8x128xf32>
    %347 = math.exp %346 : vector<8x128xf32>
    %cst_97 = arith.constant 1.000000e+00 : f32
    %348 = vector.broadcast %cst_97 : f32 to vector<8x128xf32>
    %349 = arith.addf %348, %347 : vector<8x128xf32>
    %350 = arith.divf %348, %349 : vector<8x128xf32>
    %351 = vector.extract_strided_slice %344 {offsets = [0, 128], sizes = [8, 128], strides = [1, 1]} : vector<8x512xf32> to vector<8x128xf32>
    %352 = arith.negf %351 : vector<8x128xf32>
    %353 = math.exp %352 : vector<8x128xf32>
    %cst_98 = arith.constant 1.000000e+00 : f32
    %354 = vector.broadcast %cst_98 : f32 to vector<8x128xf32>
    %355 = arith.addf %354, %353 : vector<8x128xf32>
    %356 = arith.divf %354, %355 : vector<8x128xf32>
    %357 = vector.extract_strided_slice %344 {offsets = [0, 256], sizes = [8, 128], strides = [1, 1]} : vector<8x512xf32> to vector<8x128xf32>
    %358 = math.tanh %357 : vector<8x128xf32>
    %359 = vector.extract_strided_slice %344 {offsets = [0, 384], sizes = [8, 128], strides = [1, 1]} : vector<8x512xf32> to vector<8x128xf32>
    %360 = arith.negf %359 : vector<8x128xf32>
    %361 = math.exp %360 : vector<8x128xf32>
    %cst_99 = arith.constant 1.000000e+00 : f32
    %362 = vector.broadcast %cst_99 : f32 to vector<8x128xf32>
    %363 = arith.addf %362, %361 : vector<8x128xf32>
    %364 = arith.divf %362, %363 : vector<8x128xf32>
    %365 = arith.mulf %356, %276 : vector<8x128xf32>
    %366 = arith.mulf %350, %358 : vector<8x128xf32>
    %367 = arith.addf %365, %366 : vector<8x128xf32>
    %368 = math.tanh %367 : vector<8x128xf32>
    %369 = arith.mulf %364, %368 : vector<8x128xf32>
    %c40 = arith.constant 40 : index
    %c0_100 = arith.constant 0 : index
    %370 = vector.load %arg11[%c40, %c0_100] : memref<64x512xf32, #tpu.memory_space<vmem>>, vector<8x512xf32>
    %c0_101 = arith.constant 0 : index
    %c0_102 = arith.constant 0 : index
    %371 = vector.load %arg2[%c0_101, %c0_102] : memref<128x512xf32, #tpu.memory_space<vmem>>, vector<128x512xf32>
    %cst_103 = arith.constant dense<0.000000e+00> : vector<8x512xf32>
    %372 = tpu.matmul %307, %371, %cst_103 {dimension_numbers = #tpu.dot_dimension_numbers<[1], [0], [0], [1], [0, 0, 1, 1], [], []>} : vector<8x128xf32>, vector<128x512xf32>, vector<8x512xf32> -> vector<8x512xf32>
    %373 = arith.addf %370, %372 : vector<8x512xf32>
    %374 = vector.extract_strided_slice %373 {offsets = [0, 0], sizes = [8, 128], strides = [1, 1]} : vector<8x512xf32> to vector<8x128xf32>
    %375 = arith.negf %374 : vector<8x128xf32>
    %376 = math.exp %375 : vector<8x128xf32>
    %cst_104 = arith.constant 1.000000e+00 : f32
    %377 = vector.broadcast %cst_104 : f32 to vector<8x128xf32>
    %378 = arith.addf %377, %376 : vector<8x128xf32>
    %379 = arith.divf %377, %378 : vector<8x128xf32>
    %380 = vector.extract_strided_slice %373 {offsets = [0, 128], sizes = [8, 128], strides = [1, 1]} : vector<8x512xf32> to vector<8x128xf32>
    %381 = arith.negf %380 : vector<8x128xf32>
    %382 = math.exp %381 : vector<8x128xf32>
    %cst_105 = arith.constant 1.000000e+00 : f32
    %383 = vector.broadcast %cst_105 : f32 to vector<8x128xf32>
    %384 = arith.addf %383, %382 : vector<8x128xf32>
    %385 = arith.divf %383, %384 : vector<8x128xf32>
    %386 = vector.extract_strided_slice %373 {offsets = [0, 256], sizes = [8, 128], strides = [1, 1]} : vector<8x512xf32> to vector<8x128xf32>
    %387 = math.tanh %386 : vector<8x128xf32>
    %388 = vector.extract_strided_slice %373 {offsets = [0, 384], sizes = [8, 128], strides = [1, 1]} : vector<8x512xf32> to vector<8x128xf32>
    %389 = arith.negf %388 : vector<8x128xf32>
    %390 = math.exp %389 : vector<8x128xf32>
    %cst_106 = arith.constant 1.000000e+00 : f32
    %391 = vector.broadcast %cst_106 : f32 to vector<8x128xf32>
    %392 = arith.addf %391, %390 : vector<8x128xf32>
    %393 = arith.divf %391, %392 : vector<8x128xf32>
    %394 = arith.mulf %385, %305 : vector<8x128xf32>
    %395 = arith.mulf %379, %387 : vector<8x128xf32>
    %396 = arith.addf %394, %395 : vector<8x128xf32>
    %397 = math.tanh %396 : vector<8x128xf32>
    %398 = arith.mulf %393, %397 : vector<8x128xf32>
    %399 = tpu.concatenate %307, %338 in 1 : vector<8x128xf32>, vector<8x128xf32> -> vector<8x256xf32>
    %c0_107 = arith.constant 0 : index
    %c0_108 = arith.constant 0 : index
    %400 = vector.load %arg4[%c0_107, %c0_108] : memref<256x512xf32, #tpu.memory_space<vmem>>, vector<256x512xf32>
    %cst_109 = arith.constant dense<0.000000e+00> : vector<8x512xf32>
    %401 = tpu.matmul %399, %400, %cst_109 {dimension_numbers = #tpu.dot_dimension_numbers<[1], [0], [0], [1], [0, 0, 1, 1], [], []>} : vector<8x256xf32>, vector<256x512xf32>, vector<8x512xf32> -> vector<8x512xf32>
    %c0_110 = arith.constant 0 : index
    %c0_111 = arith.constant 0 : index
    %402 = vector.load %arg5[%c0_110, %c0_111] : memref<1x512xf32, #tpu.memory_space<vmem>>, vector<1x512xf32>
    %403 = vector.broadcast %402 : vector<1x512xf32> to vector<8x512xf32>
    %404 = arith.addf %401, %403 : vector<8x512xf32>
    %405 = vector.extract_strided_slice %404 {offsets = [0, 0], sizes = [8, 128], strides = [1, 1]} : vector<8x512xf32> to vector<8x128xf32>
    %406 = arith.negf %405 : vector<8x128xf32>
    %407 = math.exp %406 : vector<8x128xf32>
    %cst_112 = arith.constant 1.000000e+00 : f32
    %408 = vector.broadcast %cst_112 : f32 to vector<8x128xf32>
    %409 = arith.addf %408, %407 : vector<8x128xf32>
    %410 = arith.divf %408, %409 : vector<8x128xf32>
    %411 = vector.extract_strided_slice %404 {offsets = [0, 128], sizes = [8, 128], strides = [1, 1]} : vector<8x512xf32> to vector<8x128xf32>
    %412 = arith.negf %411 : vector<8x128xf32>
    %413 = math.exp %412 : vector<8x128xf32>
    %cst_113 = arith.constant 1.000000e+00 : f32
    %414 = vector.broadcast %cst_113 : f32 to vector<8x128xf32>
    %415 = arith.addf %414, %413 : vector<8x128xf32>
    %416 = arith.divf %414, %415 : vector<8x128xf32>
    %417 = vector.extract_strided_slice %404 {offsets = [0, 256], sizes = [8, 128], strides = [1, 1]} : vector<8x512xf32> to vector<8x128xf32>
    %418 = math.tanh %417 : vector<8x128xf32>
    %419 = vector.extract_strided_slice %404 {offsets = [0, 384], sizes = [8, 128], strides = [1, 1]} : vector<8x512xf32> to vector<8x128xf32>
    %420 = arith.negf %419 : vector<8x128xf32>
    %421 = math.exp %420 : vector<8x128xf32>
    %cst_114 = arith.constant 1.000000e+00 : f32
    %422 = vector.broadcast %cst_114 : f32 to vector<8x128xf32>
    %423 = arith.addf %422, %421 : vector<8x128xf32>
    %424 = arith.divf %422, %423 : vector<8x128xf32>
    %425 = arith.mulf %416, %336 : vector<8x128xf32>
    %426 = arith.mulf %410, %418 : vector<8x128xf32>
    %427 = arith.addf %425, %426 : vector<8x128xf32>
    %428 = math.tanh %427 : vector<8x128xf32>
    %429 = arith.mulf %424, %428 : vector<8x128xf32>
    %430 = tpu.concatenate %338, %369 in 1 : vector<8x128xf32>, vector<8x128xf32> -> vector<8x256xf32>
    %c0_115 = arith.constant 0 : index
    %c0_116 = arith.constant 0 : index
    %431 = vector.load %arg6[%c0_115, %c0_116] : memref<256x512xf32, #tpu.memory_space<vmem>>, vector<256x512xf32>
    %cst_117 = arith.constant dense<0.000000e+00> : vector<8x512xf32>
    %432 = tpu.matmul %430, %431, %cst_117 {dimension_numbers = #tpu.dot_dimension_numbers<[1], [0], [0], [1], [0, 0, 1, 1], [], []>} : vector<8x256xf32>, vector<256x512xf32>, vector<8x512xf32> -> vector<8x512xf32>
    %c0_118 = arith.constant 0 : index
    %c0_119 = arith.constant 0 : index
    %433 = vector.load %arg7[%c0_118, %c0_119] : memref<1x512xf32, #tpu.memory_space<vmem>>, vector<1x512xf32>
    %434 = vector.broadcast %433 : vector<1x512xf32> to vector<8x512xf32>
    %435 = arith.addf %432, %434 : vector<8x512xf32>
    %436 = vector.extract_strided_slice %435 {offsets = [0, 0], sizes = [8, 128], strides = [1, 1]} : vector<8x512xf32> to vector<8x128xf32>
    %437 = arith.negf %436 : vector<8x128xf32>
    %438 = math.exp %437 : vector<8x128xf32>
    %cst_120 = arith.constant 1.000000e+00 : f32
    %439 = vector.broadcast %cst_120 : f32 to vector<8x128xf32>
    %440 = arith.addf %439, %438 : vector<8x128xf32>
    %441 = arith.divf %439, %440 : vector<8x128xf32>
    %442 = vector.extract_strided_slice %435 {offsets = [0, 128], sizes = [8, 128], strides = [1, 1]} : vector<8x512xf32> to vector<8x128xf32>
    %443 = arith.negf %442 : vector<8x128xf32>
    %444 = math.exp %443 : vector<8x128xf32>
    %cst_121 = arith.constant 1.000000e+00 : f32
    %445 = vector.broadcast %cst_121 : f32 to vector<8x128xf32>
    %446 = arith.addf %445, %444 : vector<8x128xf32>
    %447 = arith.divf %445, %446 : vector<8x128xf32>
    %448 = vector.extract_strided_slice %435 {offsets = [0, 256], sizes = [8, 128], strides = [1, 1]} : vector<8x512xf32> to vector<8x128xf32>
    %449 = math.tanh %448 : vector<8x128xf32>
    %450 = vector.extract_strided_slice %435 {offsets = [0, 384], sizes = [8, 128], strides = [1, 1]} : vector<8x512xf32> to vector<8x128xf32>
    %451 = arith.negf %450 : vector<8x128xf32>
    %452 = math.exp %451 : vector<8x128xf32>
    %cst_122 = arith.constant 1.000000e+00 : f32
    %453 = vector.broadcast %cst_122 : f32 to vector<8x128xf32>
    %454 = arith.addf %453, %452 : vector<8x128xf32>
    %455 = arith.divf %453, %454 : vector<8x128xf32>
    %456 = arith.mulf %447, %367 : vector<8x128xf32>
    %457 = arith.mulf %441, %449 : vector<8x128xf32>
    %458 = arith.addf %456, %457 : vector<8x128xf32>
    %459 = math.tanh %458 : vector<8x128xf32>
    %460 = arith.mulf %455, %459 : vector<8x128xf32>
    %c48 = arith.constant 48 : index
    %c0_123 = arith.constant 0 : index
    %461 = vector.load %arg11[%c48, %c0_123] : memref<64x512xf32, #tpu.memory_space<vmem>>, vector<8x512xf32>
    %c0_124 = arith.constant 0 : index
    %c0_125 = arith.constant 0 : index
    %462 = vector.load %arg2[%c0_124, %c0_125] : memref<128x512xf32, #tpu.memory_space<vmem>>, vector<128x512xf32>
    %cst_126 = arith.constant dense<0.000000e+00> : vector<8x512xf32>
    %463 = tpu.matmul %398, %462, %cst_126 {dimension_numbers = #tpu.dot_dimension_numbers<[1], [0], [0], [1], [0, 0, 1, 1], [], []>} : vector<8x128xf32>, vector<128x512xf32>, vector<8x512xf32> -> vector<8x512xf32>
    %464 = arith.addf %461, %463 : vector<8x512xf32>
    %465 = vector.extract_strided_slice %464 {offsets = [0, 0], sizes = [8, 128], strides = [1, 1]} : vector<8x512xf32> to vector<8x128xf32>
    %466 = arith.negf %465 : vector<8x128xf32>
    %467 = math.exp %466 : vector<8x128xf32>
    %cst_127 = arith.constant 1.000000e+00 : f32
    %468 = vector.broadcast %cst_127 : f32 to vector<8x128xf32>
    %469 = arith.addf %468, %467 : vector<8x128xf32>
    %470 = arith.divf %468, %469 : vector<8x128xf32>
    %471 = vector.extract_strided_slice %464 {offsets = [0, 128], sizes = [8, 128], strides = [1, 1]} : vector<8x512xf32> to vector<8x128xf32>
    %472 = arith.negf %471 : vector<8x128xf32>
    %473 = math.exp %472 : vector<8x128xf32>
    %cst_128 = arith.constant 1.000000e+00 : f32
    %474 = vector.broadcast %cst_128 : f32 to vector<8x128xf32>
    %475 = arith.addf %474, %473 : vector<8x128xf32>
    %476 = arith.divf %474, %475 : vector<8x128xf32>
    %477 = vector.extract_strided_slice %464 {offsets = [0, 256], sizes = [8, 128], strides = [1, 1]} : vector<8x512xf32> to vector<8x128xf32>
    %478 = math.tanh %477 : vector<8x128xf32>
    %479 = vector.extract_strided_slice %464 {offsets = [0, 384], sizes = [8, 128], strides = [1, 1]} : vector<8x512xf32> to vector<8x128xf32>
    %480 = arith.negf %479 : vector<8x128xf32>
    %481 = math.exp %480 : vector<8x128xf32>
    %cst_129 = arith.constant 1.000000e+00 : f32
    %482 = vector.broadcast %cst_129 : f32 to vector<8x128xf32>
    %483 = arith.addf %482, %481 : vector<8x128xf32>
    %484 = arith.divf %482, %483 : vector<8x128xf32>
    %485 = arith.mulf %476, %396 : vector<8x128xf32>
    %486 = arith.mulf %470, %478 : vector<8x128xf32>
    %487 = arith.addf %485, %486 : vector<8x128xf32>
    %488 = math.tanh %487 : vector<8x128xf32>
    %489 = arith.mulf %484, %488 : vector<8x128xf32>
    %490 = tpu.concatenate %398, %429 in 1 : vector<8x128xf32>, vector<8x128xf32> -> vector<8x256xf32>
    %c0_130 = arith.constant 0 : index
    %c0_131 = arith.constant 0 : index
    %491 = vector.load %arg4[%c0_130, %c0_131] : memref<256x512xf32, #tpu.memory_space<vmem>>, vector<256x512xf32>
    %cst_132 = arith.constant dense<0.000000e+00> : vector<8x512xf32>
    %492 = tpu.matmul %490, %491, %cst_132 {dimension_numbers = #tpu.dot_dimension_numbers<[1], [0], [0], [1], [0, 0, 1, 1], [], []>} : vector<8x256xf32>, vector<256x512xf32>, vector<8x512xf32> -> vector<8x512xf32>
    %c0_133 = arith.constant 0 : index
    %c0_134 = arith.constant 0 : index
    %493 = vector.load %arg5[%c0_133, %c0_134] : memref<1x512xf32, #tpu.memory_space<vmem>>, vector<1x512xf32>
    %494 = vector.broadcast %493 : vector<1x512xf32> to vector<8x512xf32>
    %495 = arith.addf %492, %494 : vector<8x512xf32>
    %496 = vector.extract_strided_slice %495 {offsets = [0, 0], sizes = [8, 128], strides = [1, 1]} : vector<8x512xf32> to vector<8x128xf32>
    %497 = arith.negf %496 : vector<8x128xf32>
    %498 = math.exp %497 : vector<8x128xf32>
    %cst_135 = arith.constant 1.000000e+00 : f32
    %499 = vector.broadcast %cst_135 : f32 to vector<8x128xf32>
    %500 = arith.addf %499, %498 : vector<8x128xf32>
    %501 = arith.divf %499, %500 : vector<8x128xf32>
    %502 = vector.extract_strided_slice %495 {offsets = [0, 128], sizes = [8, 128], strides = [1, 1]} : vector<8x512xf32> to vector<8x128xf32>
    %503 = arith.negf %502 : vector<8x128xf32>
    %504 = math.exp %503 : vector<8x128xf32>
    %cst_136 = arith.constant 1.000000e+00 : f32
    %505 = vector.broadcast %cst_136 : f32 to vector<8x128xf32>
    %506 = arith.addf %505, %504 : vector<8x128xf32>
    %507 = arith.divf %505, %506 : vector<8x128xf32>
    %508 = vector.extract_strided_slice %495 {offsets = [0, 256], sizes = [8, 128], strides = [1, 1]} : vector<8x512xf32> to vector<8x128xf32>
    %509 = math.tanh %508 : vector<8x128xf32>
    %510 = vector.extract_strided_slice %495 {offsets = [0, 384], sizes = [8, 128], strides = [1, 1]} : vector<8x512xf32> to vector<8x128xf32>
    %511 = arith.negf %510 : vector<8x128xf32>
    %512 = math.exp %511 : vector<8x128xf32>
    %cst_137 = arith.constant 1.000000e+00 : f32
    %513 = vector.broadcast %cst_137 : f32 to vector<8x128xf32>
    %514 = arith.addf %513, %512 : vector<8x128xf32>
    %515 = arith.divf %513, %514 : vector<8x128xf32>
    %516 = arith.mulf %507, %427 : vector<8x128xf32>
    %517 = arith.mulf %501, %509 : vector<8x128xf32>
    %518 = arith.addf %516, %517 : vector<8x128xf32>
    %519 = math.tanh %518 : vector<8x128xf32>
    %520 = arith.mulf %515, %519 : vector<8x128xf32>
    %521 = tpu.concatenate %429, %460 in 1 : vector<8x128xf32>, vector<8x128xf32> -> vector<8x256xf32>
    %c0_138 = arith.constant 0 : index
    %c0_139 = arith.constant 0 : index
    %522 = vector.load %arg6[%c0_138, %c0_139] : memref<256x512xf32, #tpu.memory_space<vmem>>, vector<256x512xf32>
    %cst_140 = arith.constant dense<0.000000e+00> : vector<8x512xf32>
    %523 = tpu.matmul %521, %522, %cst_140 {dimension_numbers = #tpu.dot_dimension_numbers<[1], [0], [0], [1], [0, 0, 1, 1], [], []>} : vector<8x256xf32>, vector<256x512xf32>, vector<8x512xf32> -> vector<8x512xf32>
    %c0_141 = arith.constant 0 : index
    %c0_142 = arith.constant 0 : index
    %524 = vector.load %arg7[%c0_141, %c0_142] : memref<1x512xf32, #tpu.memory_space<vmem>>, vector<1x512xf32>
    %525 = vector.broadcast %524 : vector<1x512xf32> to vector<8x512xf32>
    %526 = arith.addf %523, %525 : vector<8x512xf32>
    %527 = vector.extract_strided_slice %526 {offsets = [0, 0], sizes = [8, 128], strides = [1, 1]} : vector<8x512xf32> to vector<8x128xf32>
    %528 = arith.negf %527 : vector<8x128xf32>
    %529 = math.exp %528 : vector<8x128xf32>
    %cst_143 = arith.constant 1.000000e+00 : f32
    %530 = vector.broadcast %cst_143 : f32 to vector<8x128xf32>
    %531 = arith.addf %530, %529 : vector<8x128xf32>
    %532 = arith.divf %530, %531 : vector<8x128xf32>
    %533 = vector.extract_strided_slice %526 {offsets = [0, 128], sizes = [8, 128], strides = [1, 1]} : vector<8x512xf32> to vector<8x128xf32>
    %534 = arith.negf %533 : vector<8x128xf32>
    %535 = math.exp %534 : vector<8x128xf32>
    %cst_144 = arith.constant 1.000000e+00 : f32
    %536 = vector.broadcast %cst_144 : f32 to vector<8x128xf32>
    %537 = arith.addf %536, %535 : vector<8x128xf32>
    %538 = arith.divf %536, %537 : vector<8x128xf32>
    %539 = vector.extract_strided_slice %526 {offsets = [0, 256], sizes = [8, 128], strides = [1, 1]} : vector<8x512xf32> to vector<8x128xf32>
    %540 = math.tanh %539 : vector<8x128xf32>
    %541 = vector.extract_strided_slice %526 {offsets = [0, 384], sizes = [8, 128], strides = [1, 1]} : vector<8x512xf32> to vector<8x128xf32>
    %542 = arith.negf %541 : vector<8x128xf32>
    %543 = math.exp %542 : vector<8x128xf32>
    %cst_145 = arith.constant 1.000000e+00 : f32
    %544 = vector.broadcast %cst_145 : f32 to vector<8x128xf32>
    %545 = arith.addf %544, %543 : vector<8x128xf32>
    %546 = arith.divf %544, %545 : vector<8x128xf32>
    %547 = arith.mulf %538, %458 : vector<8x128xf32>
    %548 = arith.mulf %532, %540 : vector<8x128xf32>
    %549 = arith.addf %547, %548 : vector<8x128xf32>
    %550 = math.tanh %549 : vector<8x128xf32>
    %551 = arith.mulf %546, %550 : vector<8x128xf32>
    %c56 = arith.constant 56 : index
    %c0_146 = arith.constant 0 : index
    %552 = vector.load %arg11[%c56, %c0_146] : memref<64x512xf32, #tpu.memory_space<vmem>>, vector<8x512xf32>
    %c0_147 = arith.constant 0 : index
    %c0_148 = arith.constant 0 : index
    %553 = vector.load %arg2[%c0_147, %c0_148] : memref<128x512xf32, #tpu.memory_space<vmem>>, vector<128x512xf32>
    %cst_149 = arith.constant dense<0.000000e+00> : vector<8x512xf32>
    %554 = tpu.matmul %489, %553, %cst_149 {dimension_numbers = #tpu.dot_dimension_numbers<[1], [0], [0], [1], [0, 0, 1, 1], [], []>} : vector<8x128xf32>, vector<128x512xf32>, vector<8x512xf32> -> vector<8x512xf32>
    %555 = arith.addf %552, %554 : vector<8x512xf32>
    %556 = vector.extract_strided_slice %555 {offsets = [0, 0], sizes = [8, 128], strides = [1, 1]} : vector<8x512xf32> to vector<8x128xf32>
    %557 = arith.negf %556 : vector<8x128xf32>
    %558 = math.exp %557 : vector<8x128xf32>
    %cst_150 = arith.constant 1.000000e+00 : f32
    %559 = vector.broadcast %cst_150 : f32 to vector<8x128xf32>
    %560 = arith.addf %559, %558 : vector<8x128xf32>
    %561 = arith.divf %559, %560 : vector<8x128xf32>
    %562 = vector.extract_strided_slice %555 {offsets = [0, 128], sizes = [8, 128], strides = [1, 1]} : vector<8x512xf32> to vector<8x128xf32>
    %563 = arith.negf %562 : vector<8x128xf32>
    %564 = math.exp %563 : vector<8x128xf32>
    %cst_151 = arith.constant 1.000000e+00 : f32
    %565 = vector.broadcast %cst_151 : f32 to vector<8x128xf32>
    %566 = arith.addf %565, %564 : vector<8x128xf32>
    %567 = arith.divf %565, %566 : vector<8x128xf32>
    %568 = vector.extract_strided_slice %555 {offsets = [0, 256], sizes = [8, 128], strides = [1, 1]} : vector<8x512xf32> to vector<8x128xf32>
    %569 = math.tanh %568 : vector<8x128xf32>
    %570 = vector.extract_strided_slice %555 {offsets = [0, 384], sizes = [8, 128], strides = [1, 1]} : vector<8x512xf32> to vector<8x128xf32>
    %571 = arith.negf %570 : vector<8x128xf32>
    %572 = math.exp %571 : vector<8x128xf32>
    %cst_152 = arith.constant 1.000000e+00 : f32
    %573 = vector.broadcast %cst_152 : f32 to vector<8x128xf32>
    %574 = arith.addf %573, %572 : vector<8x128xf32>
    %575 = arith.divf %573, %574 : vector<8x128xf32>
    %576 = arith.mulf %567, %487 : vector<8x128xf32>
    %577 = arith.mulf %561, %569 : vector<8x128xf32>
    %578 = arith.addf %576, %577 : vector<8x128xf32>
    %579 = math.tanh %578 : vector<8x128xf32>
    %580 = arith.mulf %575, %579 : vector<8x128xf32>
    %581 = tpu.concatenate %489, %520 in 1 : vector<8x128xf32>, vector<8x128xf32> -> vector<8x256xf32>
    %c0_153 = arith.constant 0 : index
    %c0_154 = arith.constant 0 : index
    %582 = vector.load %arg4[%c0_153, %c0_154] : memref<256x512xf32, #tpu.memory_space<vmem>>, vector<256x512xf32>
    %cst_155 = arith.constant dense<0.000000e+00> : vector<8x512xf32>
    %583 = tpu.matmul %581, %582, %cst_155 {dimension_numbers = #tpu.dot_dimension_numbers<[1], [0], [0], [1], [0, 0, 1, 1], [], []>} : vector<8x256xf32>, vector<256x512xf32>, vector<8x512xf32> -> vector<8x512xf32>
    %c0_156 = arith.constant 0 : index
    %c0_157 = arith.constant 0 : index
    %584 = vector.load %arg5[%c0_156, %c0_157] : memref<1x512xf32, #tpu.memory_space<vmem>>, vector<1x512xf32>
    %585 = vector.broadcast %584 : vector<1x512xf32> to vector<8x512xf32>
    %586 = arith.addf %583, %585 : vector<8x512xf32>
    %587 = vector.extract_strided_slice %586 {offsets = [0, 0], sizes = [8, 128], strides = [1, 1]} : vector<8x512xf32> to vector<8x128xf32>
    %588 = arith.negf %587 : vector<8x128xf32>
    %589 = math.exp %588 : vector<8x128xf32>
    %cst_158 = arith.constant 1.000000e+00 : f32
    %590 = vector.broadcast %cst_158 : f32 to vector<8x128xf32>
    %591 = arith.addf %590, %589 : vector<8x128xf32>
    %592 = arith.divf %590, %591 : vector<8x128xf32>
    %593 = vector.extract_strided_slice %586 {offsets = [0, 128], sizes = [8, 128], strides = [1, 1]} : vector<8x512xf32> to vector<8x128xf32>
    %594 = arith.negf %593 : vector<8x128xf32>
    %595 = math.exp %594 : vector<8x128xf32>
    %cst_159 = arith.constant 1.000000e+00 : f32
    %596 = vector.broadcast %cst_159 : f32 to vector<8x128xf32>
    %597 = arith.addf %596, %595 : vector<8x128xf32>
    %598 = arith.divf %596, %597 : vector<8x128xf32>
    %599 = vector.extract_strided_slice %586 {offsets = [0, 256], sizes = [8, 128], strides = [1, 1]} : vector<8x512xf32> to vector<8x128xf32>
    %600 = math.tanh %599 : vector<8x128xf32>
    %601 = vector.extract_strided_slice %586 {offsets = [0, 384], sizes = [8, 128], strides = [1, 1]} : vector<8x512xf32> to vector<8x128xf32>
    %602 = arith.negf %601 : vector<8x128xf32>
    %603 = math.exp %602 : vector<8x128xf32>
    %cst_160 = arith.constant 1.000000e+00 : f32
    %604 = vector.broadcast %cst_160 : f32 to vector<8x128xf32>
    %605 = arith.addf %604, %603 : vector<8x128xf32>
    %606 = arith.divf %604, %605 : vector<8x128xf32>
    %607 = arith.mulf %598, %518 : vector<8x128xf32>
    %608 = arith.mulf %592, %600 : vector<8x128xf32>
    %609 = arith.addf %607, %608 : vector<8x128xf32>
    %610 = math.tanh %609 : vector<8x128xf32>
    %611 = arith.mulf %606, %610 : vector<8x128xf32>
    %612 = tpu.concatenate %520, %551 in 1 : vector<8x128xf32>, vector<8x128xf32> -> vector<8x256xf32>
    %c0_161 = arith.constant 0 : index
    %c0_162 = arith.constant 0 : index
    %613 = vector.load %arg6[%c0_161, %c0_162] : memref<256x512xf32, #tpu.memory_space<vmem>>, vector<256x512xf32>
    %cst_163 = arith.constant dense<0.000000e+00> : vector<8x512xf32>
    %614 = tpu.matmul %612, %613, %cst_163 {dimension_numbers = #tpu.dot_dimension_numbers<[1], [0], [0], [1], [0, 0, 1, 1], [], []>} : vector<8x256xf32>, vector<256x512xf32>, vector<8x512xf32> -> vector<8x512xf32>
    %c0_164 = arith.constant 0 : index
    %c0_165 = arith.constant 0 : index
    %615 = vector.load %arg7[%c0_164, %c0_165] : memref<1x512xf32, #tpu.memory_space<vmem>>, vector<1x512xf32>
    %616 = vector.broadcast %615 : vector<1x512xf32> to vector<8x512xf32>
    %617 = arith.addf %614, %616 : vector<8x512xf32>
    %618 = vector.extract_strided_slice %617 {offsets = [0, 0], sizes = [8, 128], strides = [1, 1]} : vector<8x512xf32> to vector<8x128xf32>
    %619 = arith.negf %618 : vector<8x128xf32>
    %620 = math.exp %619 : vector<8x128xf32>
    %cst_166 = arith.constant 1.000000e+00 : f32
    %621 = vector.broadcast %cst_166 : f32 to vector<8x128xf32>
    %622 = arith.addf %621, %620 : vector<8x128xf32>
    %623 = arith.divf %621, %622 : vector<8x128xf32>
    %624 = vector.extract_strided_slice %617 {offsets = [0, 128], sizes = [8, 128], strides = [1, 1]} : vector<8x512xf32> to vector<8x128xf32>
    %625 = arith.negf %624 : vector<8x128xf32>
    %626 = math.exp %625 : vector<8x128xf32>
    %cst_167 = arith.constant 1.000000e+00 : f32
    %627 = vector.broadcast %cst_167 : f32 to vector<8x128xf32>
    %628 = arith.addf %627, %626 : vector<8x128xf32>
    %629 = arith.divf %627, %628 : vector<8x128xf32>
    %630 = vector.extract_strided_slice %617 {offsets = [0, 256], sizes = [8, 128], strides = [1, 1]} : vector<8x512xf32> to vector<8x128xf32>
    %631 = math.tanh %630 : vector<8x128xf32>
    %632 = vector.extract_strided_slice %617 {offsets = [0, 384], sizes = [8, 128], strides = [1, 1]} : vector<8x512xf32> to vector<8x128xf32>
    %633 = arith.negf %632 : vector<8x128xf32>
    %634 = math.exp %633 : vector<8x128xf32>
    %cst_168 = arith.constant 1.000000e+00 : f32
    %635 = vector.broadcast %cst_168 : f32 to vector<8x128xf32>
    %636 = arith.addf %635, %634 : vector<8x128xf32>
    %637 = arith.divf %635, %636 : vector<8x128xf32>
    %638 = arith.mulf %629, %549 : vector<8x128xf32>
    %639 = arith.mulf %623, %631 : vector<8x128xf32>
    %640 = arith.addf %638, %639 : vector<8x128xf32>
    %641 = math.tanh %640 : vector<8x128xf32>
    %642 = arith.mulf %637, %641 : vector<8x128xf32>
    %643 = tpu.concatenate %580, %611 in 1 : vector<8x128xf32>, vector<8x128xf32> -> vector<8x256xf32>
    %c0_169 = arith.constant 0 : index
    %c0_170 = arith.constant 0 : index
    %644 = vector.load %arg4[%c0_169, %c0_170] : memref<256x512xf32, #tpu.memory_space<vmem>>, vector<256x512xf32>
    %cst_171 = arith.constant dense<0.000000e+00> : vector<8x512xf32>
    %645 = tpu.matmul %643, %644, %cst_171 {dimension_numbers = #tpu.dot_dimension_numbers<[1], [0], [0], [1], [0, 0, 1, 1], [], []>} : vector<8x256xf32>, vector<256x512xf32>, vector<8x512xf32> -> vector<8x512xf32>
    %c0_172 = arith.constant 0 : index
    %c0_173 = arith.constant 0 : index
    %646 = vector.load %arg5[%c0_172, %c0_173] : memref<1x512xf32, #tpu.memory_space<vmem>>, vector<1x512xf32>
    %647 = vector.broadcast %646 : vector<1x512xf32> to vector<8x512xf32>
    %648 = arith.addf %645, %647 : vector<8x512xf32>
    %649 = vector.extract_strided_slice %648 {offsets = [0, 0], sizes = [8, 128], strides = [1, 1]} : vector<8x512xf32> to vector<8x128xf32>
    %650 = arith.negf %649 : vector<8x128xf32>
    %651 = math.exp %650 : vector<8x128xf32>
    %cst_174 = arith.constant 1.000000e+00 : f32
    %652 = vector.broadcast %cst_174 : f32 to vector<8x128xf32>
    %653 = arith.addf %652, %651 : vector<8x128xf32>
    %654 = arith.divf %652, %653 : vector<8x128xf32>
    %655 = vector.extract_strided_slice %648 {offsets = [0, 128], sizes = [8, 128], strides = [1, 1]} : vector<8x512xf32> to vector<8x128xf32>
    %656 = arith.negf %655 : vector<8x128xf32>
    %657 = math.exp %656 : vector<8x128xf32>
    %cst_175 = arith.constant 1.000000e+00 : f32
    %658 = vector.broadcast %cst_175 : f32 to vector<8x128xf32>
    %659 = arith.addf %658, %657 : vector<8x128xf32>
    %660 = arith.divf %658, %659 : vector<8x128xf32>
    %661 = vector.extract_strided_slice %648 {offsets = [0, 256], sizes = [8, 128], strides = [1, 1]} : vector<8x512xf32> to vector<8x128xf32>
    %662 = math.tanh %661 : vector<8x128xf32>
    %663 = vector.extract_strided_slice %648 {offsets = [0, 384], sizes = [8, 128], strides = [1, 1]} : vector<8x512xf32> to vector<8x128xf32>
    %664 = arith.negf %663 : vector<8x128xf32>
    %665 = math.exp %664 : vector<8x128xf32>
    %cst_176 = arith.constant 1.000000e+00 : f32
    %666 = vector.broadcast %cst_176 : f32 to vector<8x128xf32>
    %667 = arith.addf %666, %665 : vector<8x128xf32>
    %668 = arith.divf %666, %667 : vector<8x128xf32>
    %669 = arith.mulf %660, %609 : vector<8x128xf32>
    %670 = arith.mulf %654, %662 : vector<8x128xf32>
    %671 = arith.addf %669, %670 : vector<8x128xf32>
    %672 = math.tanh %671 : vector<8x128xf32>
    %673 = arith.mulf %668, %672 : vector<8x128xf32>
    %674 = tpu.concatenate %611, %642 in 1 : vector<8x128xf32>, vector<8x128xf32> -> vector<8x256xf32>
    %c0_177 = arith.constant 0 : index
    %c0_178 = arith.constant 0 : index
    %675 = vector.load %arg6[%c0_177, %c0_178] : memref<256x512xf32, #tpu.memory_space<vmem>>, vector<256x512xf32>
    %cst_179 = arith.constant dense<0.000000e+00> : vector<8x512xf32>
    %676 = tpu.matmul %674, %675, %cst_179 {dimension_numbers = #tpu.dot_dimension_numbers<[1], [0], [0], [1], [0, 0, 1, 1], [], []>} : vector<8x256xf32>, vector<256x512xf32>, vector<8x512xf32> -> vector<8x512xf32>
    %c0_180 = arith.constant 0 : index
    %c0_181 = arith.constant 0 : index
    %677 = vector.load %arg7[%c0_180, %c0_181] : memref<1x512xf32, #tpu.memory_space<vmem>>, vector<1x512xf32>
    %678 = vector.broadcast %677 : vector<1x512xf32> to vector<8x512xf32>
    %679 = arith.addf %676, %678 : vector<8x512xf32>
    %680 = vector.extract_strided_slice %679 {offsets = [0, 0], sizes = [8, 128], strides = [1, 1]} : vector<8x512xf32> to vector<8x128xf32>
    %681 = arith.negf %680 : vector<8x128xf32>
    %682 = math.exp %681 : vector<8x128xf32>
    %cst_182 = arith.constant 1.000000e+00 : f32
    %683 = vector.broadcast %cst_182 : f32 to vector<8x128xf32>
    %684 = arith.addf %683, %682 : vector<8x128xf32>
    %685 = arith.divf %683, %684 : vector<8x128xf32>
    %686 = vector.extract_strided_slice %679 {offsets = [0, 128], sizes = [8, 128], strides = [1, 1]} : vector<8x512xf32> to vector<8x128xf32>
    %687 = arith.negf %686 : vector<8x128xf32>
    %688 = math.exp %687 : vector<8x128xf32>
    %cst_183 = arith.constant 1.000000e+00 : f32
    %689 = vector.broadcast %cst_183 : f32 to vector<8x128xf32>
    %690 = arith.addf %689, %688 : vector<8x128xf32>
    %691 = arith.divf %689, %690 : vector<8x128xf32>
    %692 = vector.extract_strided_slice %679 {offsets = [0, 256], sizes = [8, 128], strides = [1, 1]} : vector<8x512xf32> to vector<8x128xf32>
    %693 = math.tanh %692 : vector<8x128xf32>
    %694 = vector.extract_strided_slice %679 {offsets = [0, 384], sizes = [8, 128], strides = [1, 1]} : vector<8x512xf32> to vector<8x128xf32>
    %695 = arith.negf %694 : vector<8x128xf32>
    %696 = math.exp %695 : vector<8x128xf32>
    %cst_184 = arith.constant 1.000000e+00 : f32
    %697 = vector.broadcast %cst_184 : f32 to vector<8x128xf32>
    %698 = arith.addf %697, %696 : vector<8x128xf32>
    %699 = arith.divf %697, %698 : vector<8x128xf32>
    %700 = arith.mulf %691, %640 : vector<8x128xf32>
    %701 = arith.mulf %685, %693 : vector<8x128xf32>
    %702 = arith.addf %700, %701 : vector<8x128xf32>
    %703 = math.tanh %702 : vector<8x128xf32>
    %704 = arith.mulf %699, %703 : vector<8x128xf32>
    %705 = tpu.concatenate %673, %704 in 1 : vector<8x128xf32>, vector<8x128xf32> -> vector<8x256xf32>
    %c0_185 = arith.constant 0 : index
    %c0_186 = arith.constant 0 : index
    %706 = vector.load %arg6[%c0_185, %c0_186] : memref<256x512xf32, #tpu.memory_space<vmem>>, vector<256x512xf32>
    %cst_187 = arith.constant dense<0.000000e+00> : vector<8x512xf32>
    %707 = tpu.matmul %705, %706, %cst_187 {dimension_numbers = #tpu.dot_dimension_numbers<[1], [0], [0], [1], [0, 0, 1, 1], [], []>} : vector<8x256xf32>, vector<256x512xf32>, vector<8x512xf32> -> vector<8x512xf32>
    %c0_188 = arith.constant 0 : index
    %c0_189 = arith.constant 0 : index
    %708 = vector.load %arg7[%c0_188, %c0_189] : memref<1x512xf32, #tpu.memory_space<vmem>>, vector<1x512xf32>
    %709 = vector.broadcast %708 : vector<1x512xf32> to vector<8x512xf32>
    %710 = arith.addf %707, %709 : vector<8x512xf32>
    %711 = vector.extract_strided_slice %710 {offsets = [0, 0], sizes = [8, 128], strides = [1, 1]} : vector<8x512xf32> to vector<8x128xf32>
    %712 = arith.negf %711 : vector<8x128xf32>
    %713 = math.exp %712 : vector<8x128xf32>
    %cst_190 = arith.constant 1.000000e+00 : f32
    %714 = vector.broadcast %cst_190 : f32 to vector<8x128xf32>
    %715 = arith.addf %714, %713 : vector<8x128xf32>
    %716 = arith.divf %714, %715 : vector<8x128xf32>
    %717 = vector.extract_strided_slice %710 {offsets = [0, 128], sizes = [8, 128], strides = [1, 1]} : vector<8x512xf32> to vector<8x128xf32>
    %718 = arith.negf %717 : vector<8x128xf32>
    %719 = math.exp %718 : vector<8x128xf32>
    %cst_191 = arith.constant 1.000000e+00 : f32
    %720 = vector.broadcast %cst_191 : f32 to vector<8x128xf32>
    %721 = arith.addf %720, %719 : vector<8x128xf32>
    %722 = arith.divf %720, %721 : vector<8x128xf32>
    %723 = vector.extract_strided_slice %710 {offsets = [0, 256], sizes = [8, 128], strides = [1, 1]} : vector<8x512xf32> to vector<8x128xf32>
    %724 = math.tanh %723 : vector<8x128xf32>
    %725 = vector.extract_strided_slice %710 {offsets = [0, 384], sizes = [8, 128], strides = [1, 1]} : vector<8x512xf32> to vector<8x128xf32>
    %726 = arith.negf %725 : vector<8x128xf32>
    %727 = math.exp %726 : vector<8x128xf32>
    %cst_192 = arith.constant 1.000000e+00 : f32
    %728 = vector.broadcast %cst_192 : f32 to vector<8x128xf32>
    %729 = arith.addf %728, %727 : vector<8x128xf32>
    %730 = arith.divf %728, %729 : vector<8x128xf32>
    %731 = arith.mulf %722, %702 : vector<8x128xf32>
    %732 = arith.mulf %716, %724 : vector<8x128xf32>
    %733 = arith.addf %731, %732 : vector<8x128xf32>
    %734 = math.tanh %733 : vector<8x128xf32>
    %735 = arith.mulf %730, %734 : vector<8x128xf32>
    %736 = tpu.concatenate %187, %278, %369, %460, %551, %642, %704, %735 in 0 : vector<8x128xf32>, vector<8x128xf32>, vector<8x128xf32>, vector<8x128xf32>, vector<8x128xf32>, vector<8x128xf32>, vector<8x128xf32>, vector<8x128xf32> -> vector<64x128xf32>
    %c0_193 = arith.constant 0 : index
    %c0_194 = arith.constant 0 : index
    %737 = vector.load %arg8[%c0_193, %c0_194] : memref<128x128xf32, #tpu.memory_space<vmem>>, vector<128x128xf32>
    %cst_195 = arith.constant dense<0.000000e+00> : vector<64x128xf32>
    %738 = tpu.matmul %736, %737, %cst_195 {dimension_numbers = #tpu.dot_dimension_numbers<[1], [0], [0], [1], [0, 0, 1, 1], [], []>} : vector<64x128xf32>, vector<128x128xf32>, vector<64x128xf32> -> vector<64x128xf32>
    %c0_196 = arith.constant 0 : index
    %c0_197 = arith.constant 0 : index
    %739 = vector.load %arg9[%c0_196, %c0_197] : memref<1x128xf32, #tpu.memory_space<vmem>>, vector<1x128xf32>
    %740 = vector.broadcast %739 : vector<1x128xf32> to vector<64x128xf32>
    %741 = arith.addf %738, %740 : vector<64x128xf32>
    %c0_198 = arith.constant 0 : index
    %c0_199 = arith.constant 0 : index
    %742 = vector.load %arg10[%c0_198, %c0_199] : memref<64x128xf32, #tpu.memory_space<vmem>>, vector<64x128xf32>
    tpu.vector_store %arg10[%c0_198, %c0_199], %741 {strides = array<i32>} : memref<64x128xf32, #tpu.memory_space<vmem>>, vector<64x128xf32>,
    return
  }
}

</mosaic_0001>

<llo_original>
// kernel: sales_model_forward.1
$region0: #{sales_model_forward.1}
  #allocation0 [shape = 'u32[]', space=smem, size = 0x4, offset = 0x4, fixed_abs, tag = 'smem constant byte address 0x4 - core index']
  #allocation1 [shape = 'u32[144,128]{1,0:T(1,128)}', space=vmem, size = 0x12000, scoped, tag = 'internal scratch']
  #allocation2 [shape = 'f32[64,512]{1,0:T(8,128)}', space=vmem, size = 0x20000, scoped, tag = 'scratch operand']
  %s0 = inlined_call_operand.vmem [shape: f32[64,128], index: 0, kind: input, shape index: {}]
  %s1 = inlined_call_operand.vmem [shape: f32[128,512], index: 1, kind: input, shape index: {}]
  %s2 = inlined_call_operand.vmem [shape: f32[128,512], index: 2, kind: input, shape index: {}]
  %s3 = inlined_call_operand.vmem [shape: f32[1,512], index: 3, kind: input, shape index: {}]
  %s4 = inlined_call_operand.vmem [shape: f32[256,512], index: 4, kind: input, shape index: {}]
  %s5 = inlined_call_operand.vmem [shape: f32[1,512], index: 5, kind: input, shape index: {}]
  %s6 = inlined_call_operand.vmem [shape: f32[256,512], index: 6, kind: input, shape index: {}]
  %s7 = inlined_call_operand.vmem [shape: f32[1,512], index: 7, kind: input, shape index: {}]
  %s8 = inlined_call_operand.vmem [shape: f32[128,128], index: 8, kind: input, shape index: {}]
  %s9 = inlined_call_operand.vmem [shape: f32[1,128], index: 9, kind: input, shape index: {}]
  %s10 = inlined_call_operand.vmem [shape: f32[64,128], index: 10, kind: output, shape index: {}]
  %s11 = sld [smem:[#allocation0]]
  $region50: #{sales_model_forward.1} parent=0
    _
  %s13 = ssub.s32 1, %s11
  %s14 = scalar_select 0, %s13, %s11
  // Predicated region
  $region2: #{sales_model_forward.1} parent=0 // pred_check
    _
  $region3: #{sales_model_forward.1} parent=0 // pred_check_branch
    %16 = sbr.rel (0) target = $region5
  $region4: #{sales_model_forward.1} parent=0 // pred_region
    _
  $region5: #{sales_model_forward.1} parent=0 // pred_fallthru
    _
  // Predicated region
  $region6: #{sales_model_forward.1} parent=0 // pred_check
    _
  $region7: #{sales_model_forward.1} parent=0 // pred_check_branch
    %18 = sbr.rel (0) target = $region9
  $region8: #{sales_model_forward.1} parent=0 // pred_region
    _
  $region9: #{sales_model_forward.1} parent=0 // pred_fallthru
    _
  // Predicated region
  $region10: #{sales_model_forward.1} parent=0 // pred_check
    _
  $region11: #{sales_model_forward.1} parent=0 // pred_check_branch
    %20 = sbr.rel (0) target = $region13
  $region12: #{sales_model_forward.1} parent=0 // pred_region
    _
  $region13: #{sales_model_forward.1} parent=0 // pred_fallthru
    _
  // Predicated region
  $region14: #{sales_model_forward.1} parent=0 // pred_check
    _
  $region15: #{sales_model_forward.1} parent=0 // pred_check_branch
    %22 = sbr.rel (0) target = $region17
  $region16: #{sales_model_forward.1} parent=0 // pred_region
    _
  $region17: #{sales_model_forward.1} parent=0 // pred_fallthru
    _
  // Predicated region
  $region18: #{sales_model_forward.1} parent=0 // pred_check
    _
  $region19: #{sales_model_forward.1} parent=0 // pred_check_branch
    %24 = sbr.rel (0) target = $region21
  $region20: #{sales_model_forward.1} parent=0 // pred_region
    _
  $region21: #{sales_model_forward.1} parent=0 // pred_fallthru
    _
  // Predicated region
  $region22: #{sales_model_forward.1} parent=0 // pred_check
    _
  $region23: #{sales_model_forward.1} parent=0 // pred_check_branch
    %26 = sbr.rel (0) target = $region25
  $region24: #{sales_model_forward.1} parent=0 // pred_region
    _
  $region25: #{sales_model_forward.1} parent=0 // pred_fallthru
    _
  // Predicated region
  $region26: #{sales_model_forward.1} parent=0 // pred_check
    _
  $region27: #{sales_model_forward.1} parent=0 // pred_check_branch
    %28 = sbr.rel (0) target = $region29
  $region28: #{sales_model_forward.1} parent=0 // pred_region
    _
  $region29: #{sales_model_forward.1} parent=0 // pred_fallthru
    _
  // Predicated region
  $region30: #{sales_model_forward.1} parent=0 // pred_check
    _
  $region31: #{sales_model_forward.1} parent=0 // pred_check_branch
    %30 = sbr.rel (0) target = $region33
  $region32: #{sales_model_forward.1} parent=0 // pred_region
    _
  $region33: #{sales_model_forward.1} parent=0 // pred_fallthru
    _
  // Predicated region
  $region34: #{sales_model_forward.1} parent=0 // pred_check
    _
  $region35: #{sales_model_forward.1} parent=0 // pred_check_branch
    %32 = sbr.rel (0) target = $region37
  $region36: #{sales_model_forward.1} parent=0 // pred_region
    _
  $region37: #{sales_model_forward.1} parent=0 // pred_fallthru
    _
  // Predicated region
  $region38: #{sales_model_forward.1} parent=0 // pred_check
    _
  $region39: #{sales_model_forward.1} parent=0 // pred_check_branch
    %34 = sbr.rel (0) target = $region41
  $region40: #{sales_model_forward.1} parent=0 // pred_region
    _
  $region41: #{sales_model_forward.1} parent=0 // pred_fallthru
    _
  %v35 = vld [vmem:[%s0] sm:$0xff]
  %v36 = vld [vmem:[%s0 + $0x8] sm:$0xff]
  %v37 = vld [vmem:[%s0 + $0x10] sm:$0xff]
  %v38 = vld [vmem:[%s0 + $0x18] sm:$0xff]
  %v39 = vld [vmem:[%s0 + $0x20] sm:$0xff]
  %v40 = vld [vmem:[%s0 + $0x28] sm:$0xff]
  %v41 = vld [vmem:[%s0 + $0x30] sm:$0xff]
  %v42 = vld [vmem:[%s0 + $0x38] sm:$0xff]
  %v43 = vld [vmem:[%s1] sm:$0xff]
  %v44 = vld [vmem:[%s1 + $0x8] sm:$0xff]
  %v45 = vld [vmem:[%s1 + $0x10] sm:$0xff]
  %v46 = vld [vmem:[%s1 + $0x18] sm:$0xff]
  %v47 = vld [vmem:[%s1 + $0x20] sm:$0xff]
  %v48 = vld [vmem:[%s1 + $0x28] sm:$0xff]
  %v49 = vld [vmem:[%s1 + $0x30] sm:$0xff]
  %v50 = vld [vmem:[%s1 + $0x38] sm:$0xff]
  %v51 = vld [vmem:[%s1 + $0x40] sm:$0xff]
  %v52 = vld [vmem:[%s1 + $0x48] sm:$0xff]
  %v53 = vld [vmem:[%s1 + $0x50] sm:$0xff]
  %v54 = vld [vmem:[%s1 + $0x58] sm:$0xff]
  %v55 = vld [vmem:[%s1 + $0x60] sm:$0xff]
  %v56 = vld [vmem:[%s1 + $0x68] sm:$0xff]
  %v57 = vld [vmem:[%s1 + $0x70] sm:$0xff]
  %v58 = vld [vmem:[%s1 + $0x78] sm:$0xff]
  %v59 = vld [vmem:[%s1 + $0x80] sm:$0xff]
  %v60 = vld [vmem:[%s1 + $0x88] sm:$0xff]
  %v61 = vld [vmem:[%s1 + $0x90] sm:$0xff]
  %v62 = vld [vmem:[%s1 + $0x98] sm:$0xff]
  %v63 = vld [vmem:[%s1 + $0xa0] sm:$0xff]
  %v64 = vld [vmem:[%s1 + $0xa8] sm:$0xff]
  %v65 = vld [vmem:[%s1 + $0xb0] sm:$0xff]
  %v66 = vld [vmem:[%s1 + $0xb8] sm:$0xff]
  %v67 = vld [vmem:[%s1 + $0xc0] sm:$0xff]
  %v68 = vld [vmem:[%s1 + $0xc8] sm:$0xff]
  %v69 = vld [vmem:[%s1 + $0xd0] sm:$0xff]
  %v70 = vld [vmem:[%s1 + $0xd8] sm:$0xff]
  %v71 = vld [vmem:[%s1 + $0xe0] sm:$0xff]
  %v72 = vld [vmem:[%s1 + $0xe8] sm:$0xff]
  %v73 = vld [vmem:[%s1 + $0xf0] sm:$0xff]
  %v74 = vld [vmem:[%s1 + $0xf8] sm:$0xff]
  %v75 = vld [vmem:[%s1 + $0x100] sm:$0xff]
  %v76 = vld [vmem:[%s1 + $0x108] sm:$0xff]
  %v77 = vld [vmem:[%s1 + $0x110] sm:$0xff]
  %v78 = vld [vmem:[%s1 + $0x118] sm:$0xff]
  %v79 = vld [vmem:[%s1 + $0x120] sm:$0xff]
  %v80 = vld [vmem:[%s1 + $0x128] sm:$0xff]
  %v81 = vld [vmem:[%s1 + $0x130] sm:$0xff]
  %v82 = vld [vmem:[%s1 + $0x138] sm:$0xff]
  %v83 = vld [vmem:[%s1 + $0x140] sm:$0xff]
  %v84 = vld [vmem:[%s1 + $0x148] sm:$0xff]
  %v85 = vld [vmem:[%s1 + $0x150] sm:$0xff]
  %v86 = vld [vmem:[%s1 + $0x158] sm:$0xff]
  %v87 = vld [vmem:[%s1 + $0x160] sm:$0xff]
  %v88 = vld [vmem:[%s1 + $0x168] sm:$0xff]
  %v89 = vld [vmem:[%s1 + $0x170] sm:$0xff]
  %v90 = vld [vmem:[%s1 + $0x178] sm:$0xff]
  %v91 = vld [vmem:[%s1 + $0x180] sm:$0xff]
  %v92 = vld [vmem:[%s1 + $0x188] sm:$0xff]
  %v93 = vld [vmem:[%s1 + $0x190] sm:$0xff]
  %v94 = vld [vmem:[%s1 + $0x198] sm:$0xff]
  %v95 = vld [vmem:[%s1 + $0x1a0] sm:$0xff]
  %v96 = vld [vmem:[%s1 + $0x1a8] sm:$0xff]
  %v97 = vld [vmem:[%s1 + $0x1b0] sm:$0xff]
  %v98 = vld [vmem:[%s1 + $0x1b8] sm:$0xff]
  %v99 = vld [vmem:[%s1 + $0x1c0] sm:$0xff]
  %v100 = vld [vmem:[%s1 + $0x1c8] sm:$0xff]
  %v101 = vld [vmem:[%s1 + $0x1d0] sm:$0xff]
  %v102 = vld [vmem:[%s1 + $0x1d8] sm:$0xff]
  %v103 = vld [vmem:[%s1 + $0x1e0] sm:$0xff]
  %v104 = vld [vmem:[%s1 + $0x1e8] sm:$0xff]
  %v105 = vld [vmem:[%s1 + $0x1f0] sm:$0xff]
  %v106 = vld [vmem:[%s1 + $0x1f8] sm:$0xff]
  %v107 = vld [vmem:[%s3] sm:$0xf]
  %v109 = vlaneseq
  %v110 = vshrl.u32 %v109, 7
  %v111 = vsub.s32 0, %v110
  %v112 = vrot.slane %v107, %v111
  %v113 = vlaneseq
  %v114 = vshrl.u32 %v113, 7
  %v115 = vsub.s32 1, %v114
  %v116 = vrot.slane %v107, %v115
  %v117 = vlaneseq
  %v118 = vshrl.u32 %v117, 7
  %v119 = vsub.s32 2, %v118
  %v120 = vrot.slane %v107, %v119
  %v121 = vlaneseq
  %v122 = vshrl.u32 %v121, 7
  %v123 = vsub.s32 3, %v122
  %v124 = vrot.slane %v107, %v123
  %129 = vmatprep.subr.mxu0 %v44
  %130 = vmatpush1.msra.mxu0 %v43
  %131 = vmatprep.subr.mxu0 %v48
  %132 = vmatpush1.msra.mxu0 %v47
  %133 = vmatprep.subr.mxu0 %v52
  %134 = vmatpush1.msra.mxu0 %v51
  %135 = vmatprep.subr.mxu0 %v56
  %136 = vmatpush1.msra.mxu0 %v55
  %137 = vmatprep.subr.mxu0 %v60
  %138 = vmatpush1.msra.mxu0 %v59
  %139 = vmatprep.subr.mxu0 %v64
  %140 = vmatpush1.msra.mxu0 %v63
  %141 = vmatprep.subr.mxu0 %v68
  %142 = vmatpush1.msra.mxu0 %v67
  %143 = vmatprep.subr.mxu0 %v72
  %144 = vmatpush1.msra.mxu0 %v71
  %145 = vmatprep.subr.mxu0 %v76
  %146 = vmatpush1.msra.mxu0 %v75
  %147 = vmatprep.subr.mxu0 %v80
  %148 = vmatpush1.msra.mxu0 %v79
  %149 = vmatprep.subr.mxu0 %v84
  %150 = vmatpush1.msra.mxu0 %v83
  %151 = vmatprep.subr.mxu0 %v88
  %152 = vmatpush1.msra.mxu0 %v87
  %153 = vmatprep.subr.mxu0 %v92
  %154 = vmatpush1.msra.mxu0 %v91
  %155 = vmatprep.subr.mxu0 %v96
  %156 = vmatpush1.msra.mxu0 %v95
  %157 = vmatprep.subr.mxu0 %v100
  %158 = vmatpush1.msra.mxu0 %v99
  %159 = vmatprep.subr.mxu0 %v104
  %160 = vmatpush1.msra.mxu0 %v103
  %161 = vmatprep.subr.mxu0 0.0
  %162 = vmatpush1.msra.mxu0 0.0
  %163 = vmatprep.subr.mxu0 0.0
  %164 = vmatpush1.msra.mxu0 0.0
  %165 = vmatprep.subr.mxu0 0.0
  %166 = vmatpush1.msra.mxu0 0.0
  %167 = vmatprep.subr.mxu0 0.0
  %168 = vmatpush1.msra.mxu0 0.0
  %169 = vmatprep.subr.mxu0 0.0
  %170 = vmatpush1.msra.mxu0 0.0
  %171 = vmatprep.subr.mxu0 0.0
  %172 = vmatpush1.msra.mxu0 0.0
  %173 = vmatprep.subr.mxu0 0.0
  %174 = vmatpush1.msra.mxu0 0.0
  %175 = vmatprep.subr.mxu0 0.0
  %176 = vmatpush1.msra.mxu0 0.0
  %177 = vmatprep.subr.mxu0 0.0
  %178 = vmatpush1.msra.mxu0 0.0
  %179 = vmatprep.subr.mxu0 0.0
  %180 = vmatpush1.msra.mxu0 0.0
  %181 = vmatprep.subr.mxu0 0.0
  %182 = vmatpush1.msra.mxu0 0.0
  %183 = vmatprep.subr.mxu0 0.0
  %184 = vmatpush1.msra.mxu0 0.0
  %185 = vmatprep.subr.mxu0 0.0
  %186 = vmatpush1.msra.mxu0 0.0
  %187 = vmatprep.subr.mxu0 0.0
  %188 = vmatpush1.msra.mxu0 0.0
  %189 = vmatprep.subr.mxu0 0.0
  %190 = vmatpush1.msra.mxu0 0.0
  %191 = vmatprep.subr.mxu0 0.0
  %192 = vmatpush1.msra.mxu0 0.0
  %193 = vmatprep.mubr.f32.mxu0 0.0
  %194 = vmatmul.mubr.f32.gmra.mrb[0].mxu0 %v35
  %v195 = vpop.f32.mrb[0].mxu0
  %v196 = vadd.f32 %v112, %v195
  %v197 = vpop.f32.mrb[0].mxu0
  %v198 = vadd.f32 %v116, %v197
  %199 = vmatprep.mubr.f32.mxu0 0.0
  %200 = vmatmul.mubr.f32.gmra.mrb[0].mxu0 %v36
  %v201 = vpop.f32.mrb[0].mxu0
  %v202 = vadd.f32 %v112, %v201
  %v203 = vpop.f32.mrb[0].mxu0
  %v204 = vadd.f32 %v116, %v203
  %205 = vmatprep.mubr.f32.mxu0 0.0
  %206 = vmatmul.mubr.f32.gmra.mrb[0].mxu0 %v37
  %v207 = vpop.f32.mrb[0].mxu0
  %v208 = vadd.f32 %v112, %v207
  %v209 = vpop.f32.mrb[0].mxu0
  %v210 = vadd.f32 %v116, %v209
  %211 = vmatprep.mubr.f32.mxu0 0.0
  %212 = vmatmul.mubr.f32.gmra.mrb[0].mxu0 %v38
  %v213 = vpop.f32.mrb[0].mxu0
  %v214 = vadd.f32 %v112, %v213
  %v215 = vpop.f32.mrb[0].mxu0
  %v216 = vadd.f32 %v116, %v215
  %217 = vmatprep.mubr.f32.mxu0 0.0
  %218 = vmatmul.mubr.f32.gmra.mrb[0].mxu0 %v39
  %v219 = vpop.f32.mrb[0].mxu0
  %v220 = vadd.f32 %v112, %v219
  %v221 = vpop.f32.mrb[0].mxu0
  %v222 = vadd.f32 %v116, %v221
  %223 = vmatprep.mubr.f32.mxu0 0.0
  %224 = vmatmul.mubr.f32.gmra.mrb[0].mxu0 %v40
  %v225 = vpop.f32.mrb[0].mxu0
  %v226 = vadd.f32 %v112, %v225
  %v227 = vpop.f32.mrb[0].mxu0
  %v228 = vadd.f32 %v116, %v227
  %229 = vmatprep.mubr.f32.mxu0 0.0
  %230 = vmatmul.mubr.f32.gmra.mrb[0].mxu0 %v41
  %v231 = vpop.f32.mrb[0].mxu0
  %v232 = vadd.f32 %v112, %v231
  %v233 = vpop.f32.mrb[0].mxu0
  %v234 = vadd.f32 %v116, %v233
  %235 = vmatprep.mubr.f32.mxu0 0.0
  %236 = vmatmul.mubr.f32.gmra.mrb[0].mxu0 %v42
  %v237 = vpop.f32.mrb[0].mxu0
  %v238 = vadd.f32 %v112, %v237
  %v239 = vpop.f32.mrb[0].mxu0
  %v240 = vadd.f32 %v116, %v239
  %241 = vdwg.mxu0
  %242 = vmatprep.subr.mxu0 %v46
  %243 = vmatpush1.msra.mxu0 %v45
  %244 = vmatprep.subr.mxu0 %v50
  %245 = vmatpush1.msra.mxu0 %v49
  %246 = vmatprep.subr.mxu0 %v54
  %247 = vmatpush1.msra.mxu0 %v53
  %248 = vmatprep.subr.mxu0 %v58
  %249 = vmatpush1.msra.mxu0 %v57
  %250 = vmatprep.subr.mxu0 %v62
  %251 = vmatpush1.msra.mxu0 %v61
  %252 = vmatprep.subr.mxu0 %v66
  %253 = vmatpush1.msra.mxu0 %v65
  %254 = vmatprep.subr.mxu0 %v70
  %255 = vmatpush1.msra.mxu0 %v69
  %256 = vmatprep.subr.mxu0 %v74
  %257 = vmatpush1.msra.mxu0 %v73
  %258 = vmatprep.subr.mxu0 %v78
  %259 = vmatpush1.msra.mxu0 %v77
  %260 = vmatprep.subr.mxu0 %v82
  %261 = vmatpush1.msra.mxu0 %v81
  %262 = vmatprep.subr.mxu0 %v86
  %263 = vmatpush1.msra.mxu0 %v85
  %264 = vmatprep.subr.mxu0 %v90
  %265 = vmatpush1.msra.mxu0 %v89
  %266 = vmatprep.subr.mxu0 %v94
  %267 = vmatpush1.msra.mxu0 %v93
  %268 = vmatprep.subr.mxu0 %v98
  %269 = vmatpush1.msra.mxu0 %v97
  %270 = vmatprep.subr.mxu0 %v102
  %271 = vmatpush1.msra.mxu0 %v101
  %272 = vmatprep.subr.mxu0 %v106
  %273 = vmatpush1.msra.mxu0 %v105
  %274 = vmatprep.subr.mxu0 0.0
  %275 = vmatpush1.msra.mxu0 0.0
  %276 = vmatprep.subr.mxu0 0.0
  %277 = vmatpush1.msra.mxu0 0.0
  %278 = vmatprep.subr.mxu0 0.0
  %279 = vmatpush1.msra.mxu0 0.0
  %280 = vmatprep.subr.mxu0 0.0
  %281 = vmatpush1.msra.mxu0 0.0
  %282 = vmatprep.subr.mxu0 0.0
  %283 = vmatpush1.msra.mxu0 0.0
  %284 = vmatprep.subr.mxu0 0.0
  %285 = vmatpush1.msra.mxu0 0.0
  %286 = vmatprep.subr.mxu0 0.0
  %287 = vmatpush1.msra.mxu0 0.0
  %288 = vmatprep.subr.mxu0 0.0
  %289 = vmatpush1.msra.mxu0 0.0
  %290 = vmatprep.subr.mxu0 0.0
  %291 = vmatpush1.msra.mxu0 0.0
  %292 = vmatprep.subr.mxu0 0.0
  %293 = vmatpush1.msra.mxu0 0.0
  %294 = vmatprep.subr.mxu0 0.0
  %295 = vmatpush1.msra.mxu0 0.0
  %296 = vmatprep.subr.mxu0 0.0
  %297 = vmatpush1.msra.mxu0 0.0
  %298 = vmatprep.subr.mxu0 0.0
  %299 = vmatpush1.msra.mxu0 0.0
  %300 = vmatprep.subr.mxu0 0.0
  %301 = vmatpush1.msra.mxu0 0.0
  %302 = vmatprep.subr.mxu0 0.0
  %303 = vmatpush1.msra.mxu0 0.0
  %304 = vmatprep.subr.mxu0 0.0
  %305 = vmatpush1.msra.mxu0 0.0
  %306 = vmatprep.mubr.f32.mxu0 0.0
  %307 = vmatmul.mubr.f32.gmra.mrb[0].mxu0 %v35
  %v308 = vpop.f32.mrb[0].mxu0
  %v309 = vadd.f32 %v120, %v308
  %v310 = vpop.f32.mrb[0].mxu0
  %v311 = vadd.f32 %v124, %v310
  %312 = vmatprep.mubr.f32.mxu0 0.0
  %313 = vmatmul.mubr.f32.gmra.mrb[0].mxu0 %v36
  %v314 = vpop.f32.mrb[0].mxu0
  %v315 = vadd.f32 %v120, %v314
  %v316 = vpop.f32.mrb[0].mxu0
  %v317 = vadd.f32 %v124, %v316
  %318 = vmatprep.mubr.f32.mxu0 0.0
  %319 = vmatmul.mubr.f32.gmra.mrb[0].mxu0 %v37
  %v320 = vpop.f32.mrb[0].mxu0
  %v321 = vadd.f32 %v120, %v320
  %v322 = vpop.f32.mrb[0].mxu0
  %v323 = vadd.f32 %v124, %v322
  %324 = vmatprep.mubr.f32.mxu0 0.0
  %325 = vmatmul.mubr.f32.gmra.mrb[0].mxu0 %v38
  %v326 = vpop.f32.mrb[0].mxu0
  %v327 = vadd.f32 %v120, %v326
  %v328 = vpop.f32.mrb[0].mxu0
  %v329 = vadd.f32 %v124, %v328
  %330 = vmatprep.mubr.f32.mxu0 0.0
  %331 = vmatmul.mubr.f32.gmra.mrb[0].mxu0 %v39
  %v332 = vpop.f32.mrb[0].mxu0
  %v333 = vadd.f32 %v120, %v332
  %v334 = vpop.f32.mrb[0].mxu0
  %v335 = vadd.f32 %v124, %v334
  %336 = vmatprep.mubr.f32.mxu0 0.0
  %337 = vmatmul.mubr.f32.gmra.mrb[0].mxu0 %v40
  %v338 = vpop.f32.mrb[0].mxu0
  %v339 = vadd.f32 %v120, %v338
  %v340 = vpop.f32.mrb[0].mxu0
  %v341 = vadd.f32 %v124, %v340
  %342 = vmatprep.mubr.f32.mxu0 0.0
  %343 = vmatmul.mubr.f32.gmra.mrb[0].mxu0 %v41
  %v344 = vpop.f32.mrb[0].mxu0
  %v345 = vadd.f32 %v120, %v344
  %v346 = vpop.f32.mrb[0].mxu0
  %v347 = vadd.f32 %v124, %v346
  %348 = vmatprep.mubr.f32.mxu0 0.0
  %349 = vmatmul.mubr.f32.gmra.mrb[0].mxu0 %v42
  %v350 = vpop.f32.mrb[0].mxu0
  %v351 = vadd.f32 %v120, %v350
  %v352 = vpop.f32.mrb[0].mxu0
  %v353 = vadd.f32 %v124, %v352
  %354 = vdwg.mxu0
  %355 = vst [vmem:[#allocation2] sm:$0xff] %v196
  %356 = vst [vmem:[#allocation2 + $0x8] sm:$0xff] %v198
  %357 = vst [vmem:[#allocation2 + $0x10] sm:$0xff] %v309
  %358 = vst [vmem:[#allocation2 + $0x18] sm:$0xff] %v311
  %359 = vst [vmem:[#allocation2 + $0x20] sm:$0xff] %v202
  %360 = vst [vmem:[#allocation2 + $0x28] sm:$0xff] %v204
  %361 = vst [vmem:[#allocation2 + $0x30] sm:$0xff] %v315
  %362 = vst [vmem:[#allocation2 + $0x38] sm:$0xff] %v317
  %363 = vst [vmem:[#allocation2 + $0x40] sm:$0xff] %v208
  %364 = vst [vmem:[#allocation2 + $0x48] sm:$0xff] %v210
  %365 = vst [vmem:[#allocation2 + $0x50] sm:$0xff] %v321
  %366 = vst [vmem:[#allocation2 + $0x58] sm:$0xff] %v323
  %367 = vst [vmem:[#allocation2 + $0x60] sm:$0xff] %v214
  %368 = vst [vmem:[#allocation2 + $0x68] sm:$0xff] %v216
  %369 = vst [vmem:[#allocation2 + $0x70] sm:$0xff] %v327
  %370 = vst [vmem:[#allocation2 + $0x78] sm:$0xff] %v329
  %371 = vst [vmem:[#allocation2 + $0x80] sm:$0xff] %v220
  %372 = vst [vmem:[#allocation2 + $0x88] sm:$0xff] %v222
  %373 = vst [vmem:[#allocation2 + $0x90] sm:$0xff] %v333
  %374 = vst [vmem:[#allocation2 + $0x98] sm:$0xff] %v335
  %375 = vst [vmem:[#allocation2 + $0xa0] sm:$0xff] %v226
  %376 = vst [vmem:[#allocation2 + $0xa8] sm:$0xff] %v228
  %377 = vst [vmem:[#allocation2 + $0xb0] sm:$0xff] %v339
  %378 = vst [vmem:[#allocation2 + $0xb8] sm:$0xff] %v341
  %379 = vst [vmem:[#allocation2 + $0xc0] sm:$0xff] %v232
  %380 = vst [vmem:[#allocation2 + $0xc8] sm:$0xff] %v234
  %381 = vst [vmem:[#allocation2 + $0xd0] sm:$0xff] %v345
  %382 = vst [vmem:[#allocation2 + $0xd8] sm:$0xff] %v347
  %383 = vst [vmem:[#allocation2 + $0xe0] sm:$0xff] %v238
  %384 = vst [vmem:[#allocation2 + $0xe8] sm:$0xff] %v240
  %385 = vst [vmem:[#allocation2 + $0xf0] sm:$0xff] %v351
  %386 = vst [vmem:[#allocation2 + $0xf8] sm:$0xff] %v353
  %v387 = vld [vmem:[#allocation2] sm:$0xff]
  %v388 = vld [vmem:[#allocation2 + $0x8] sm:$0xff]
  %v389 = vld [vmem:[#allocation2 + $0x10] sm:$0xff]
  %v390 = vld [vmem:[#allocation2 + $0x18] sm:$0xff]
  %v391 = vld [vmem:[%s2] sm:$0xff]
  %v392 = vld [vmem:[%s2 + $0x8] sm:$0xff]
  %v393 = vld [vmem:[%s2 + $0x10] sm:$0xff]
  %v394 = vld [vmem:[%s2 + $0x18] sm:$0xff]
  %v395 = vld [vmem:[%s2 + $0x20] sm:$0xff]
  %v396 = vld [vmem:[%s2 + $0x28] sm:$0xff]
  %v397 = vld [vmem:[%s2 + $0x30] sm:$0xff]
  %v398 = vld [vmem:[%s2 + $0x38] sm:$0xff]
  %v399 = vld [vmem:[%s2 + $0x40] sm:$0xff]
  %v400 = vld [vmem:[%s2 + $0x48] sm:$0xff]
  %v401 = vld [vmem:[%s2 + $0x50] sm:$0xff]
  %v402 = vld [vmem:[%s2 + $0x58] sm:$0xff]
  %v403 = vld [vmem:[%s2 + $0x60] sm:$0xff]
  %v404 = vld [vmem:[%s2 + $0x68] sm:$0xff]
  %v405 = vld [vmem:[%s2 + $0x70] sm:$0xff]
  %v406 = vld [vmem:[%s2 + $0x78] sm:$0xff]
  %v407 = vld [vmem:[%s2 + $0x80] sm:$0xff]
  %v408 = vld [vmem:[%s2 + $0x88] sm:$0xff]
  %v409 = vld [vmem:[%s2 + $0x90] sm:$0xff]
  %v410 = vld [vmem:[%s2 + $0x98] sm:$0xff]
  %v411 = vld [vmem:[%s2 + $0xa0] sm:$0xff]
  %v412 = vld [vmem:[%s2 + $0xa8] sm:$0xff]
  %v413 = vld [vmem:[%s2 + $0xb0] sm:$0xff]
  %v414 = vld [vmem:[%s2 + $0xb8] sm:$0xff]
  %v415 = vld [vmem:[%s2 + $0xc0] sm:$0xff]
  %v416 = vld [vmem:[%s2 + $0xc8] sm:$0xff]
  %v417 = vld [vmem:[%s2 + $0xd0] sm:$0xff]
  %v418 = vld [vmem:[%s2 + $0xd8] sm:$0xff]
  %v419 = vld [vmem:[%s2 + $0xe0] sm:$0xff]
  %v420 = vld [vmem:[%s2 + $0xe8] sm:$0xff]
  %v421 = vld [vmem:[%s2 + $0xf0] sm:$0xff]
  %v422 = vld [vmem:[%s2 + $0xf8] sm:$0xff]
  %v423 = vld [vmem:[%s2 + $0x100] sm:$0xff]
  %v424 = vld [vmem:[%s2 + $0x108] sm:$0xff]
  %v425 = vld [vmem:[%s2 + $0x110] sm:$0xff]
  %v426 = vld [vmem:[%s2 + $0x118] sm:$0xff]
  %v427 = vld [vmem:[%s2 + $0x120] sm:$0xff]
  %v428 = vld [vmem:[%s2 + $0x128] sm:$0xff]
  %v429 = vld [vmem:[%s2 + $0x130] sm:$0xff]
  %v430 = vld [vmem:[%s2 + $0x138] sm:$0xff]
  %v431 = vld [vmem:[%s2 + $0x140] sm:$0xff]
  %v432 = vld [vmem:[%s2 + $0x148] sm:$0xff]
  %v433 = vld [vmem:[%s2 + $0x150] sm:$0xff]
  %v434 = vld [vmem:[%s2 + $0x158] sm:$0xff]
  %v435 = vld [vmem:[%s2 + $0x160] sm:$0xff]
  %v436 = vld [vmem:[%s2 + $0x168] sm:$0xff]
  %v437 = vld [vmem:[%s2 + $0x170] sm:$0xff]
  %v438 = vld [vmem:[%s2 + $0x178] sm:$0xff]
  %v439 = vld [vmem:[%s2 + $0x180] sm:$0xff]
  %v440 = vld [vmem:[%s2 + $0x188] sm:$0xff]
  %v441 = vld [vmem:[%s2 + $0x190] sm:$0xff]
  %v442 = vld [vmem:[%s2 + $0x198] sm:$0xff]
  %v443 = vld [vmem:[%s2 + $0x1a0] sm:$0xff]
  %v444 = vld [vmem:[%s2 + $0x1a8] sm:$0xff]
  %v445 = vld [vmem:[%s2 + $0x1b0] sm:$0xff]
  %v446 = vld [vmem:[%s2 + $0x1b8] sm:$0xff]
  %v447 = vld [vmem:[%s2 + $0x1c0] sm:$0xff]
  %v448 = vld [vmem:[%s2 + $0x1c8] sm:$0xff]
  %v449 = vld [vmem:[%s2 + $0x1d0] sm:$0xff]
  %v450 = vld [vmem:[%s2 + $0x1d8] sm:$0xff]
  %v451 = vld [vmem:[%s2 + $0x1e0] sm:$0xff]
  %v452 = vld [vmem:[%s2 + $0x1e8] sm:$0xff]
  %v453 = vld [vmem:[%s2 + $0x1f0] sm:$0xff]
  %v454 = vld [vmem:[%s2 + $0x1f8] sm:$0xff]
  %455 = vmatprep.subr.mxu0 %v392
  %456 = vmatpush1.msra.mxu0 %v391
  %457 = vmatprep.subr.mxu0 %v396
  %458 = vmatpush1.msra.mxu0 %v395
  %459 = vmatprep.subr.mxu0 %v400
  %460 = vmatpush1.msra.mxu0 %v399
  %461 = vmatprep.subr.mxu0 %v404
  %462 = vmatpush1.msra.mxu0 %v403
  %463 = vmatprep.subr.mxu0 %v408
  %464 = vmatpush1.msra.mxu0 %v407
  %465 = vmatprep.subr.mxu0 %v412
  %466 = vmatpush1.msra.mxu0 %v411
  %467 = vmatprep.subr.mxu0 %v416
  %468 = vmatpush1.msra.mxu0 %v415
  %469 = vmatprep.subr.mxu0 %v420
  %470 = vmatpush1.msra.mxu0 %v419
  %471 = vmatprep.subr.mxu0 %v424
  %472 = vmatpush1.msra.mxu0 %v423
  %473 = vmatprep.subr.mxu0 %v428
  %474 = vmatpush1.msra.mxu0 %v427
  %475 = vmatprep.subr.mxu0 %v432
  %476 = vmatpush1.msra.mxu0 %v431
  %477 = vmatprep.subr.mxu0 %v436
  %478 = vmatpush1.msra.mxu0 %v435
  %479 = vmatprep.subr.mxu0 %v440
  %480 = vmatpush1.msra.mxu0 %v439
  %481 = vmatprep.subr.mxu0 %v444
  %482 = vmatpush1.msra.mxu0 %v443
  %483 = vmatprep.subr.mxu0 %v448
  %484 = vmatpush1.msra.mxu0 %v447
  %485 = vmatprep.subr.mxu0 %v452
  %486 = vmatpush1.msra.mxu0 %v451
  %487 = vmatprep.subr.mxu0 0.0
  %488 = vmatpush1.msra.mxu0 0.0
  %489 = vmatprep.subr.mxu0 0.0
  %490 = vmatpush1.msra.mxu0 0.0
  %491 = vmatprep.subr.mxu0 0.0
  %492 = vmatpush1.msra.mxu0 0.0
  %493 = vmatprep.subr.mxu0 0.0
  %494 = vmatpush1.msra.mxu0 0.0
  %495 = vmatprep.subr.mxu0 0.0
  %496 = vmatpush1.msra.mxu0 0.0
  %497 = vmatprep.subr.mxu0 0.0
  %498 = vmatpush1.msra.mxu0 0.0
  %499 = vmatprep.subr.mxu0 0.0
  %500 = vmatpush1.msra.mxu0 0.0
  %501 = vmatprep.subr.mxu0 0.0
  %502 = vmatpush1.msra.mxu0 0.0
  %503 = vmatprep.subr.mxu0 0.0
  %504 = vmatpush1.msra.mxu0 0.0
  %505 = vmatprep.subr.mxu0 0.0
  %506 = vmatpush1.msra.mxu0 0.0
  %507 = vmatprep.subr.mxu0 0.0
  %508 = vmatpush1.msra.mxu0 0.0
  %509 = vmatprep.subr.mxu0 0.0
  %510 = vmatpush1.msra.mxu0 0.0
  %511 = vmatprep.subr.mxu0 0.0
  %512 = vmatpush1.msra.mxu0 0.0
  %513 = vmatprep.subr.mxu0 0.0
  %514 = vmatpush1.msra.mxu0 0.0
  %515 = vmatprep.subr.mxu0 0.0
  %516 = vmatpush1.msra.mxu0 0.0
  %517 = vmatprep.subr.mxu0 0.0
  %518 = vmatpush1.msra.mxu0 0.0
  %519 = vmatprep.mubr.f32.mxu0 0.0
  %520 = vmatmul.mubr.f32.gmra.mrb[0].mxu0 0.0
  %v521 = vpop.f32.mrb[0].mxu0
  %v522 = vadd.f32 0.0, %v521
  %v523 = vpop.f32.mrb[0].mxu0
  %v524 = vadd.f32 0.0, %v523
  %525 = vdwg.mxu0
  %526 = vmatprep.subr.mxu0 %v394
  %527 = vmatpush1.msra.mxu0 %v393
  %528 = vmatprep.subr.mxu0 %v398
  %529 = vmatpush1.msra.mxu0 %v397
  %530 = vmatprep.subr.mxu0 %v402
  %531 = vmatpush1.msra.mxu0 %v401
  %532 = vmatprep.subr.mxu0 %v406
  %533 = vmatpush1.msra.mxu0 %v405
  %534 = vmatprep.subr.mxu0 %v410
  %535 = vmatpush1.msra.mxu0 %v409
  %536 = vmatprep.subr.mxu0 %v414
  %537 = vmatpush1.msra.mxu0 %v413
  %538 = vmatprep.subr.mxu0 %v418
  %539 = vmatpush1.msra.mxu0 %v417
  %540 = vmatprep.subr.mxu0 %v422
  %541 = vmatpush1.msra.mxu0 %v421
  %542 = vmatprep.subr.mxu0 %v426
  %543 = vmatpush1.msra.mxu0 %v425
  %544 = vmatprep.subr.mxu0 %v430
  %545 = vmatpush1.msra.mxu0 %v429
  %546 = vmatprep.subr.mxu0 %v434
  %547 = vmatpush1.msra.mxu0 %v433
  %548 = vmatprep.subr.mxu0 %v438
  %549 = vmatpush1.msra.mxu0 %v437
  %550 = vmatprep.subr.mxu0 %v442
  %551 = vmatpush1.msra.mxu0 %v441
  %552 = vmatprep.subr.mxu0 %v446
  %553 = vmatpush1.msra.mxu0 %v445
  %554 = vmatprep.subr.mxu0 %v450
  %555 = vmatpush1.msra.mxu0 %v449
  %556 = vmatprep.subr.mxu0 %v454
  %557 = vmatpush1.msra.mxu0 %v453
  %558 = vmatprep.subr.mxu0 0.0
  %559 = vmatpush1.msra.mxu0 0.0
  %560 = vmatprep.subr.mxu0 0.0
  %561 = vmatpush1.msra.mxu0 0.0
  %562 = vmatprep.subr.mxu0 0.0
  %563 = vmatpush1.msra.mxu0 0.0
  %564 = vmatprep.subr.mxu0 0.0
  %565 = vmatpush1.msra.mxu0 0.0
  %566 = vmatprep.subr.mxu0 0.0
  %567 = vmatpush1.msra.mxu0 0.0
  %568 = vmatprep.subr.mxu0 0.0
  %569 = vmatpush1.msra.mxu0 0.0
  %570 = vmatprep.subr.mxu0 0.0
  %571 = vmatpush1.msra.mxu0 0.0
  %572 = vmatprep.subr.mxu0 0.0
  %573 = vmatpush1.msra.mxu0 0.0
  %574 = vmatprep.subr.mxu0 0.0
  %575 = vmatpush1.msra.mxu0 0.0
  %576 = vmatprep.subr.mxu0 0.0
  %577 = vmatpush1.msra.mxu0 0.0
  %578 = vmatprep.subr.mxu0 0.0
  %579 = vmatpush1.msra.mxu0 0.0
  %580 = vmatprep.subr.mxu0 0.0
  %581 = vmatpush1.msra.mxu0 0.0
  %582 = vmatprep.subr.mxu0 0.0
  %583 = vmatpush1.msra.mxu0 0.0
  %584 = vmatprep.subr.mxu0 0.0
  %585 = vmatpush1.msra.mxu0 0.0
  %586 = vmatprep.subr.mxu0 0.0
  %587 = vmatpush1.msra.mxu0 0.0
  %588 = vmatprep.subr.mxu0 0.0
  %589 = vmatpush1.msra.mxu0 0.0
  %590 = vmatprep.mubr.f32.mxu0 0.0
  %591 = vmatmul.mubr.f32.gmra.mrb[0].mxu0 0.0
  %v592 = vpop.f32.mrb[0].mxu0
  %v593 = vadd.f32 0.0, %v592
  %v594 = vpop.f32.mrb[0].mxu0
  %v595 = vadd.f32 0.0, %v594
  %596 = vdwg.mxu0
  %v597 = vadd.f32 %v387, %v522
  %v598 = vadd.f32 %v388, %v524
  %v599 = vadd.f32 %v389, %v593
  %v600 = vadd.f32 %v390, %v595
  %v601 = vxor.u32 %v597, 2147483648
  %v602 = vmul.f32 %v601, 1.442695
  %v603 = vpow.pop %v602
  %v604 = vadd.f32 %v603, 1.0
  %v605 = vrcp.pop %v604
  %v606 = vmul.f32 1.0, %v605
  %v607 = vxor.u32 %v598, 2147483648
  %v608 = vmul.f32 %v607, 1.442695
  %v609 = vpow.pop %v608
  %v610 = vadd.f32 %v609, 1.0
  %v611 = vrcp.pop %v610
  %v612 = vmul.f32 1.0, %v611
  %v613 = vtanh.pop %v599
  %v614 = vxor.u32 %v600, 2147483648
  %v615 = vmul.f32 %v614, 1.442695
  %v616 = vpow.pop %v615
  %v617 = vadd.f32 %v616, 1.0
  %v618 = vrcp.pop %v617
  %v619 = vmul.f32 1.0, %v618
  %v620 = vmul.f32 %v612, 0.0
  %v621 = vmul.f32 %v606, %v613
  %v622 = vadd.f32 %v620, %v621
  %v623 = vtanh.pop %v622
  %v624 = vmul.f32 %v619, %v623
  %v625 = vld [vmem:[#allocation2 + $0x20] sm:$0xff]
  %v626 = vld [vmem:[#allocation2 + $0x28] sm:$0xff]
  %v627 = vld [vmem:[#allocation2 + $0x30] sm:$0xff]
  %v628 = vld [vmem:[#allocation2 + $0x38] sm:$0xff]
  %629 = vmatprep.subr.mxu0 %v392
  %630 = vmatpush1.msra.mxu0 %v391
  %631 = vmatprep.subr.mxu0 %v396
  %632 = vmatpush1.msra.mxu0 %v395
  %633 = vmatprep.subr.mxu0 %v400
  %634 = vmatpush1.msra.mxu0 %v399
  %635 = vmatprep.subr.mxu0 %v404
  %636 = vmatpush1.msra.mxu0 %v403
  %637 = vmatprep.subr.mxu0 %v408
  %638 = vmatpush1.msra.mxu0 %v407
  %639 = vmatprep.subr.mxu0 %v412
  %640 = vmatpush1.msra.mxu0 %v411
  %641 = vmatprep.subr.mxu0 %v416
  %642 = vmatpush1.msra.mxu0 %v415
  %643 = vmatprep.subr.mxu0 %v420
  %644 = vmatpush1.msra.mxu0 %v419
  %645 = vmatprep.subr.mxu0 %v424
  %646 = vmatpush1.msra.mxu0 %v423
  %647 = vmatprep.subr.mxu0 %v428
  %648 = vmatpush1.msra.mxu0 %v427
  %649 = vmatprep.subr.mxu0 %v432
  %650 = vmatpush1.msra.mxu0 %v431
  %651 = vmatprep.subr.mxu0 %v436
  %652 = vmatpush1.msra.mxu0 %v435
  %653 = vmatprep.subr.mxu0 %v440
  %654 = vmatpush1.msra.mxu0 %v439
  %655 = vmatprep.subr.mxu0 %v444
  %656 = vmatpush1.msra.mxu0 %v443
  %657 = vmatprep.subr.mxu0 %v448
  %658 = vmatpush1.msra.mxu0 %v447
  %659 = vmatprep.subr.mxu0 %v452
  %660 = vmatpush1.msra.mxu0 %v451
  %661 = vmatprep.subr.mxu0 0.0
  %662 = vmatpush1.msra.mxu0 0.0
  %663 = vmatprep.subr.mxu0 0.0
  %664 = vmatpush1.msra.mxu0 0.0
  %665 = vmatprep.subr.mxu0 0.0
  %666 = vmatpush1.msra.mxu0 0.0
  %667 = vmatprep.subr.mxu0 0.0
  %668 = vmatpush1.msra.mxu0 0.0
  %669 = vmatprep.subr.mxu0 0.0
  %670 = vmatpush1.msra.mxu0 0.0
  %671 = vmatprep.subr.mxu0 0.0
  %672 = vmatpush1.msra.mxu0 0.0
  %673 = vmatprep.subr.mxu0 0.0
  %674 = vmatpush1.msra.mxu0 0.0
  %675 = vmatprep.subr.mxu0 0.0
  %676 = vmatpush1.msra.mxu0 0.0
  %677 = vmatprep.subr.mxu0 0.0
  %678 = vmatpush1.msra.mxu0 0.0
  %679 = vmatprep.subr.mxu0 0.0
  %680 = vmatpush1.msra.mxu0 0.0
  %681 = vmatprep.subr.mxu0 0.0
  %682 = vmatpush1.msra.mxu0 0.0
  %683 = vmatprep.subr.mxu0 0.0
  %684 = vmatpush1.msra.mxu0 0.0
  %685 = vmatprep.subr.mxu0 0.0
  %686 = vmatpush1.msra.mxu0 0.0
  %687 = vmatprep.subr.mxu0 0.0
  %688 = vmatpush1.msra.mxu0 0.0
  %689 = vmatprep.subr.mxu0 0.0
  %690 = vmatpush1.msra.mxu0 0.0
  %691 = vmatprep.subr.mxu0 0.0
  %692 = vmatpush1.msra.mxu0 0.0
  %693 = vmatprep.mubr.f32.mxu0 0.0
  %694 = vmatmul.mubr.f32.gmra.mrb[0].mxu0 %v624
  %v695 = vpop.f32.mrb[0].mxu0
  %v696 = vadd.f32 0.0, %v695
  %v697 = vpop.f32.mrb[0].mxu0
  %v698 = vadd.f32 0.0, %v697
  %699 = vdwg.mxu0
  %700 = vmatprep.subr.mxu0 %v394
  %701 = vmatpush1.msra.mxu0 %v393
  %702 = vmatprep.subr.mxu0 %v398
  %703 = vmatpush1.msra.mxu0 %v397
  %704 = vmatprep.subr.mxu0 %v402
  %705 = vmatpush1.msra.mxu0 %v401
  %706 = vmatprep.subr.mxu0 %v406
  %707 = vmatpush1.msra.mxu0 %v405
  %708 = vmatprep.subr.mxu0 %v410
  %709 = vmatpush1.msra.mxu0 %v409
  %710 = vmatprep.subr.mxu0 %v414
  %711 = vmatpush1.msra.mxu0 %v413
  %712 = vmatprep.subr.mxu0 %v418
  %713 = vmatpush1.msra.mxu0 %v417
  %714 = vmatprep.subr.mxu0 %v422
  %715 = vmatpush1.msra.mxu0 %v421
  %716 = vmatprep.subr.mxu0 %v426
  %717 = vmatpush1.msra.mxu0 %v425
  %718 = vmatprep.subr.mxu0 %v430
  %719 = vmatpush1.msra.mxu0 %v429
  %720 = vmatprep.subr.mxu0 %v434
  %721 = vmatpush1.msra.mxu0 %v433
  %722 = vmatprep.subr.mxu0 %v438
  %723 = vmatpush1.msra.mxu0 %v437
  %724 = vmatprep.subr.mxu0 %v442
  %725 = vmatpush1.msra.mxu0 %v441
  %726 = vmatprep.subr.mxu0 %v446
  %727 = vmatpush1.msra.mxu0 %v445
  %728 = vmatprep.subr.mxu0 %v450
  %729 = vmatpush1.msra.mxu0 %v449
  %730 = vmatprep.subr.mxu0 %v454
  %731 = vmatpush1.msra.mxu0 %v453
  %732 = vmatprep.subr.mxu0 0.0
  %733 = vmatpush1.msra.mxu0 0.0
  %734 = vmatprep.subr.mxu0 0.0
  %735 = vmatpush1.msra.mxu0 0.0
  %736 = vmatprep.subr.mxu0 0.0
  %737 = vmatpush1.msra.mxu0 0.0
  %738 = vmatprep.subr.mxu0 0.0
  %739 = vmatpush1.msra.mxu0 0.0
  %740 = vmatprep.subr.mxu0 0.0
  %741 = vmatpush1.msra.mxu0 0.0
  %742 = vmatprep.subr.mxu0 0.0
  %743 = vmatpush1.msra.mxu0 0.0
  %744 = vmatprep.subr.mxu0 0.0
  %745 = vmatpush1.msra.mxu0 0.0
  %746 = vmatprep.subr.mxu0 0.0
  %747 = vmatpush1.msra.mxu0 0.0
  %748 = vmatprep.subr.mxu0 0.0
  %749 = vmatpush1.msra.mxu0 0.0
  %750 = vmatprep.subr.mxu0 0.0
  %751 = vmatpush1.msra.mxu0 0.0
  %752 = vmatprep.subr.mxu0 0.0
  %753 = vmatpush1.msra.mxu0 0.0
  %754 = vmatprep.subr.mxu0 0.0
  %755 = vmatpush1.msra.mxu0 0.0
  %756 = vmatprep.subr.mxu0 0.0
  %757 = vmatpush1.msra.mxu0 0.0
  %758 = vmatprep.subr.mxu0 0.0
  %759 = vmatpush1.msra.mxu0 0.0
  %760 = vmatprep.subr.mxu0 0.0
  %761 = vmatpush1.msra.mxu0 0.0
  %762 = vmatprep.subr.mxu0 0.0
  %763 = vmatpush1.msra.mxu0 0.0
  %764 = vmatprep.mubr.f32.mxu0 0.0
  %765 = vmatmul.mubr.f32.gmra.mrb[0].mxu0 %v624
  %v766 = vpop.f32.mrb[0].mxu0
  %v767 = vadd.f32 0.0, %v766
  %v768 = vpop.f32.mrb[0].mxu0
  %v769 = vadd.f32 0.0, %v768
  %770 = vdwg.mxu0
  %v771 = vadd.f32 %v625, %v696
  %v772 = vadd.f32 %v626, %v698
  %v773 = vadd.f32 %v627, %v767
  %v774 = vadd.f32 %v628, %v769
  %v775 = vxor.u32 %v771, 2147483648
  %v776 = vmul.f32 %v775, 1.442695
  %v777 = vpow.pop %v776
  %v778 = vadd.f32 %v777, 1.0
  %v779 = vrcp.pop %v778
  %v780 = vmul.f32 1.0, %v779
  %v781 = vxor.u32 %v772, 2147483648
  %v782 = vmul.f32 %v781, 1.442695
  %v783 = vpow.pop %v782
  %v784 = vadd.f32 %v783, 1.0
  %v785 = vrcp.pop %v784
  %v786 = vmul.f32 1.0, %v785
  %v787 = vtanh.pop %v773
  %v788 = vxor.u32 %v774, 2147483648
  %v789 = vmul.f32 %v788, 1.442695
  %v790 = vpow.pop %v789
  %v791 = vadd.f32 %v790, 1.0
  %v792 = vrcp.pop %v791
  %v793 = vmul.f32 1.0, %v792
  %v794 = vmul.f32 %v786, %v622
  %v795 = vmul.f32 %v780, %v787
  %v796 = vadd.f32 %v794, %v795
  %v797 = vtanh.pop %v796
  %v798 = vmul.f32 %v793, %v797
  %v799 = vld [vmem:[%s4] sm:$0xff]
  %v800 = vld [vmem:[%s4 + $0x8] sm:$0xff]
  %v801 = vld [vmem:[%s4 + $0x10] sm:$0xff]
  %v802 = vld [vmem:[%s4 + $0x18] sm:$0xff]
  %v803 = vld [vmem:[%s4 + $0x20] sm:$0xff]
  %v804 = vld [vmem:[%s4 + $0x28] sm:$0xff]
  %v805 = vld [vmem:[%s4 + $0x30] sm:$0xff]
  %v806 = vld [vmem:[%s4 + $0x38] sm:$0xff]
  %v807 = vld [vmem:[%s4 + $0x40] sm:$0xff]
  %v808 = vld [vmem:[%s4 + $0x48] sm:$0xff]
  %v809 = vld [vmem:[%s4 + $0x50] sm:$0xff]
  %v810 = vld [vmem:[%s4 + $0x58] sm:$0xff]
  %v811 = vld [vmem:[%s4 + $0x60] sm:$0xff]
  %v812 = vld [vmem:[%s4 + $0x68] sm:$0xff]
  %v813 = vld [vmem:[%s4 + $0x70] sm:$0xff]
  %v814 = vld [vmem:[%s4 + $0x78] sm:$0xff]
  %v815 = vld [vmem:[%s4 + $0x80] sm:$0xff]
  %v816 = vld [vmem:[%s4 + $0x88] sm:$0xff]
  %v817 = vld [vmem:[%s4 + $0x90] sm:$0xff]
  %v818 = vld [vmem:[%s4 + $0x98] sm:$0xff]
  %v819 = vld [vmem:[%s4 + $0xa0] sm:$0xff]
  %v820 = vld [vmem:[%s4 + $0xa8] sm:$0xff]
  %v821 = vld [vmem:[%s4 + $0xb0] sm:$0xff]
  %v822 = vld [vmem:[%s4 + $0xb8] sm:$0xff]
  %v823 = vld [vmem:[%s4 + $0xc0] sm:$0xff]
  %v824 = vld [vmem:[%s4 + $0xc8] sm:$0xff]
  %v825 = vld [vmem:[%s4 + $0xd0] sm:$0xff]
  %v826 = vld [vmem:[%s4 + $0xd8] sm:$0xff]
  %v827 = vld [vmem:[%s4 + $0xe0] sm:$0xff]
  %v828 = vld [vmem:[%s4 + $0xe8] sm:$0xff]
  %v829 = vld [vmem:[%s4 + $0xf0] sm:$0xff]
  %v830 = vld [vmem:[%s4 + $0xf8] sm:$0xff]
  %v831 = vld [vmem:[%s4 + $0x100] sm:$0xff]
  %v832 = vld [vmem:[%s4 + $0x108] sm:$0xff]
  %v833 = vld [vmem:[%s4 + $0x110] sm:$0xff]
  %v834 = vld [vmem:[%s4 + $0x118] sm:$0xff]
  %v835 = vld [vmem:[%s4 + $0x120] sm:$0xff]
  %v836 = vld [vmem:[%s4 + $0x128] sm:$0xff]
  %v837 = vld [vmem:[%s4 + $0x130] sm:$0xff]
  %v838 = vld [vmem:[%s4 + $0x138] sm:$0xff]
  %v839 = vld [vmem:[%s4 + $0x140] sm:$0xff]
  %v840 = vld [vmem:[%s4 + $0x148] sm:$0xff]
  %v841 = vld [vmem:[%s4 + $0x150] sm:$0xff]
  %v842 = vld [vmem:[%s4 + $0x158] sm:$0xff]
  %v843 = vld [vmem:[%s4 + $0x160] sm:$0xff]
  %v844 = vld [vmem:[%s4 + $0x168] sm:$0xff]
  %v845 = vld [vmem:[%s4 + $0x170] sm:$0xff]
  %v846 = vld [vmem:[%s4 + $0x178] sm:$0xff]
  %v847 = vld [vmem:[%s4 + $0x180] sm:$0xff]
  %v848 = vld [vmem:[%s4 + $0x188] sm:$0xff]
  %v849 = vld [vmem:[%s4 + $0x190] sm:$0xff]
  %v850 = vld [vmem:[%s4 + $0x198] sm:$0xff]
  %v851 = vld [vmem:[%s4 + $0x1a0] sm:$0xff]
  %v852 = vld [vmem:[%s4 + $0x1a8] sm:$0xff]
  %v853 = vld [vmem:[%s4 + $0x1b0] sm:$0xff]
  %v854 = vld [vmem:[%s4 + $0x1b8] sm:$0xff]
  %v855 = vld [vmem:[%s4 + $0x1c0] sm:$0xff]
  %v856 = vld [vmem:[%s4 + $0x1c8] sm:$0xff]
  %v857 = vld [vmem:[%s4 + $0x1d0] sm:$0xff]
  %v858 = vld [vmem:[%s4 + $0x1d8] sm:$0xff]
  %v859 = vld [vmem:[%s4 + $0x1e0] sm:$0xff]
  %v860 = vld [vmem:[%s4 + $0x1e8] sm:$0xff]
  %v861 = vld [vmem:[%s4 + $0x1f0] sm:$0xff]
  %v862 = vld [vmem:[%s4 + $0x1f8] sm:$0xff]
  %v863 = vld [vmem:[%s4 + $0x200] sm:$0xff]
  %v864 = vld [vmem:[%s4 + $0x208] sm:$0xff]
  %v865 = vld [vmem:[%s4 + $0x210] sm:$0xff]
  %v866 = vld [vmem:[%s4 + $0x218] sm:$0xff]
  %v867 = vld [vmem:[%s4 + $0x220] sm:$0xff]
  %v868 = vld [vmem:[%s4 + $0x228] sm:$0xff]
  %v869 = vld [vmem:[%s4 + $0x230] sm:$0xff]
  %v870 = vld [vmem:[%s4 + $0x238] sm:$0xff]
  %v871 = vld [vmem:[%s4 + $0x240] sm:$0xff]
  %v872 = vld [vmem:[%s4 + $0x248] sm:$0xff]
  %v873 = vld [vmem:[%s4 + $0x250] sm:$0xff]
  %v874 = vld [vmem:[%s4 + $0x258] sm:$0xff]
  %v875 = vld [vmem:[%s4 + $0x260] sm:$0xff]
  %v876 = vld [vmem:[%s4 + $0x268] sm:$0xff]
  %v877 = vld [vmem:[%s4 + $0x270] sm:$0xff]
  %v878 = vld [vmem:[%s4 + $0x278] sm:$0xff]
  %v879 = vld [vmem:[%s4 + $0x280] sm:$0xff]
  %v880 = vld [vmem:[%s4 + $0x288] sm:$0xff]
  %v881 = vld [vmem:[%s4 + $0x290] sm:$0xff]
  %v882 = vld [vmem:[%s4 + $0x298] sm:$0xff]
  %v883 = vld [vmem:[%s4 + $0x2a0] sm:$0xff]
  %v884 = vld [vmem:[%s4 + $0x2a8] sm:$0xff]
  %v885 = vld [vmem:[%s4 + $0x2b0] sm:$0xff]
  %v886 = vld [vmem:[%s4 + $0x2b8] sm:$0xff]
  %v887 = vld [vmem:[%s4 + $0x2c0] sm:$0xff]
  %v888 = vld [vmem:[%s4 + $0x2c8] sm:$0xff]
  %v889 = vld [vmem:[%s4 + $0x2d0] sm:$0xff]
  %v890 = vld [vmem:[%s4 + $0x2d8] sm:$0xff]
  %v891 = vld [vmem:[%s4 + $0x2e0] sm:$0xff]
  %v892 = vld [vmem:[%s4 + $0x2e8] sm:$0xff]
  %v893 = vld [vmem:[%s4 + $0x2f0] sm:$0xff]
  %v894 = vld [vmem:[%s4 + $0x2f8] sm:$0xff]
  %v895 = vld [vmem:[%s4 + $0x300] sm:$0xff]
  %v896 = vld [vmem:[%s4 + $0x308] sm:$0xff]
  %v897 = vld [vmem:[%s4 + $0x310] sm:$0xff]
  %v898 = vld [vmem:[%s4 + $0x318] sm:$0xff]
  %v899 = vld [vmem:[%s4 + $0x320] sm:$0xff]
  %v900 = vld [vmem:[%s4 + $0x328] sm:$0xff]
  %v901 = vld [vmem:[%s4 + $0x330] sm:$0xff]
  %v902 = vld [vmem:[%s4 + $0x338] sm:$0xff]
  %v903 = vld [vmem:[%s4 + $0x340] sm:$0xff]
  %v904 = vld [vmem:[%s4 + $0x348] sm:$0xff]
  %v905 = vld [vmem:[%s4 + $0x350] sm:$0xff]
  %v906 = vld [vmem:[%s4 + $0x358] sm:$0xff]
  %v907 = vld [vmem:[%s4 + $0x360] sm:$0xff]
  %v908 = vld [vmem:[%s4 + $0x368] sm:$0xff]
  %v909 = vld [vmem:[%s4 + $0x370] sm:$0xff]
  %v910 = vld [vmem:[%s4 + $0x378] sm:$0xff]
  %v911 = vld [vmem:[%s4 + $0x380] sm:$0xff]
  %v912 = vld [vmem:[%s4 + $0x388] sm:$0xff]
  %v913 = vld [vmem:[%s4 + $0x390] sm:$0xff]
  %v914 = vld [vmem:[%s4 + $0x398] sm:$0xff]
  %v915 = vld [vmem:[%s4 + $0x3a0] sm:$0xff]
  %v916 = vld [vmem:[%s4 + $0x3a8] sm:$0xff]
  %v917 = vld [vmem:[%s4 + $0x3b0] sm:$0xff]
  %v918 = vld [vmem:[%s4 + $0x3b8] sm:$0xff]
  %v919 = vld [vmem:[%s4 + $0x3c0] sm:$0xff]
  %v920 = vld [vmem:[%s4 + $0x3c8] sm:$0xff]
  %v921 = vld [vmem:[%s4 + $0x3d0] sm:$0xff]
  %v922 = vld [vmem:[%s4 + $0x3d8] sm:$0xff]
  %v923 = vld [vmem:[%s4 + $0x3e0] sm:$0xff]
  %v924 = vld [vmem:[%s4 + $0x3e8] sm:$0xff]
  %v925 = vld [vmem:[%s4 + $0x3f0] sm:$0xff]
  %v926 = vld [vmem:[%s4 + $0x3f8] sm:$0xff]
  %v927 = vld [vmem:[%s5] sm:$0xf]
  %v929 = vlaneseq
  %v930 = vshrl.u32 %v929, 7
  %v931 = vsub.s32 0, %v930
  %v932 = vrot.slane %v927, %v931
  %v933 = vlaneseq
  %v934 = vshrl.u32 %v933, 7
  %v935 = vsub.s32 1, %v934
  %v936 = vrot.slane %v927, %v935
  %v937 = vlaneseq
  %v938 = vshrl.u32 %v937, 7
  %v939 = vsub.s32 2, %v938
  %v940 = vrot.slane %v927, %v939
  %v941 = vlaneseq
  %v942 = vshrl.u32 %v941, 7
  %v943 = vsub.s32 3, %v942
  %v944 = vrot.slane %v927, %v943
  %949 = vmatprep.subr.mxu0 %v800
  %950 = vmatpush1.msra.mxu0 %v799
  %951 = vmatprep.subr.mxu0 %v804
  %952 = vmatpush1.msra.mxu0 %v803
  %953 = vmatprep.subr.mxu0 %v808
  %954 = vmatpush1.msra.mxu0 %v807
  %955 = vmatprep.subr.mxu0 %v812
  %956 = vmatpush1.msra.mxu0 %v811
  %957 = vmatprep.subr.mxu0 %v816
  %958 = vmatpush1.msra.mxu0 %v815
  %959 = vmatprep.subr.mxu0 %v820
  %960 = vmatpush1.msra.mxu0 %v819
  %961 = vmatprep.subr.mxu0 %v824
  %962 = vmatpush1.msra.mxu0 %v823
  %963 = vmatprep.subr.mxu0 %v828
  %964 = vmatpush1.msra.mxu0 %v827
  %965 = vmatprep.subr.mxu0 %v832
  %966 = vmatpush1.msra.mxu0 %v831
  %967 = vmatprep.subr.mxu0 %v836
  %968 = vmatpush1.msra.mxu0 %v835
  %969 = vmatprep.subr.mxu0 %v840
  %970 = vmatpush1.msra.mxu0 %v839
  %971 = vmatprep.subr.mxu0 %v844
  %972 = vmatpush1.msra.mxu0 %v843
  %973 = vmatprep.subr.mxu0 %v848
  %974 = vmatpush1.msra.mxu0 %v847
  %975 = vmatprep.subr.mxu0 %v852
  %976 = vmatpush1.msra.mxu0 %v851
  %977 = vmatprep.subr.mxu0 %v856
  %978 = vmatpush1.msra.mxu0 %v855
  %979 = vmatprep.subr.mxu0 %v860
  %980 = vmatpush1.msra.mxu0 %v859
  %981 = vmatprep.subr.mxu0 %v864
  %982 = vmatpush1.msra.mxu0 %v863
  %983 = vmatprep.subr.mxu0 %v868
  %984 = vmatpush1.msra.mxu0 %v867
  %985 = vmatprep.subr.mxu0 %v872
  %986 = vmatpush1.msra.mxu0 %v871
  %987 = vmatprep.subr.mxu0 %v876
  %988 = vmatpush1.msra.mxu0 %v875
  %989 = vmatprep.subr.mxu0 %v880
  %990 = vmatpush1.msra.mxu0 %v879
  %991 = vmatprep.subr.mxu0 %v884
  %992 = vmatpush1.msra.mxu0 %v883
  %993 = vmatprep.subr.mxu0 %v888
  %994 = vmatpush1.msra.mxu0 %v887
  %995 = vmatprep.subr.mxu0 %v892
  %996 = vmatpush1.msra.mxu0 %v891
  %997 = vmatprep.subr.mxu0 %v896
  %998 = vmatpush1.msra.mxu0 %v895
  %999 = vmatprep.subr.mxu0 %v900
  %1000 = vmatpush1.msra.mxu0 %v899
  %1001 = vmatprep.subr.mxu0 %v904
  %1002 = vmatpush1.msra.mxu0 %v903
  %1003 = vmatprep.subr.mxu0 %v908
  %1004 = vmatpush1.msra.mxu0 %v907
  %1005 = vmatprep.subr.mxu0 %v912
  %1006 = vmatpush1.msra.mxu0 %v911
  %1007 = vmatprep.subr.mxu0 %v916
  %1008 = vmatpush1.msra.mxu0 %v915
  %1009 = vmatprep.subr.mxu0 %v920
  %1010 = vmatpush1.msra.mxu0 %v919
  %1011 = vmatprep.subr.mxu0 %v924
  %1012 = vmatpush1.msra.mxu0 %v923
  %1013 = vmatprep.mubr.f32.mxu0 0.0
  %1014 = vmatmul.mubr.f32.gmra.mrb[0].mxu0 %v624
  %v1015 = vpop.f32.mrb[0].mxu0
  %v1016 = vadd.f32 %v932, %v1015
  %v1017 = vpop.f32.mrb[0].mxu0
  %v1018 = vadd.f32 %v936, %v1017
  %1019 = vdwg.mxu0
  %1020 = vmatprep.subr.mxu0 %v802
  %1021 = vmatpush1.msra.mxu0 %v801
  %1022 = vmatprep.subr.mxu0 %v806
  %1023 = vmatpush1.msra.mxu0 %v805
  %1024 = vmatprep.subr.mxu0 %v810
  %1025 = vmatpush1.msra.mxu0 %v809
  %1026 = vmatprep.subr.mxu0 %v814
  %1027 = vmatpush1.msra.mxu0 %v813
  %1028 = vmatprep.subr.mxu0 %v818
  %1029 = vmatpush1.msra.mxu0 %v817
  %1030 = vmatprep.subr.mxu0 %v822
  %1031 = vmatpush1.msra.mxu0 %v821
  %1032 = vmatprep.subr.mxu0 %v826
  %1033 = vmatpush1.msra.mxu0 %v825
  %1034 = vmatprep.subr.mxu0 %v830
  %1035 = vmatpush1.msra.mxu0 %v829
  %1036 = vmatprep.subr.mxu0 %v834
  %1037 = vmatpush1.msra.mxu0 %v833
  %1038 = vmatprep.subr.mxu0 %v838
  %1039 = vmatpush1.msra.mxu0 %v837
  %1040 = vmatprep.subr.mxu0 %v842
  %1041 = vmatpush1.msra.mxu0 %v841
  %1042 = vmatprep.subr.mxu0 %v846
  %1043 = vmatpush1.msra.mxu0 %v845
  %1044 = vmatprep.subr.mxu0 %v850
  %1045 = vmatpush1.msra.mxu0 %v849
  %1046 = vmatprep.subr.mxu0 %v854
  %1047 = vmatpush1.msra.mxu0 %v853
  %1048 = vmatprep.subr.mxu0 %v858
  %1049 = vmatpush1.msra.mxu0 %v857
  %1050 = vmatprep.subr.mxu0 %v862
  %1051 = vmatpush1.msra.mxu0 %v861
  %1052 = vmatprep.subr.mxu0 %v866
  %1053 = vmatpush1.msra.mxu0 %v865
  %1054 = vmatprep.subr.mxu0 %v870
  %1055 = vmatpush1.msra.mxu0 %v869
  %1056 = vmatprep.subr.mxu0 %v874
  %1057 = vmatpush1.msra.mxu0 %v873
  %1058 = vmatprep.subr.mxu0 %v878
  %1059 = vmatpush1.msra.mxu0 %v877
  %1060 = vmatprep.subr.mxu0 %v882
  %1061 = vmatpush1.msra.mxu0 %v881
  %1062 = vmatprep.subr.mxu0 %v886
  %1063 = vmatpush1.msra.mxu0 %v885
  %1064 = vmatprep.subr.mxu0 %v890
  %1065 = vmatpush1.msra.mxu0 %v889
  %1066 = vmatprep.subr.mxu0 %v894
  %1067 = vmatpush1.msra.mxu0 %v893
  %1068 = vmatprep.subr.mxu0 %v898
  %1069 = vmatpush1.msra.mxu0 %v897
  %1070 = vmatprep.subr.mxu0 %v902
  %1071 = vmatpush1.msra.mxu0 %v901
  %1072 = vmatprep.subr.mxu0 %v906
  %1073 = vmatpush1.msra.mxu0 %v905
  %1074 = vmatprep.subr.mxu0 %v910
  %1075 = vmatpush1.msra.mxu0 %v909
  %1076 = vmatprep.subr.mxu0 %v914
  %1077 = vmatpush1.msra.mxu0 %v913
  %1078 = vmatprep.subr.mxu0 %v918
  %1079 = vmatpush1.msra.mxu0 %v917
  %1080 = vmatprep.subr.mxu0 %v922
  %1081 = vmatpush1.msra.mxu0 %v921
  %1082 = vmatprep.subr.mxu0 %v926
  %1083 = vmatpush1.msra.mxu0 %v925
  %1084 = vmatprep.mubr.f32.mxu0 0.0
  %1085 = vmatmul.mubr.f32.gmra.mrb[0].mxu0 %v624
  %v1086 = vpop.f32.mrb[0].mxu0
  %v1087 = vadd.f32 %v940, %v1086
  %v1088 = vpop.f32.mrb[0].mxu0
  %v1089 = vadd.f32 %v944, %v1088
  %1090 = vdwg.mxu0
  %v1091 = vxor.u32 %v1016, 2147483648
  %v1092 = vmul.f32 %v1091, 1.442695
  %v1093 = vpow.pop %v1092
  %v1094 = vadd.f32 %v1093, 1.0
  %v1095 = vrcp.pop %v1094
  %v1096 = vmul.f32 1.0, %v1095
  %v1097 = vxor.u32 %v1018, 2147483648
  %v1098 = vmul.f32 %v1097, 1.442695
  %v1099 = vpow.pop %v1098
  %v1100 = vadd.f32 %v1099, 1.0
  %v1101 = vrcp.pop %v1100
  %v1102 = vmul.f32 1.0, %v1101
  %v1103 = vtanh.pop %v1087
  %v1104 = vxor.u32 %v1089, 2147483648
  %v1105 = vmul.f32 %v1104, 1.442695
  %v1106 = vpow.pop %v1105
  %v1107 = vadd.f32 %v1106, 1.0
  %v1108 = vrcp.pop %v1107
  %v1109 = vmul.f32 1.0, %v1108
  %v1110 = vmul.f32 %v1102, 0.0
  %v1111 = vmul.f32 %v1096, %v1103
  %v1112 = vadd.f32 %v1110, %v1111
  %v1113 = vtanh.pop %v1112
  %v1114 = vmul.f32 %v1109, %v1113
  %v1115 = vld [vmem:[#allocation2 + $0x40] sm:$0xff]
  %v1116 = vld [vmem:[#allocation2 + $0x48] sm:$0xff]
  %v1117 = vld [vmem:[#allocation2 + $0x50] sm:$0xff]
  %v1118 = vld [vmem:[#allocation2 + $0x58] sm:$0xff]
  %1119 = vmatprep.subr.mxu0 %v392
  %1120 = vmatpush1.msra.mxu0 %v391
  %1121 = vmatprep.subr.mxu0 %v396
  %1122 = vmatpush1.msra.mxu0 %v395
  %1123 = vmatprep.subr.mxu0 %v400
  %1124 = vmatpush1.msra.mxu0 %v399
  %1125 = vmatprep.subr.mxu0 %v404
  %1126 = vmatpush1.msra.mxu0 %v403
  %1127 = vmatprep.subr.mxu0 %v408
  %1128 = vmatpush1.msra.mxu0 %v407
  %1129 = vmatprep.subr.mxu0 %v412
  %1130 = vmatpush1.msra.mxu0 %v411
  %1131 = vmatprep.subr.mxu0 %v416
  %1132 = vmatpush1.msra.mxu0 %v415
  %1133 = vmatprep.subr.mxu0 %v420
  %1134 = vmatpush1.msra.mxu0 %v419
  %1135 = vmatprep.subr.mxu0 %v424
  %1136 = vmatpush1.msra.mxu0 %v423
  %1137 = vmatprep.subr.mxu0 %v428
  %1138 = vmatpush1.msra.mxu0 %v427
  %1139 = vmatprep.subr.mxu0 %v432
  %1140 = vmatpush1.msra.mxu0 %v431
  %1141 = vmatprep.subr.mxu0 %v436
  %1142 = vmatpush1.msra.mxu0 %v435
  %1143 = vmatprep.subr.mxu0 %v440
  %1144 = vmatpush1.msra.mxu0 %v439
  %1145 = vmatprep.subr.mxu0 %v444
  %1146 = vmatpush1.msra.mxu0 %v443
  %1147 = vmatprep.subr.mxu0 %v448
  %1148 = vmatpush1.msra.mxu0 %v447
  %1149 = vmatprep.subr.mxu0 %v452
  %1150 = vmatpush1.msra.mxu0 %v451
  %1151 = vmatprep.subr.mxu0 0.0
  %1152 = vmatpush1.msra.mxu0 0.0
  %1153 = vmatprep.subr.mxu0 0.0
  %1154 = vmatpush1.msra.mxu0 0.0
  %1155 = vmatprep.subr.mxu0 0.0
  %1156 = vmatpush1.msra.mxu0 0.0
  %1157 = vmatprep.subr.mxu0 0.0
  %1158 = vmatpush1.msra.mxu0 0.0
  %1159 = vmatprep.subr.mxu0 0.0
  %1160 = vmatpush1.msra.mxu0 0.0
  %1161 = vmatprep.subr.mxu0 0.0
  %1162 = vmatpush1.msra.mxu0 0.0
  %1163 = vmatprep.subr.mxu0 0.0
  %1164 = vmatpush1.msra.mxu0 0.0
  %1165 = vmatprep.subr.mxu0 0.0
  %1166 = vmatpush1.msra.mxu0 0.0
  %1167 = vmatprep.subr.mxu0 0.0
  %1168 = vmatpush1.msra.mxu0 0.0
  %1169 = vmatprep.subr.mxu0 0.0
  %1170 = vmatpush1.msra.mxu0 0.0
  %1171 = vmatprep.subr.mxu0 0.0
  %1172 = vmatpush1.msra.mxu0 0.0
  %1173 = vmatprep.subr.mxu0 0.0
  %1174 = vmatpush1.msra.mxu0 0.0
  %1175 = vmatprep.subr.mxu0 0.0
  %1176 = vmatpush1.msra.mxu0 0.0
  %1177 = vmatprep.subr.mxu0 0.0
  %1178 = vmatpush1.msra.mxu0 0.0
  %1179 = vmatprep.subr.mxu0 0.0
  %1180 = vmatpush1.msra.mxu0 0.0
  %1181 = vmatprep.subr.mxu0 0.0
  %1182 = vmatpush1.msra.mxu0 0.0
  %1183 = vmatprep.mubr.f32.mxu0 0.0
  %1184 = vmatmul.mubr.f32.gmra.mrb[0].mxu0 %v798
  %v1185 = vpop.f32.mrb[0].mxu0
  %v1186 = vadd.f32 0.0, %v1185
  %v1187 = vpop.f32.mrb[0].mxu0
  %v1188 = vadd.f32 0.0, %v1187
  %1189 = vdwg.mxu0
  %1190 = vmatprep.subr.mxu0 %v394
  %1191 = vmatpush1.msra.mxu0 %v393
  %1192 = vmatprep.subr.mxu0 %v398
  %1193 = vmatpush1.msra.mxu0 %v397
  %1194 = vmatprep.subr.mxu0 %v402
  %1195 = vmatpush1.msra.mxu0 %v401
  %1196 = vmatprep.subr.mxu0 %v406
  %1197 = vmatpush1.msra.mxu0 %v405
  %1198 = vmatprep.subr.mxu0 %v410
  %1199 = vmatpush1.msra.mxu0 %v409
  %1200 = vmatprep.subr.mxu0 %v414
  %1201 = vmatpush1.msra.mxu0 %v413
  %1202 = vmatprep.subr.mxu0 %v418
  %1203 = vmatpush1.msra.mxu0 %v417
  %1204 = vmatprep.subr.mxu0 %v422
  %1205 = vmatpush1.msra.mxu0 %v421
  %1206 = vmatprep.subr.mxu0 %v426
  %1207 = vmatpush1.msra.mxu0 %v425
  %1208 = vmatprep.subr.mxu0 %v430
  %1209 = vmatpush1.msra.mxu0 %v429
  %1210 = vmatprep.subr.mxu0 %v434
  %1211 = vmatpush1.msra.mxu0 %v433
  %1212 = vmatprep.subr.mxu0 %v438
  %1213 = vmatpush1.msra.mxu0 %v437
  %1214 = vmatprep.subr.mxu0 %v442
  %1215 = vmatpush1.msra.mxu0 %v441
  %1216 = vmatprep.subr.mxu0 %v446
  %1217 = vmatpush1.msra.mxu0 %v445
  %1218 = vmatprep.subr.mxu0 %v450
  %1219 = vmatpush1.msra.mxu0 %v449
  %1220 = vmatprep.subr.mxu0 %v454
  %1221 = vmatpush1.msra.mxu0 %v453
  %1222 = vmatprep.subr.mxu0 0.0
  %1223 = vmatpush1.msra.mxu0 0.0
  %1224 = vmatprep.subr.mxu0 0.0
  %1225 = vmatpush1.msra.mxu0 0.0
  %1226 = vmatprep.subr.mxu0 0.0
  %1227 = vmatpush1.msra.mxu0 0.0
  %1228 = vmatprep.subr.mxu0 0.0
  %1229 = vmatpush1.msra.mxu0 0.0
  %1230 = vmatprep.subr.mxu0 0.0
  %1231 = vmatpush1.msra.mxu0 0.0
  %1232 = vmatprep.subr.mxu0 0.0
  %1233 = vmatpush1.msra.mxu0 0.0
  %1234 = vmatprep.subr.mxu0 0.0
  %1235 = vmatpush1.msra.mxu0 0.0
  %1236 = vmatprep.subr.mxu0 0.0
  %1237 = vmatpush1.msra.mxu0 0.0
  %1238 = vmatprep.subr.mxu0 0.0
  %1239 = vmatpush1.msra.mxu0 0.0
  %1240 = vmatprep.subr.mxu0 0.0
  %1241 = vmatpush1.msra.mxu0 0.0
  %1242 = vmatprep.subr.mxu0 0.0
  %1243 = vmatpush1.msra.mxu0 0.0
  %1244 = vmatprep.subr.mxu0 0.0
  %1245 = vmatpush1.msra.mxu0 0.0
  %1246 = vmatprep.subr.mxu0 0.0
  %1247 = vmatpush1.msra.mxu0 0.0
  %1248 = vmatprep.subr.mxu0 0.0
  %1249 = vmatpush1.msra.mxu0 0.0
  %1250 = vmatprep.subr.mxu0 0.0
  %1251 = vmatpush1.msra.mxu0 0.0
  %1252 = vmatprep.subr.mxu0 0.0
  %1253 = vmatpush1.msra.mxu0 0.0
  %1254 = vmatprep.mubr.f32.mxu0 0.0
  %1255 = vmatmul.mubr.f32.gmra.mrb[0].mxu0 %v798
  %v1256 = vpop.f32.mrb[0].mxu0
  %v1257 = vadd.f32 0.0, %v1256
  %v1258 = vpop.f32.mrb[0].mxu0
  %v1259 = vadd.f32 0.0, %v1258
  %1260 = vdwg.mxu0
  %v1261 = vadd.f32 %v1115, %v1186
  %v1262 = vadd.f32 %v1116, %v1188
  %v1263 = vadd.f32 %v1117, %v1257
  %v1264 = vadd.f32 %v1118, %v1259
  %v1265 = vxor.u32 %v1261, 2147483648
  %v1266 = vmul.f32 %v1265, 1.442695
  %v1267 = vpow.pop %v1266
  %v1268 = vadd.f32 %v1267, 1.0
  %v1269 = vrcp.pop %v1268
  %v1270 = vmul.f32 1.0, %v1269
  %v1271 = vxor.u32 %v1262, 2147483648
  %v1272 = vmul.f32 %v1271, 1.442695
  %v1273 = vpow.pop %v1272
  %v1274 = vadd.f32 %v1273, 1.0
  %v1275 = vrcp.pop %v1274
  %v1276 = vmul.f32 1.0, %v1275
  %v1277 = vtanh.pop %v1263
  %v1278 = vxor.u32 %v1264, 2147483648
  %v1279 = vmul.f32 %v1278, 1.442695
  %v1280 = vpow.pop %v1279
  %v1281 = vadd.f32 %v1280, 1.0
  %v1282 = vrcp.pop %v1281
  %v1283 = vmul.f32 1.0, %v1282
  %v1284 = vmul.f32 %v1276, %v796
  %v1285 = vmul.f32 %v1270, %v1277
  %v1286 = vadd.f32 %v1284, %v1285
  %v1287 = vtanh.pop %v1286
  %v1288 = vmul.f32 %v1283, %v1287
  %1289 = vmatprep.subr.mxu0 %v800
  %1290 = vmatpush1.msra.mxu0 %v799
  %1291 = vmatprep.subr.mxu0 %v804
  %1292 = vmatpush1.msra.mxu0 %v803
  %1293 = vmatprep.subr.mxu0 %v808
  %1294 = vmatpush1.msra.mxu0 %v807
  %1295 = vmatprep.subr.mxu0 %v812
  %1296 = vmatpush1.msra.mxu0 %v811
  %1297 = vmatprep.subr.mxu0 %v816
  %1298 = vmatpush1.msra.mxu0 %v815
  %1299 = vmatprep.subr.mxu0 %v820
  %1300 = vmatpush1.msra.mxu0 %v819
  %1301 = vmatprep.subr.mxu0 %v824
  %1302 = vmatpush1.msra.mxu0 %v823
  %1303 = vmatprep.subr.mxu0 %v828
  %1304 = vmatpush1.msra.mxu0 %v827
  %1305 = vmatprep.subr.mxu0 %v832
  %1306 = vmatpush1.msra.mxu0 %v831
  %1307 = vmatprep.subr.mxu0 %v836
  %1308 = vmatpush1.msra.mxu0 %v835
  %1309 = vmatprep.subr.mxu0 %v840
  %1310 = vmatpush1.msra.mxu0 %v839
  %1311 = vmatprep.subr.mxu0 %v844
  %1312 = vmatpush1.msra.mxu0 %v843
  %1313 = vmatprep.subr.mxu0 %v848
  %1314 = vmatpush1.msra.mxu0 %v847
  %1315 = vmatprep.subr.mxu0 %v852
  %1316 = vmatpush1.msra.mxu0 %v851
  %1317 = vmatprep.subr.mxu0 %v856
  %1318 = vmatpush1.msra.mxu0 %v855
  %1319 = vmatprep.subr.mxu0 %v860
  %1320 = vmatpush1.msra.mxu0 %v859
  %1321 = vmatprep.subr.mxu0 %v864
  %1322 = vmatpush1.msra.mxu0 %v863
  %1323 = vmatprep.subr.mxu0 %v868
  %1324 = vmatpush1.msra.mxu0 %v867
  %1325 = vmatprep.subr.mxu0 %v872
  %1326 = vmatpush1.msra.mxu0 %v871
  %1327 = vmatprep.subr.mxu0 %v876
  %1328 = vmatpush1.msra.mxu0 %v875
  %1329 = vmatprep.subr.mxu0 %v880
  %1330 = vmatpush1.msra.mxu0 %v879
  %1331 = vmatprep.subr.mxu0 %v884
  %1332 = vmatpush1.msra.mxu0 %v883
  %1333 = vmatprep.subr.mxu0 %v888
  %1334 = vmatpush1.msra.mxu0 %v887
  %1335 = vmatprep.subr.mxu0 %v892
  %1336 = vmatpush1.msra.mxu0 %v891
  %1337 = vmatprep.subr.mxu0 %v896
  %1338 = vmatpush1.msra.mxu0 %v895
  %1339 = vmatprep.subr.mxu0 %v900
  %1340 = vmatpush1.msra.mxu0 %v899
  %1341 = vmatprep.subr.mxu0 %v904
  %1342 = vmatpush1.msra.mxu0 %v903
  %1343 = vmatprep.subr.mxu0 %v908
  %1344 = vmatpush1.msra.mxu0 %v907
  %1345 = vmatprep.subr.mxu0 %v912
  %1346 = vmatpush1.msra.mxu0 %v911
  %1347 = vmatprep.subr.mxu0 %v916
  %1348 = vmatpush1.msra.mxu0 %v915
  %1349 = vmatprep.subr.mxu0 %v920
  %1350 = vmatpush1.msra.mxu0 %v919
  %1351 = vmatprep.subr.mxu0 %v924
  %1352 = vmatpush1.msra.mxu0 %v923
  %1353 = vmatprep.mubr.f32.mxu0 %v1114
  %1354 = vmatmul.mubr.f32.gmra.mrb[0].mxu0 %v798
  %v1355 = vpop.f32.mrb[0].mxu0
  %v1356 = vadd.f32 %v932, %v1355
  %v1357 = vpop.f32.mrb[0].mxu0
  %v1358 = vadd.f32 %v936, %v1357
  %1359 = vdwg.mxu0
  %1360 = vmatprep.subr.mxu0 %v802
  %1361 = vmatpush1.msra.mxu0 %v801
  %1362 = vmatprep.subr.mxu0 %v806
  %1363 = vmatpush1.msra.mxu0 %v805
  %1364 = vmatprep.subr.mxu0 %v810
  %1365 = vmatpush1.msra.mxu0 %v809
  %1366 = vmatprep.subr.mxu0 %v814
  %1367 = vmatpush1.msra.mxu0 %v813
  %1368 = vmatprep.subr.mxu0 %v818
  %1369 = vmatpush1.msra.mxu0 %v817
  %1370 = vmatprep.subr.mxu0 %v822
  %1371 = vmatpush1.msra.mxu0 %v821
  %1372 = vmatprep.subr.mxu0 %v826
  %1373 = vmatpush1.msra.mxu0 %v825
  %1374 = vmatprep.subr.mxu0 %v830
  %1375 = vmatpush1.msra.mxu0 %v829
  %1376 = vmatprep.subr.mxu0 %v834
  %1377 = vmatpush1.msra.mxu0 %v833
  %1378 = vmatprep.subr.mxu0 %v838
  %1379 = vmatpush1.msra.mxu0 %v837
  %1380 = vmatprep.subr.mxu0 %v842
  %1381 = vmatpush1.msra.mxu0 %v841
  %1382 = vmatprep.subr.mxu0 %v846
  %1383 = vmatpush1.msra.mxu0 %v845
  %1384 = vmatprep.subr.mxu0 %v850
  %1385 = vmatpush1.msra.mxu0 %v849
  %1386 = vmatprep.subr.mxu0 %v854
  %1387 = vmatpush1.msra.mxu0 %v853
  %1388 = vmatprep.subr.mxu0 %v858
  %1389 = vmatpush1.msra.mxu0 %v857
  %1390 = vmatprep.subr.mxu0 %v862
  %1391 = vmatpush1.msra.mxu0 %v861
  %1392 = vmatprep.subr.mxu0 %v866
  %1393 = vmatpush1.msra.mxu0 %v865
  %1394 = vmatprep.subr.mxu0 %v870
  %1395 = vmatpush1.msra.mxu0 %v869
  %1396 = vmatprep.subr.mxu0 %v874
  %1397 = vmatpush1.msra.mxu0 %v873
  %1398 = vmatprep.subr.mxu0 %v878
  %1399 = vmatpush1.msra.mxu0 %v877
  %1400 = vmatprep.subr.mxu0 %v882
  %1401 = vmatpush1.msra.mxu0 %v881
  %1402 = vmatprep.subr.mxu0 %v886
  %1403 = vmatpush1.msra.mxu0 %v885
  %1404 = vmatprep.subr.mxu0 %v890
  %1405 = vmatpush1.msra.mxu0 %v889
  %1406 = vmatprep.subr.mxu0 %v894
  %1407 = vmatpush1.msra.mxu0 %v893
  %1408 = vmatprep.subr.mxu0 %v898
  %1409 = vmatpush1.msra.mxu0 %v897
  %1410 = vmatprep.subr.mxu0 %v902
  %1411 = vmatpush1.msra.mxu0 %v901
  %1412 = vmatprep.subr.mxu0 %v906
  %1413 = vmatpush1.msra.mxu0 %v905
  %1414 = vmatprep.subr.mxu0 %v910
  %1415 = vmatpush1.msra.mxu0 %v909
  %1416 = vmatprep.subr.mxu0 %v914
  %1417 = vmatpush1.msra.mxu0 %v913
  %1418 = vmatprep.subr.mxu0 %v918
  %1419 = vmatpush1.msra.mxu0 %v917
  %1420 = vmatprep.subr.mxu0 %v922
  %1421 = vmatpush1.msra.mxu0 %v921
  %1422 = vmatprep.subr.mxu0 %v926
  %1423 = vmatpush1.msra.mxu0 %v925
  %1424 = vmatprep.mubr.f32.mxu0 %v1114
  %1425 = vmatmul.mubr.f32.gmra.mrb[0].mxu0 %v798
  %v1426 = vpop.f32.mrb[0].mxu0
  %v1427 = vadd.f32 %v940, %v1426
  %v1428 = vpop.f32.mrb[0].mxu0
  %v1429 = vadd.f32 %v944, %v1428
  %1430 = vdwg.mxu0
  %v1431 = vxor.u32 %v1356, 2147483648
  %v1432 = vmul.f32 %v1431, 1.442695
  %v1433 = vpow.pop %v1432
  %v1434 = vadd.f32 %v1433, 1.0
  %v1435 = vrcp.pop %v1434
  %v1436 = vmul.f32 1.0, %v1435
  %v1437 = vxor.u32 %v1358, 2147483648
  %v1438 = vmul.f32 %v1437, 1.442695
  %v1439 = vpow.pop %v1438
  %v1440 = vadd.f32 %v1439, 1.0
  %v1441 = vrcp.pop %v1440
  %v1442 = vmul.f32 1.0, %v1441
  %v1443 = vtanh.pop %v1427
  %v1444 = vxor.u32 %v1429, 2147483648
  %v1445 = vmul.f32 %v1444, 1.442695
  %v1446 = vpow.pop %v1445
  %v1447 = vadd.f32 %v1446, 1.0
  %v1448 = vrcp.pop %v1447
  %v1449 = vmul.f32 1.0, %v1448
  %v1450 = vmul.f32 %v1442, %v1112
  %v1451 = vmul.f32 %v1436, %v1443
  %v1452 = vadd.f32 %v1450, %v1451
  %v1453 = vtanh.pop %v1452
  %v1454 = vmul.f32 %v1449, %v1453
  %v1455 = vld [vmem:[%s6] sm:$0xff]
  %v1456 = vld [vmem:[%s6 + $0x8] sm:$0xff]
  %v1457 = vld [vmem:[%s6 + $0x10] sm:$0xff]
  %v1458 = vld [vmem:[%s6 + $0x18] sm:$0xff]
  %v1459 = vld [vmem:[%s6 + $0x20] sm:$0xff]
  %v1460 = vld [vmem:[%s6 + $0x28] sm:$0xff]
  %v1461 = vld [vmem:[%s6 + $0x30] sm:$0xff]
  %v1462 = vld [vmem:[%s6 + $0x38] sm:$0xff]
  %v1463 = vld [vmem:[%s6 + $0x40] sm:$0xff]
  %v1464 = vld [vmem:[%s6 + $0x48] sm:$0xff]
  %v1465 = vld [vmem:[%s6 + $0x50] sm:$0xff]
  %v1466 = vld [vmem:[%s6 + $0x58] sm:$0xff]
  %v1467 = vld [vmem:[%s6 + $0x60] sm:$0xff]
  %v1468 = vld [vmem:[%s6 + $0x68] sm:$0xff]
  %v1469 = vld [vmem:[%s6 + $0x70] sm:$0xff]
  %v1470 = vld [vmem:[%s6 + $0x78] sm:$0xff]
  %v1471 = vld [vmem:[%s6 + $0x80] sm:$0xff]
  %v1472 = vld [vmem:[%s6 + $0x88] sm:$0xff]
  %v1473 = vld [vmem:[%s6 + $0x90] sm:$0xff]
  %v1474 = vld [vmem:[%s6 + $0x98] sm:$0xff]
  %v1475 = vld [vmem:[%s6 + $0xa0] sm:$0xff]
  %v1476 = vld [vmem:[%s6 + $0xa8] sm:$0xff]
  %v1477 = vld [vmem:[%s6 + $0xb0] sm:$0xff]
  %v1478 = vld [vmem:[%s6 + $0xb8] sm:$0xff]
  %v1479 = vld [vmem:[%s6 + $0xc0] sm:$0xff]
  %v1480 = vld [vmem:[%s6 + $0xc8] sm:$0xff]
  %v1481 = vld [vmem:[%s6 + $0xd0] sm:$0xff]
  %v1482 = vld [vmem:[%s6 + $0xd8] sm:$0xff]
  %v1483 = vld [vmem:[%s6 + $0xe0] sm:$0xff]
  %v1484 = vld [vmem:[%s6 + $0xe8] sm:$0xff]
  %v1485 = vld [vmem:[%s6 + $0xf0] sm:$0xff]
  %v1486 = vld [vmem:[%s6 + $0xf8] sm:$0xff]
  %v1487 = vld [vmem:[%s6 + $0x100] sm:$0xff]
  %v1488 = vld [vmem:[%s6 + $0x108] sm:$0xff]
  %v1489 = vld [vmem:[%s6 + $0x110] sm:$0xff]
  %v1490 = vld [vmem:[%s6 + $0x118] sm:$0xff]
  %v1491 = vld [vmem:[%s6 + $0x120] sm:$0xff]
  %v1492 = vld [vmem:[%s6 + $0x128] sm:$0xff]
  %v1493 = vld [vmem:[%s6 + $0x130] sm:$0xff]
  %v1494 = vld [vmem:[%s6 + $0x138] sm:$0xff]
  %v1495 = vld [vmem:[%s6 + $0x140] sm:$0xff]
  %v1496 = vld [vmem:[%s6 + $0x148] sm:$0xff]
  %v1497 = vld [vmem:[%s6 + $0x150] sm:$0xff]
  %v1498 = vld [vmem:[%s6 + $0x158] sm:$0xff]
  %v1499 = vld [vmem:[%s6 + $0x160] sm:$0xff]
  %v1500 = vld [vmem:[%s6 + $0x168] sm:$0xff]
  %v1501 = vld [vmem:[%s6 + $0x170] sm:$0xff]
  %v1502 = vld [vmem:[%s6 + $0x178] sm:$0xff]
  %v1503 = vld [vmem:[%s6 + $0x180] sm:$0xff]
  %v1504 = vld [vmem:[%s6 + $0x188] sm:$0xff]
  %v1505 = vld [vmem:[%s6 + $0x190] sm:$0xff]
  %v1506 = vld [vmem:[%s6 + $0x198] sm:$0xff]
  %v1507 = vld [vmem:[%s6 + $0x1a0] sm:$0xff]
  %v1508 = vld [vmem:[%s6 + $0x1a8] sm:$0xff]
  %v1509 = vld [vmem:[%s6 + $0x1b0] sm:$0xff]
  %v1510 = vld [vmem:[%s6 + $0x1b8] sm:$0xff]
  %v1511 = vld [vmem:[%s6 + $0x1c0] sm:$0xff]
  %v1512 = vld [vmem:[%s6 + $0x1c8] sm:$0xff]
  %v1513 = vld [vmem:[%s6 + $0x1d0] sm:$0xff]
  %v1514 = vld [vmem:[%s6 + $0x1d8] sm:$0xff]
  %v1515 = vld [vmem:[%s6 + $0x1e0] sm:$0xff]
  %v1516 = vld [vmem:[%s6 + $0x1e8] sm:$0xff]
  %v1517 = vld [vmem:[%s6 + $0x1f0] sm:$0xff]
  %v1518 = vld [vmem:[%s6 + $0x1f8] sm:$0xff]
  %v1519 = vld [vmem:[%s6 + $0x200] sm:$0xff]
  %v1520 = vld [vmem:[%s6 + $0x208] sm:$0xff]
  %v1521 = vld [vmem:[%s6 + $0x210] sm:$0xff]
  %v1522 = vld [vmem:[%s6 + $0x218] sm:$0xff]
  %v1523 = vld [vmem:[%s6 + $0x220] sm:$0xff]
  %v1524 = vld [vmem:[%s6 + $0x228] sm:$0xff]
  %v1525 = vld [vmem:[%s6 + $0x230] sm:$0xff]
  %v1526 = vld [vmem:[%s6 + $0x238] sm:$0xff]
  %v1527 = vld [vmem:[%s6 + $0x240] sm:$0xff]
  %v1528 = vld [vmem:[%s6 + $0x248] sm:$0xff]
  %v1529 = vld [vmem:[%s6 + $0x250] sm:$0xff]
  %v1530 = vld [vmem:[%s6 + $0x258] sm:$0xff]
  %v1531 = vld [vmem:[%s6 + $0x260] sm:$0xff]
  %v1532 = vld [vmem:[%s6 + $0x268] sm:$0xff]
  %v1533 = vld [vmem:[%s6 + $0x270] sm:$0xff]
  %v1534 = vld [vmem:[%s6 + $0x278] sm:$0xff]
  %v1535 = vld [vmem:[%s6 + $0x280] sm:$0xff]
  %v1536 = vld [vmem:[%s6 + $0x288] sm:$0xff]
  %v1537 = vld [vmem:[%s6 + $0x290] sm:$0xff]
  %v1538 = vld [vmem:[%s6 + $0x298] sm:$0xff]
  %v1539 = vld [vmem:[%s6 + $0x2a0] sm:$0xff]
  %v1540 = vld [vmem:[%s6 + $0x2a8] sm:$0xff]
  %v1541 = vld [vmem:[%s6 + $0x2b0] sm:$0xff]
  %v1542 = vld [vmem:[%s6 + $0x2b8] sm:$0xff]
  %v1543 = vld [vmem:[%s6 + $0x2c0] sm:$0xff]
  %v1544 = vld [vmem:[%s6 + $0x2c8] sm:$0xff]
  %v1545 = vld [vmem:[%s6 + $0x2d0] sm:$0xff]
  %v1546 = vld [vmem:[%s6 + $0x2d8] sm:$0xff]
  %v1547 = vld [vmem:[%s6 + $0x2e0] sm:$0xff]
  %v1548 = vld [vmem:[%s6 + $0x2e8] sm:$0xff]
  %v1549 = vld [vmem:[%s6 + $0x2f0] sm:$0xff]
  %v1550 = vld [vmem:[%s6 + $0x2f8] sm:$0xff]
  %v1551 = vld [vmem:[%s6 + $0x300] sm:$0xff]
  %v1552 = vld [vmem:[%s6 + $0x308] sm:$0xff]
  %v1553 = vld [vmem:[%s6 + $0x310] sm:$0xff]
  %v1554 = vld [vmem:[%s6 + $0x318] sm:$0xff]
  %v1555 = vld [vmem:[%s6 + $0x320] sm:$0xff]
  %v1556 = vld [vmem:[%s6 + $0x328] sm:$0xff]
  %v1557 = vld [vmem:[%s6 + $0x330] sm:$0xff]
  %v1558 = vld [vmem:[%s6 + $0x338] sm:$0xff]
  %v1559 = vld [vmem:[%s6 + $0x340] sm:$0xff]
  %v1560 = vld [vmem:[%s6 + $0x348] sm:$0xff]
  %v1561 = vld [vmem:[%s6 + $0x350] sm:$0xff]
  %v1562 = vld [vmem:[%s6 + $0x358] sm:$0xff]
  %v1563 = vld [vmem:[%s6 + $0x360] sm:$0xff]
  %v1564 = vld [vmem:[%s6 + $0x368] sm:$0xff]
  %v1565 = vld [vmem:[%s6 + $0x370] sm:$0xff]
  %v1566 = vld [vmem:[%s6 + $0x378] sm:$0xff]
  %v1567 = vld [vmem:[%s6 + $0x380] sm:$0xff]
  %v1568 = vld [vmem:[%s6 + $0x388] sm:$0xff]
  %v1569 = vld [vmem:[%s6 + $0x390] sm:$0xff]
  %v1570 = vld [vmem:[%s6 + $0x398] sm:$0xff]
  %v1571 = vld [vmem:[%s6 + $0x3a0] sm:$0xff]
  %v1572 = vld [vmem:[%s6 + $0x3a8] sm:$0xff]
  %v1573 = vld [vmem:[%s6 + $0x3b0] sm:$0xff]
  %v1574 = vld [vmem:[%s6 + $0x3b8] sm:$0xff]
  %v1575 = vld [vmem:[%s6 + $0x3c0] sm:$0xff]
  %v1576 = vld [vmem:[%s6 + $0x3c8] sm:$0xff]
  %v1577 = vld [vmem:[%s6 + $0x3d0] sm:$0xff]
  %v1578 = vld [vmem:[%s6 + $0x3d8] sm:$0xff]
  %v1579 = vld [vmem:[%s6 + $0x3e0] sm:$0xff]
  %v1580 = vld [vmem:[%s6 + $0x3e8] sm:$0xff]
  %v1581 = vld [vmem:[%s6 + $0x3f0] sm:$0xff]
  %v1582 = vld [vmem:[%s6 + $0x3f8] sm:$0xff]
  %v1583 = vld [vmem:[%s7] sm:$0xf]
  %v1585 = vlaneseq
  %v1586 = vshrl.u32 %v1585, 7
  %v1587 = vsub.s32 0, %v1586
  %v1588 = vrot.slane %v1583, %v1587
  %v1589 = vlaneseq
  %v1590 = vshrl.u32 %v1589, 7
  %v1591 = vsub.s32 1, %v1590
  %v1592 = vrot.slane %v1583, %v1591
  %v1593 = vlaneseq
  %v1594 = vshrl.u32 %v1593, 7
  %v1595 = vsub.s32 2, %v1594
  %v1596 = vrot.slane %v1583, %v1595
  %v1597 = vlaneseq
  %v1598 = vshrl.u32 %v1597, 7
  %v1599 = vsub.s32 3, %v1598
  %v1600 = vrot.slane %v1583, %v1599
  %1605 = vmatprep.subr.mxu0 %v1456
  %1606 = vmatpush1.msra.mxu0 %v1455
  %1607 = vmatprep.subr.mxu0 %v1460
  %1608 = vmatpush1.msra.mxu0 %v1459
  %1609 = vmatprep.subr.mxu0 %v1464
  %1610 = vmatpush1.msra.mxu0 %v1463
  %1611 = vmatprep.subr.mxu0 %v1468
  %1612 = vmatpush1.msra.mxu0 %v1467
  %1613 = vmatprep.subr.mxu0 %v1472
  %1614 = vmatpush1.msra.mxu0 %v1471
  %1615 = vmatprep.subr.mxu0 %v1476
  %1616 = vmatpush1.msra.mxu0 %v1475
  %1617 = vmatprep.subr.mxu0 %v1480
  %1618 = vmatpush1.msra.mxu0 %v1479
  %1619 = vmatprep.subr.mxu0 %v1484
  %1620 = vmatpush1.msra.mxu0 %v1483
  %1621 = vmatprep.subr.mxu0 %v1488
  %1622 = vmatpush1.msra.mxu0 %v1487
  %1623 = vmatprep.subr.mxu0 %v1492
  %1624 = vmatpush1.msra.mxu0 %v1491
  %1625 = vmatprep.subr.mxu0 %v1496
  %1626 = vmatpush1.msra.mxu0 %v1495
  %1627 = vmatprep.subr.mxu0 %v1500
  %1628 = vmatpush1.msra.mxu0 %v1499
  %1629 = vmatprep.subr.mxu0 %v1504
  %1630 = vmatpush1.msra.mxu0 %v1503
  %1631 = vmatprep.subr.mxu0 %v1508
  %1632 = vmatpush1.msra.mxu0 %v1507
  %1633 = vmatprep.subr.mxu0 %v1512
  %1634 = vmatpush1.msra.mxu0 %v1511
  %1635 = vmatprep.subr.mxu0 %v1516
  %1636 = vmatpush1.msra.mxu0 %v1515
  %1637 = vmatprep.subr.mxu0 %v1520
  %1638 = vmatpush1.msra.mxu0 %v1519
  %1639 = vmatprep.subr.mxu0 %v1524
  %1640 = vmatpush1.msra.mxu0 %v1523
  %1641 = vmatprep.subr.mxu0 %v1528
  %1642 = vmatpush1.msra.mxu0 %v1527
  %1643 = vmatprep.subr.mxu0 %v1532
  %1644 = vmatpush1.msra.mxu0 %v1531
  %1645 = vmatprep.subr.mxu0 %v1536
  %1646 = vmatpush1.msra.mxu0 %v1535
  %1647 = vmatprep.subr.mxu0 %v1540
  %1648 = vmatpush1.msra.mxu0 %v1539
  %1649 = vmatprep.subr.mxu0 %v1544
  %1650 = vmatpush1.msra.mxu0 %v1543
  %1651 = vmatprep.subr.mxu0 %v1548
  %1652 = vmatpush1.msra.mxu0 %v1547
  %1653 = vmatprep.subr.mxu0 %v1552
  %1654 = vmatpush1.msra.mxu0 %v1551
  %1655 = vmatprep.subr.mxu0 %v1556
  %1656 = vmatpush1.msra.mxu0 %v1555
  %1657 = vmatprep.subr.mxu0 %v1560
  %1658 = vmatpush1.msra.mxu0 %v1559
  %1659 = vmatprep.subr.mxu0 %v1564
  %1660 = vmatpush1.msra.mxu0 %v1563
  %1661 = vmatprep.subr.mxu0 %v1568
  %1662 = vmatpush1.msra.mxu0 %v1567
  %1663 = vmatprep.subr.mxu0 %v1572
  %1664 = vmatpush1.msra.mxu0 %v1571
  %1665 = vmatprep.subr.mxu0 %v1576
  %1666 = vmatpush1.msra.mxu0 %v1575
  %1667 = vmatprep.subr.mxu0 %v1580
  %1668 = vmatpush1.msra.mxu0 %v1579
  %1669 = vmatprep.mubr.f32.mxu0 0.0
  %1670 = vmatmul.mubr.f32.gmra.mrb[0].mxu0 %v1114
  %v1671 = vpop.f32.mrb[0].mxu0
  %v1672 = vadd.f32 %v1588, %v1671
  %v1673 = vpop.f32.mrb[0].mxu0
  %v1674 = vadd.f32 %v1592, %v1673
  %1675 = vdwg.mxu0
  %1676 = vmatprep.subr.mxu0 %v1458
  %1677 = vmatpush1.msra.mxu0 %v1457
  %1678 = vmatprep.subr.mxu0 %v1462
  %1679 = vmatpush1.msra.mxu0 %v1461
  %1680 = vmatprep.subr.mxu0 %v1466
  %1681 = vmatpush1.msra.mxu0 %v1465
  %1682 = vmatprep.subr.mxu0 %v1470
  %1683 = vmatpush1.msra.mxu0 %v1469
  %1684 = vmatprep.subr.mxu0 %v1474
  %1685 = vmatpush1.msra.mxu0 %v1473
  %1686 = vmatprep.subr.mxu0 %v1478
  %1687 = vmatpush1.msra.mxu0 %v1477
  %1688 = vmatprep.subr.mxu0 %v1482
  %1689 = vmatpush1.msra.mxu0 %v1481
  %1690 = vmatprep.subr.mxu0 %v1486
  %1691 = vmatpush1.msra.mxu0 %v1485
  %1692 = vmatprep.subr.mxu0 %v1490
  %1693 = vmatpush1.msra.mxu0 %v1489
  %1694 = vmatprep.subr.mxu0 %v1494
  %1695 = vmatpush1.msra.mxu0 %v1493
  %1696 = vmatprep.subr.mxu0 %v1498
  %1697 = vmatpush1.msra.mxu0 %v1497
  %1698 = vmatprep.subr.mxu0 %v1502
  %1699 = vmatpush1.msra.mxu0 %v1501
  %1700 = vmatprep.subr.mxu0 %v1506
  %1701 = vmatpush1.msra.mxu0 %v1505
  %1702 = vmatprep.subr.mxu0 %v1510
  %1703 = vmatpush1.msra.mxu0 %v1509
  %1704 = vmatprep.subr.mxu0 %v1514
  %1705 = vmatpush1.msra.mxu0 %v1513
  %1706 = vmatprep.subr.mxu0 %v1518
  %1707 = vmatpush1.msra.mxu0 %v1517
  %1708 = vmatprep.subr.mxu0 %v1522
  %1709 = vmatpush1.msra.mxu0 %v1521
  %1710 = vmatprep.subr.mxu0 %v1526
  %1711 = vmatpush1.msra.mxu0 %v1525
  %1712 = vmatprep.subr.mxu0 %v1530
  %1713 = vmatpush1.msra.mxu0 %v1529
  %1714 = vmatprep.subr.mxu0 %v1534
  %1715 = vmatpush1.msra.mxu0 %v1533
  %1716 = vmatprep.subr.mxu0 %v1538
  %1717 = vmatpush1.msra.mxu0 %v1537
  %1718 = vmatprep.subr.mxu0 %v1542
  %1719 = vmatpush1.msra.mxu0 %v1541
  %1720 = vmatprep.subr.mxu0 %v1546
  %1721 = vmatpush1.msra.mxu0 %v1545
  %1722 = vmatprep.subr.mxu0 %v1550
  %1723 = vmatpush1.msra.mxu0 %v1549
  %1724 = vmatprep.subr.mxu0 %v1554
  %1725 = vmatpush1.msra.mxu0 %v1553
  %1726 = vmatprep.subr.mxu0 %v1558
  %1727 = vmatpush1.msra.mxu0 %v1557
  %1728 = vmatprep.subr.mxu0 %v1562
  %1729 = vmatpush1.msra.mxu0 %v1561
  %1730 = vmatprep.subr.mxu0 %v1566
  %1731 = vmatpush1.msra.mxu0 %v1565
  %1732 = vmatprep.subr.mxu0 %v1570
  %1733 = vmatpush1.msra.mxu0 %v1569
  %1734 = vmatprep.subr.mxu0 %v1574
  %1735 = vmatpush1.msra.mxu0 %v1573
  %1736 = vmatprep.subr.mxu0 %v1578
  %1737 = vmatpush1.msra.mxu0 %v1577
  %1738 = vmatprep.subr.mxu0 %v1582
  %1739 = vmatpush1.msra.mxu0 %v1581
  %1740 = vmatprep.mubr.f32.mxu0 0.0
  %1741 = vmatmul.mubr.f32.gmra.mrb[0].mxu0 %v1114
  %v1742 = vpop.f32.mrb[0].mxu0
  %v1743 = vadd.f32 %v1596, %v1742
  %v1744 = vpop.f32.mrb[0].mxu0
  %v1745 = vadd.f32 %v1600, %v1744
  %1746 = vdwg.mxu0
  %v1747 = vxor.u32 %v1672, 2147483648
  %v1748 = vmul.f32 %v1747, 1.442695
  %v1749 = vpow.pop %v1748
  %v1750 = vadd.f32 %v1749, 1.0
  %v1751 = vrcp.pop %v1750
  %v1752 = vmul.f32 1.0, %v1751
  %v1753 = vxor.u32 %v1674, 2147483648
  %v1754 = vmul.f32 %v1753, 1.442695
  %v1755 = vpow.pop %v1754
  %v1756 = vadd.f32 %v1755, 1.0
  %v1757 = vrcp.pop %v1756
  %v1758 = vmul.f32 1.0, %v1757
  %v1759 = vtanh.pop %v1743
  %v1760 = vxor.u32 %v1745, 2147483648
  %v1761 = vmul.f32 %v1760, 1.442695
  %v1762 = vpow.pop %v1761
  %v1763 = vadd.f32 %v1762, 1.0
  %v1764 = vrcp.pop %v1763
  %v1765 = vmul.f32 1.0, %v1764
  %v1766 = vmul.f32 %v1758, 0.0
  %v1767 = vmul.f32 %v1752, %v1759
  %v1768 = vadd.f32 %v1766, %v1767
  %v1769 = vtanh.pop %v1768
  %v1770 = vmul.f32 %v1765, %v1769
  %v1771 = vld [vmem:[#allocation2 + $0x60] sm:$0xff]
  %v1772 = vld [vmem:[#allocation2 + $0x68] sm:$0xff]
  %v1773 = vld [vmem:[#allocation2 + $0x70] sm:$0xff]
  %v1774 = vld [vmem:[#allocation2 + $0x78] sm:$0xff]
  %1775 = vmatprep.subr.mxu0 %v392
  %1776 = vmatpush1.msra.mxu0 %v391
  %1777 = vmatprep.subr.mxu0 %v396
  %1778 = vmatpush1.msra.mxu0 %v395
  %1779 = vmatprep.subr.mxu0 %v400
  %1780 = vmatpush1.msra.mxu0 %v399
  %1781 = vmatprep.subr.mxu0 %v404
  %1782 = vmatpush1.msra.mxu0 %v403
  %1783 = vmatprep.subr.mxu0 %v408
  %1784 = vmatpush1.msra.mxu0 %v407
  %1785 = vmatprep.subr.mxu0 %v412
  %1786 = vmatpush1.msra.mxu0 %v411
  %1787 = vmatprep.subr.mxu0 %v416
  %1788 = vmatpush1.msra.mxu0 %v415
  %1789 = vmatprep.subr.mxu0 %v420
  %1790 = vmatpush1.msra.mxu0 %v419
  %1791 = vmatprep.subr.mxu0 %v424
  %1792 = vmatpush1.msra.mxu0 %v423
  %1793 = vmatprep.subr.mxu0 %v428
  %1794 = vmatpush1.msra.mxu0 %v427
  %1795 = vmatprep.subr.mxu0 %v432
  %1796 = vmatpush1.msra.mxu0 %v431
  %1797 = vmatprep.subr.mxu0 %v436
  %1798 = vmatpush1.msra.mxu0 %v435
  %1799 = vmatprep.subr.mxu0 %v440
  %1800 = vmatpush1.msra.mxu0 %v439
  %1801 = vmatprep.subr.mxu0 %v444
  %1802 = vmatpush1.msra.mxu0 %v443
  %1803 = vmatprep.subr.mxu0 %v448
  %1804 = vmatpush1.msra.mxu0 %v447
  %1805 = vmatprep.subr.mxu0 %v452
  %1806 = vmatpush1.msra.mxu0 %v451
  %1807 = vmatprep.subr.mxu0 0.0
  %1808 = vmatpush1.msra.mxu0 0.0
  %1809 = vmatprep.subr.mxu0 0.0
  %1810 = vmatpush1.msra.mxu0 0.0
  %1811 = vmatprep.subr.mxu0 0.0
  %1812 = vmatpush1.msra.mxu0 0.0
  %1813 = vmatprep.subr.mxu0 0.0
  %1814 = vmatpush1.msra.mxu0 0.0
  %1815 = vmatprep.subr.mxu0 0.0
  %1816 = vmatpush1.msra.mxu0 0.0
  %1817 = vmatprep.subr.mxu0 0.0
  %1818 = vmatpush1.msra.mxu0 0.0
  %1819 = vmatprep.subr.mxu0 0.0
  %1820 = vmatpush1.msra.mxu0 0.0
  %1821 = vmatprep.subr.mxu0 0.0
  %1822 = vmatpush1.msra.mxu0 0.0
  %1823 = vmatprep.subr.mxu0 0.0
  %1824 = vmatpush1.msra.mxu0 0.0
  %1825 = vmatprep.subr.mxu0 0.0
  %1826 = vmatpush1.msra.mxu0 0.0
  %1827 = vmatprep.subr.mxu0 0.0
  %1828 = vmatpush1.msra.mxu0 0.0
  %1829 = vmatprep.subr.mxu0 0.0
  %1830 = vmatpush1.msra.mxu0 0.0
  %1831 = vmatprep.subr.mxu0 0.0
  %1832 = vmatpush1.msra.mxu0 0.0
  %1833 = vmatprep.subr.mxu0 0.0
  %1834 = vmatpush1.msra.mxu0 0.0
  %1835 = vmatprep.subr.mxu0 0.0
  %1836 = vmatpush1.msra.mxu0 0.0
  %1837 = vmatprep.subr.mxu0 0.0
  %1838 = vmatpush1.msra.mxu0 0.0
  %1839 = vmatprep.mubr.f32.mxu0 0.0
  %1840 = vmatmul.mubr.f32.gmra.mrb[0].mxu0 %v1288
  %v1841 = vpop.f32.mrb[0].mxu0
  %v1842 = vadd.f32 0.0, %v1841
  %v1843 = vpop.f32.mrb[0].mxu0
  %v1844 = vadd.f32 0.0, %v1843
  %1845 = vdwg.mxu0
  %1846 = vmatprep.subr.mxu0 %v394
  %1847 = vmatpush1.msra.mxu0 %v393
  %1848 = vmatprep.subr.mxu0 %v398
  %1849 = vmatpush1.msra.mxu0 %v397
  %1850 = vmatprep.subr.mxu0 %v402
  %1851 = vmatpush1.msra.mxu0 %v401
  %1852 = vmatprep.subr.mxu0 %v406
  %1853 = vmatpush1.msra.mxu0 %v405
  %1854 = vmatprep.subr.mxu0 %v410
  %1855 = vmatpush1.msra.mxu0 %v409
  %1856 = vmatprep.subr.mxu0 %v414
  %1857 = vmatpush1.msra.mxu0 %v413
  %1858 = vmatprep.subr.mxu0 %v418
  %1859 = vmatpush1.msra.mxu0 %v417
  %1860 = vmatprep.subr.mxu0 %v422
  %1861 = vmatpush1.msra.mxu0 %v421
  %1862 = vmatprep.subr.mxu0 %v426
  %1863 = vmatpush1.msra.mxu0 %v425
  %1864 = vmatprep.subr.mxu0 %v430
  %1865 = vmatpush1.msra.mxu0 %v429
  %1866 = vmatprep.subr.mxu0 %v434
  %1867 = vmatpush1.msra.mxu0 %v433
  %1868 = vmatprep.subr.mxu0 %v438
  %1869 = vmatpush1.msra.mxu0 %v437
  %1870 = vmatprep.subr.mxu0 %v442
  %1871 = vmatpush1.msra.mxu0 %v441
  %1872 = vmatprep.subr.mxu0 %v446
  %1873 = vmatpush1.msra.mxu0 %v445
  %1874 = vmatprep.subr.mxu0 %v450
  %1875 = vmatpush1.msra.mxu0 %v449
  %1876 = vmatprep.subr.mxu0 %v454
  %1877 = vmatpush1.msra.mxu0 %v453
  %1878 = vmatprep.subr.mxu0 0.0
  %1879 = vmatpush1.msra.mxu0 0.0
  %1880 = vmatprep.subr.mxu0 0.0
  %1881 = vmatpush1.msra.mxu0 0.0
  %1882 = vmatprep.subr.mxu0 0.0
  %1883 = vmatpush1.msra.mxu0 0.0
  %1884 = vmatprep.subr.mxu0 0.0
  %1885 = vmatpush1.msra.mxu0 0.0
  %1886 = vmatprep.subr.mxu0 0.0
  %1887 = vmatpush1.msra.mxu0 0.0
  %1888 = vmatprep.subr.mxu0 0.0
  %1889 = vmatpush1.msra.mxu0 0.0
  %1890 = vmatprep.subr.mxu0 0.0
  %1891 = vmatpush1.msra.mxu0 0.0
  %1892 = vmatprep.subr.mxu0 0.0
  %1893 = vmatpush1.msra.mxu0 0.0
  %1894 = vmatprep.subr.mxu0 0.0
  %1895 = vmatpush1.msra.mxu0 0.0
  %1896 = vmatprep.subr.mxu0 0.0
  %1897 = vmatpush1.msra.mxu0 0.0
  %1898 = vmatprep.subr.mxu0 0.0
  %1899 = vmatpush1.msra.mxu0 0.0
  %1900 = vmatprep.subr.mxu0 0.0
  %1901 = vmatpush1.msra.mxu0 0.0
  %1902 = vmatprep.subr.mxu0 0.0
  %1903 = vmatpush1.msra.mxu0 0.0
  %1904 = vmatprep.subr.mxu0 0.0
  %1905 = vmatpush1.msra.mxu0 0.0
  %1906 = vmatprep.subr.mxu0 0.0
  %1907 = vmatpush1.msra.mxu0 0.0
  %1908 = vmatprep.subr.mxu0 0.0
  %1909 = vmatpush1.msra.mxu0 0.0
  %1910 = vmatprep.mubr.f32.mxu0 0.0
  %1911 = vmatmul.mubr.f32.gmra.mrb[0].mxu0 %v1288
  %v1912 = vpop.f32.mrb[0].mxu0
  %v1913 = vadd.f32 0.0, %v1912
  %v1914 = vpop.f32.mrb[0].mxu0
  %v1915 = vadd.f32 0.0, %v1914
  %1916 = vdwg.mxu0
  %v1917 = vadd.f32 %v1771, %v1842
  %v1918 = vadd.f32 %v1772, %v1844
  %v1919 = vadd.f32 %v1773, %v1913
  %v1920 = vadd.f32 %v1774, %v1915
  %v1921 = vxor.u32 %v1917, 2147483648
  %v1922 = vmul.f32 %v1921, 1.442695
  %v1923 = vpow.pop %v1922
  %v1924 = vadd.f32 %v1923, 1.0
  %v1925 = vrcp.pop %v1924
  %v1926 = vmul.f32 1.0, %v1925
  %v1927 = vxor.u32 %v1918, 2147483648
  %v1928 = vmul.f32 %v1927, 1.442695
  %v1929 = vpow.pop %v1928
  %v1930 = vadd.f32 %v1929, 1.0
  %v1931 = vrcp.pop %v1930
  %v1932 = vmul.f32 1.0, %v1931
  %v1933 = vtanh.pop %v1919
  %v1934 = vxor.u32 %v1920, 2147483648
  %v1935 = vmul.f32 %v1934, 1.442695
  %v1936 = vpow.pop %v1935
  %v1937 = vadd.f32 %v1936, 1.0
  %v1938 = vrcp.pop %v1937
  %v1939 = vmul.f32 1.0, %v1938
  %v1940 = vmul.f32 %v1932, %v1286
  %v1941 = vmul.f32 %v1926, %v1933
  %v1942 = vadd.f32 %v1940, %v1941
  %v1943 = vtanh.pop %v1942
  %v1944 = vmul.f32 %v1939, %v1943
  %1945 = vmatprep.subr.mxu0 %v800
  %1946 = vmatpush1.msra.mxu0 %v799
  %1947 = vmatprep.subr.mxu0 %v804
  %1948 = vmatpush1.msra.mxu0 %v803
  %1949 = vmatprep.subr.mxu0 %v808
  %1950 = vmatpush1.msra.mxu0 %v807
  %1951 = vmatprep.subr.mxu0 %v812
  %1952 = vmatpush1.msra.mxu0 %v811
  %1953 = vmatprep.subr.mxu0 %v816
  %1954 = vmatpush1.msra.mxu0 %v815
  %1955 = vmatprep.subr.mxu0 %v820
  %1956 = vmatpush1.msra.mxu0 %v819
  %1957 = vmatprep.subr.mxu0 %v824
  %1958 = vmatpush1.msra.mxu0 %v823
  %1959 = vmatprep.subr.mxu0 %v828
  %1960 = vmatpush1.msra.mxu0 %v827
  %1961 = vmatprep.subr.mxu0 %v832
  %1962 = vmatpush1.msra.mxu0 %v831
  %1963 = vmatprep.subr.mxu0 %v836
  %1964 = vmatpush1.msra.mxu0 %v835
  %1965 = vmatprep.subr.mxu0 %v840
  %1966 = vmatpush1.msra.mxu0 %v839
  %1967 = vmatprep.subr.mxu0 %v844
  %1968 = vmatpush1.msra.mxu0 %v843
  %1969 = vmatprep.subr.mxu0 %v848
  %1970 = vmatpush1.msra.mxu0 %v847
  %1971 = vmatprep.subr.mxu0 %v852
  %1972 = vmatpush1.msra.mxu0 %v851
  %1973 = vmatprep.subr.mxu0 %v856
  %1974 = vmatpush1.msra.mxu0 %v855
  %1975 = vmatprep.subr.mxu0 %v860
  %1976 = vmatpush1.msra.mxu0 %v859
  %1977 = vmatprep.subr.mxu0 %v864
  %1978 = vmatpush1.msra.mxu0 %v863
  %1979 = vmatprep.subr.mxu0 %v868
  %1980 = vmatpush1.msra.mxu0 %v867
  %1981 = vmatprep.subr.mxu0 %v872
  %1982 = vmatpush1.msra.mxu0 %v871
  %1983 = vmatprep.subr.mxu0 %v876
  %1984 = vmatpush1.msra.mxu0 %v875
  %1985 = vmatprep.subr.mxu0 %v880
  %1986 = vmatpush1.msra.mxu0 %v879
  %1987 = vmatprep.subr.mxu0 %v884
  %1988 = vmatpush1.msra.mxu0 %v883
  %1989 = vmatprep.subr.mxu0 %v888
  %1990 = vmatpush1.msra.mxu0 %v887
  %1991 = vmatprep.subr.mxu0 %v892
  %1992 = vmatpush1.msra.mxu0 %v891
  %1993 = vmatprep.subr.mxu0 %v896
  %1994 = vmatpush1.msra.mxu0 %v895
  %1995 = vmatprep.subr.mxu0 %v900
  %1996 = vmatpush1.msra.mxu0 %v899
  %1997 = vmatprep.subr.mxu0 %v904
  %1998 = vmatpush1.msra.mxu0 %v903
  %1999 = vmatprep.subr.mxu0 %v908
  %2000 = vmatpush1.msra.mxu0 %v907
  %2001 = vmatprep.subr.mxu0 %v912
  %2002 = vmatpush1.msra.mxu0 %v911
  %2003 = vmatprep.subr.mxu0 %v916
  %2004 = vmatpush1.msra.mxu0 %v915
  %2005 = vmatprep.subr.mxu0 %v920
  %2006 = vmatpush1.msra.mxu0 %v919
  %2007 = vmatprep.subr.mxu0 %v924
  %2008 = vmatpush1.msra.mxu0 %v923
  %2009 = vmatprep.mubr.f32.mxu0 %v1454
  %2010 = vmatmul.mubr.f32.gmra.mrb[0].mxu0 %v1288
  %v2011 = vpop.f32.mrb[0].mxu0
  %v2012 = vadd.f32 %v932, %v2011
  %v2013 = vpop.f32.mrb[0].mxu0
  %v2014 = vadd.f32 %v936, %v2013
  %2015 = vdwg.mxu0
  %2016 = vmatprep.subr.mxu0 %v802
  %2017 = vmatpush1.msra.mxu0 %v801
  %2018 = vmatprep.subr.mxu0 %v806
  %2019 = vmatpush1.msra.mxu0 %v805
  %2020 = vmatprep.subr.mxu0 %v810
  %2021 = vmatpush1.msra.mxu0 %v809
  %2022 = vmatprep.subr.mxu0 %v814
  %2023 = vmatpush1.msra.mxu0 %v813
  %2024 = vmatprep.subr.mxu0 %v818
  %2025 = vmatpush1.msra.mxu0 %v817
  %2026 = vmatprep.subr.mxu0 %v822
  %2027 = vmatpush1.msra.mxu0 %v821
  %2028 = vmatprep.subr.mxu0 %v826
  %2029 = vmatpush1.msra.mxu0 %v825
  %2030 = vmatprep.subr.mxu0 %v830
  %2031 = vmatpush1.msra.mxu0 %v829
  %2032 = vmatprep.subr.mxu0 %v834
  %2033 = vmatpush1.msra.mxu0 %v833
  %2034 = vmatprep.subr.mxu0 %v838
  %2035 = vmatpush1.msra.mxu0 %v837
  %2036 = vmatprep.subr.mxu0 %v842
  %2037 = vmatpush1.msra.mxu0 %v841
  %2038 = vmatprep.subr.mxu0 %v846
  %2039 = vmatpush1.msra.mxu0 %v845
  %2040 = vmatprep.subr.mxu0 %v850
  %2041 = vmatpush1.msra.mxu0 %v849
  %2042 = vmatprep.subr.mxu0 %v854
  %2043 = vmatpush1.msra.mxu0 %v853
  %2044 = vmatprep.subr.mxu0 %v858
  %2045 = vmatpush1.msra.mxu0 %v857
  %2046 = vmatprep.subr.mxu0 %v862
  %2047 = vmatpush1.msra.mxu0 %v861
  %2048 = vmatprep.subr.mxu0 %v866
  %2049 = vmatpush1.msra.mxu0 %v865
  %2050 = vmatprep.subr.mxu0 %v870
  %2051 = vmatpush1.msra.mxu0 %v869
  %2052 = vmatprep.subr.mxu0 %v874
  %2053 = vmatpush1.msra.mxu0 %v873
  %2054 = vmatprep.subr.mxu0 %v878
  %2055 = vmatpush1.msra.mxu0 %v877
  %2056 = vmatprep.subr.mxu0 %v882
  %2057 = vmatpush1.msra.mxu0 %v881
  %2058 = vmatprep.subr.mxu0 %v886
  %2059 = vmatpush1.msra.mxu0 %v885
  %2060 = vmatprep.subr.mxu0 %v890
  %2061 = vmatpush1.msra.mxu0 %v889
  %2062 = vmatprep.subr.mxu0 %v894
  %2063 = vmatpush1.msra.mxu0 %v893
  %2064 = vmatprep.subr.mxu0 %v898
  %2065 = vmatpush1.msra.mxu0 %v897
  %2066 = vmatprep.subr.mxu0 %v902
  %2067 = vmatpush1.msra.mxu0 %v901
  %2068 = vmatprep.subr.mxu0 %v906
  %2069 = vmatpush1.msra.mxu0 %v905
  %2070 = vmatprep.subr.mxu0 %v910
  %2071 = vmatpush1.msra.mxu0 %v909
  %2072 = vmatprep.subr.mxu0 %v914
  %2073 = vmatpush1.msra.mxu0 %v913
  %2074 = vmatprep.subr.mxu0 %v918
  %2075 = vmatpush1.msra.mxu0 %v917
  %2076 = vmatprep.subr.mxu0 %v922
  %2077 = vmatpush1.msra.mxu0 %v921
  %2078 = vmatprep.subr.mxu0 %v926
  %2079 = vmatpush1.msra.mxu0 %v925
  %2080 = vmatprep.mubr.f32.mxu0 %v1454
  %2081 = vmatmul.mubr.f32.gmra.mrb[0].mxu0 %v1288
  %v2082 = vpop.f32.mrb[0].mxu0
  %v2083 = vadd.f32 %v940, %v2082
  %v2084 = vpop.f32.mrb[0].mxu0
  %v2085 = vadd.f32 %v944, %v2084
  %2086 = vdwg.mxu0
  %v2087 = vxor.u32 %v2012, 2147483648
  %v2088 = vmul.f32 %v2087, 1.442695
  %v2089 = vpow.pop %v2088
  %v2090 = vadd.f32 %v2089, 1.0
  %v2091 = vrcp.pop %v2090
  %v2092 = vmul.f32 1.0, %v2091
  %v2093 = vxor.u32 %v2014, 2147483648
  %v2094 = vmul.f32 %v2093, 1.442695
  %v2095 = vpow.pop %v2094
  %v2096 = vadd.f32 %v2095, 1.0
  %v2097 = vrcp.pop %v2096
  %v2098 = vmul.f32 1.0, %v2097
  %v2099 = vtanh.pop %v2083
  %v2100 = vxor.u32 %v2085, 2147483648
  %v2101 = vmul.f32 %v2100, 1.442695
  %v2102 = vpow.pop %v2101
  %v2103 = vadd.f32 %v2102, 1.0
  %v2104 = vrcp.pop %v2103
  %v2105 = vmul.f32 1.0, %v2104
  %v2106 = vmul.f32 %v2098, %v1452
  %v2107 = vmul.f32 %v2092, %v2099
  %v2108 = vadd.f32 %v2106, %v2107
  %v2109 = vtanh.pop %v2108
  %v2110 = vmul.f32 %v2105, %v2109
  %2111 = vmatprep.subr.mxu0 %v1456
  %2112 = vmatpush1.msra.mxu0 %v1455
  %2113 = vmatprep.subr.mxu0 %v1460
  %2114 = vmatpush1.msra.mxu0 %v1459
  %2115 = vmatprep.subr.mxu0 %v1464
  %2116 = vmatpush1.msra.mxu0 %v1463
  %2117 = vmatprep.subr.mxu0 %v1468
  %2118 = vmatpush1.msra.mxu0 %v1467
  %2119 = vmatprep.subr.mxu0 %v1472
  %2120 = vmatpush1.msra.mxu0 %v1471
  %2121 = vmatprep.subr.mxu0 %v1476
  %2122 = vmatpush1.msra.mxu0 %v1475
  %2123 = vmatprep.subr.mxu0 %v1480
  %2124 = vmatpush1.msra.mxu0 %v1479
  %2125 = vmatprep.subr.mxu0 %v1484
  %2126 = vmatpush1.msra.mxu0 %v1483
  %2127 = vmatprep.subr.mxu0 %v1488
  %2128 = vmatpush1.msra.mxu0 %v1487
  %2129 = vmatprep.subr.mxu0 %v1492
  %2130 = vmatpush1.msra.mxu0 %v1491
  %2131 = vmatprep.subr.mxu0 %v1496
  %2132 = vmatpush1.msra.mxu0 %v1495
  %2133 = vmatprep.subr.mxu0 %v1500
  %2134 = vmatpush1.msra.mxu0 %v1499
  %2135 = vmatprep.subr.mxu0 %v1504
  %2136 = vmatpush1.msra.mxu0 %v1503
  %2137 = vmatprep.subr.mxu0 %v1508
  %2138 = vmatpush1.msra.mxu0 %v1507
  %2139 = vmatprep.subr.mxu0 %v1512
  %2140 = vmatpush1.msra.mxu0 %v1511
  %2141 = vmatprep.subr.mxu0 %v1516
  %2142 = vmatpush1.msra.mxu0 %v1515
  %2143 = vmatprep.subr.mxu0 %v1520
  %2144 = vmatpush1.msra.mxu0 %v1519
  %2145 = vmatprep.subr.mxu0 %v1524
  %2146 = vmatpush1.msra.mxu0 %v1523
  %2147 = vmatprep.subr.mxu0 %v1528
  %2148 = vmatpush1.msra.mxu0 %v1527
  %2149 = vmatprep.subr.mxu0 %v1532
  %2150 = vmatpush1.msra.mxu0 %v1531
  %2151 = vmatprep.subr.mxu0 %v1536
  %2152 = vmatpush1.msra.mxu0 %v1535
  %2153 = vmatprep.subr.mxu0 %v1540
  %2154 = vmatpush1.msra.mxu0 %v1539
  %2155 = vmatprep.subr.mxu0 %v1544
  %2156 = vmatpush1.msra.mxu0 %v1543
  %2157 = vmatprep.subr.mxu0 %v1548
  %2158 = vmatpush1.msra.mxu0 %v1547
  %2159 = vmatprep.subr.mxu0 %v1552
  %2160 = vmatpush1.msra.mxu0 %v1551
  %2161 = vmatprep.subr.mxu0 %v1556
  %2162 = vmatpush1.msra.mxu0 %v1555
  %2163 = vmatprep.subr.mxu0 %v1560
  %2164 = vmatpush1.msra.mxu0 %v1559
  %2165 = vmatprep.subr.mxu0 %v1564
  %2166 = vmatpush1.msra.mxu0 %v1563
  %2167 = vmatprep.subr.mxu0 %v1568
  %2168 = vmatpush1.msra.mxu0 %v1567
  %2169 = vmatprep.subr.mxu0 %v1572
  %2170 = vmatpush1.msra.mxu0 %v1571
  %2171 = vmatprep.subr.mxu0 %v1576
  %2172 = vmatpush1.msra.mxu0 %v1575
  %2173 = vmatprep.subr.mxu0 %v1580
  %2174 = vmatpush1.msra.mxu0 %v1579
  %2175 = vmatprep.mubr.f32.mxu0 %v1770
  %2176 = vmatmul.mubr.f32.gmra.mrb[0].mxu0 %v1454
  %v2177 = vpop.f32.mrb[0].mxu0
  %v2178 = vadd.f32 %v1588, %v2177
  %v2179 = vpop.f32.mrb[0].mxu0
  %v2180 = vadd.f32 %v1592, %v2179
  %2181 = vdwg.mxu0
  %2182 = vmatprep.subr.mxu0 %v1458
  %2183 = vmatpush1.msra.mxu0 %v1457
  %2184 = vmatprep.subr.mxu0 %v1462
  %2185 = vmatpush1.msra.mxu0 %v1461
  %2186 = vmatprep.subr.mxu0 %v1466
  %2187 = vmatpush1.msra.mxu0 %v1465
  %2188 = vmatprep.subr.mxu0 %v1470
  %2189 = vmatpush1.msra.mxu0 %v1469
  %2190 = vmatprep.subr.mxu0 %v1474
  %2191 = vmatpush1.msra.mxu0 %v1473
  %2192 = vmatprep.subr.mxu0 %v1478
  %2193 = vmatpush1.msra.mxu0 %v1477
  %2194 = vmatprep.subr.mxu0 %v1482
  %2195 = vmatpush1.msra.mxu0 %v1481
  %2196 = vmatprep.subr.mxu0 %v1486
  %2197 = vmatpush1.msra.mxu0 %v1485
  %2198 = vmatprep.subr.mxu0 %v1490
  %2199 = vmatpush1.msra.mxu0 %v1489
  %2200 = vmatprep.subr.mxu0 %v1494
  %2201 = vmatpush1.msra.mxu0 %v1493
  %2202 = vmatprep.subr.mxu0 %v1498
  %2203 = vmatpush1.msra.mxu0 %v1497
  %2204 = vmatprep.subr.mxu0 %v1502
  %2205 = vmatpush1.msra.mxu0 %v1501
  %2206 = vmatprep.subr.mxu0 %v1506
  %2207 = vmatpush1.msra.mxu0 %v1505
  %2208 = vmatprep.subr.mxu0 %v1510
  %2209 = vmatpush1.msra.mxu0 %v1509
  %2210 = vmatprep.subr.mxu0 %v1514
  %2211 = vmatpush1.msra.mxu0 %v1513
  %2212 = vmatprep.subr.mxu0 %v1518
  %2213 = vmatpush1.msra.mxu0 %v1517
  %2214 = vmatprep.subr.mxu0 %v1522
  %2215 = vmatpush1.msra.mxu0 %v1521
  %2216 = vmatprep.subr.mxu0 %v1526
  %2217 = vmatpush1.msra.mxu0 %v1525
  %2218 = vmatprep.subr.mxu0 %v1530
  %2219 = vmatpush1.msra.mxu0 %v1529
  %2220 = vmatprep.subr.mxu0 %v1534
  %2221 = vmatpush1.msra.mxu0 %v1533
  %2222 = vmatprep.subr.mxu0 %v1538
  %2223 = vmatpush1.msra.mxu0 %v1537
  %2224 = vmatprep.subr.mxu0 %v1542
  %2225 = vmatpush1.msra.mxu0 %v1541
  %2226 = vmatprep.subr.mxu0 %v1546
  %2227 = vmatpush1.msra.mxu0 %v1545
  %2228 = vmatprep.subr.mxu0 %v1550
  %2229 = vmatpush1.msra.mxu0 %v1549
  %2230 = vmatprep.subr.mxu0 %v1554
  %2231 = vmatpush1.msra.mxu0 %v1553
  %2232 = vmatprep.subr.mxu0 %v1558
  %2233 = vmatpush1.msra.mxu0 %v1557
  %2234 = vmatprep.subr.mxu0 %v1562
  %2235 = vmatpush1.msra.mxu0 %v1561
  %2236 = vmatprep.subr.mxu0 %v1566
  %2237 = vmatpush1.msra.mxu0 %v1565
  %2238 = vmatprep.subr.mxu0 %v1570
  %2239 = vmatpush1.msra.mxu0 %v1569
  %2240 = vmatprep.subr.mxu0 %v1574
  %2241 = vmatpush1.msra.mxu0 %v1573
  %2242 = vmatprep.subr.mxu0 %v1578
  %2243 = vmatpush1.msra.mxu0 %v1577
  %2244 = vmatprep.subr.mxu0 %v1582
  %2245 = vmatpush1.msra.mxu0 %v1581
  %2246 = vmatprep.mubr.f32.mxu0 %v1770
  %2247 = vmatmul.mubr.f32.gmra.mrb[0].mxu0 %v1454
  %v2248 = vpop.f32.mrb[0].mxu0
  %v2249 = vadd.f32 %v1596, %v2248
  %v2250 = vpop.f32.mrb[0].mxu0
  %v2251 = vadd.f32 %v1600, %v2250
  %2252 = vdwg.mxu0
  %v2253 = vxor.u32 %v2178, 2147483648
  %v2254 = vmul.f32 %v2253, 1.442695
  %v2255 = vpow.pop %v2254
  %v2256 = vadd.f32 %v2255, 1.0
  %v2257 = vrcp.pop %v2256
  %v2258 = vmul.f32 1.0, %v2257
  %v2259 = vxor.u32 %v2180, 2147483648
  %v2260 = vmul.f32 %v2259, 1.442695
  %v2261 = vpow.pop %v2260
  %v2262 = vadd.f32 %v2261, 1.0
  %v2263 = vrcp.pop %v2262
  %v2264 = vmul.f32 1.0, %v2263
  %v2265 = vtanh.pop %v2249
  %v2266 = vxor.u32 %v2251, 2147483648
  %v2267 = vmul.f32 %v2266, 1.442695
  %v2268 = vpow.pop %v2267
  %v2269 = vadd.f32 %v2268, 1.0
  %v2270 = vrcp.pop %v2269
  %v2271 = vmul.f32 1.0, %v2270
  %v2272 = vmul.f32 %v2264, %v1768
  %v2273 = vmul.f32 %v2258, %v2265
  %v2274 = vadd.f32 %v2272, %v2273
  %v2275 = vtanh.pop %v2274
  %v2276 = vmul.f32 %v2271, %v2275
  %v2277 = vld [vmem:[#allocation2 + $0x80] sm:$0xff]
  %v2278 = vld [vmem:[#allocation2 + $0x88] sm:$0xff]
  %v2279 = vld [vmem:[#allocation2 + $0x90] sm:$0xff]
  %v2280 = vld [vmem:[#allocation2 + $0x98] sm:$0xff]
  %2281 = vmatprep.subr.mxu0 %v392
  %2282 = vmatpush1.msra.mxu0 %v391
  %2283 = vmatprep.subr.mxu0 %v396
  %2284 = vmatpush1.msra.mxu0 %v395
  %2285 = vmatprep.subr.mxu0 %v400
  %2286 = vmatpush1.msra.mxu0 %v399
  %2287 = vmatprep.subr.mxu0 %v404
  %2288 = vmatpush1.msra.mxu0 %v403
  %2289 = vmatprep.subr.mxu0 %v408
  %2290 = vmatpush1.msra.mxu0 %v407
  %2291 = vmatprep.subr.mxu0 %v412
  %2292 = vmatpush1.msra.mxu0 %v411
  %2293 = vmatprep.subr.mxu0 %v416
  %2294 = vmatpush1.msra.mxu0 %v415
  %2295 = vmatprep.subr.mxu0 %v420
  %2296 = vmatpush1.msra.mxu0 %v419
  %2297 = vmatprep.subr.mxu0 %v424
  %2298 = vmatpush1.msra.mxu0 %v423
  %2299 = vmatprep.subr.mxu0 %v428
  %2300 = vmatpush1.msra.mxu0 %v427
  %2301 = vmatprep.subr.mxu0 %v432
  %2302 = vmatpush1.msra.mxu0 %v431
  %2303 = vmatprep.subr.mxu0 %v436
  %2304 = vmatpush1.msra.mxu0 %v435
  %2305 = vmatprep.subr.mxu0 %v440
  %2306 = vmatpush1.msra.mxu0 %v439
  %2307 = vmatprep.subr.mxu0 %v444
  %2308 = vmatpush1.msra.mxu0 %v443
  %2309 = vmatprep.subr.mxu0 %v448
  %2310 = vmatpush1.msra.mxu0 %v447
  %2311 = vmatprep.subr.mxu0 %v452
  %2312 = vmatpush1.msra.mxu0 %v451
  %2313 = vmatprep.subr.mxu0 0.0
  %2314 = vmatpush1.msra.mxu0 0.0
  %2315 = vmatprep.subr.mxu0 0.0
  %2316 = vmatpush1.msra.mxu0 0.0
  %2317 = vmatprep.subr.mxu0 0.0
  %2318 = vmatpush1.msra.mxu0 0.0
  %2319 = vmatprep.subr.mxu0 0.0
  %2320 = vmatpush1.msra.mxu0 0.0
  %2321 = vmatprep.subr.mxu0 0.0
  %2322 = vmatpush1.msra.mxu0 0.0
  %2323 = vmatprep.subr.mxu0 0.0
  %2324 = vmatpush1.msra.mxu0 0.0
  %2325 = vmatprep.subr.mxu0 0.0
  %2326 = vmatpush1.msra.mxu0 0.0
  %2327 = vmatprep.subr.mxu0 0.0
  %2328 = vmatpush1.msra.mxu0 0.0
  %2329 = vmatprep.subr.mxu0 0.0
  %2330 = vmatpush1.msra.mxu0 0.0
  %2331 = vmatprep.subr.mxu0 0.0
  %2332 = vmatpush1.msra.mxu0 0.0
  %2333 = vmatprep.subr.mxu0 0.0
  %2334 = vmatpush1.msra.mxu0 0.0
  %2335 = vmatprep.subr.mxu0 0.0
  %2336 = vmatpush1.msra.mxu0 0.0
  %2337 = vmatprep.subr.mxu0 0.0
  %2338 = vmatpush1.msra.mxu0 0.0
  %2339 = vmatprep.subr.mxu0 0.0
  %2340 = vmatpush1.msra.mxu0 0.0
  %2341 = vmatprep.subr.mxu0 0.0
  %2342 = vmatpush1.msra.mxu0 0.0
  %2343 = vmatprep.subr.mxu0 0.0
  %2344 = vmatpush1.msra.mxu0 0.0
  %2345 = vmatprep.mubr.f32.mxu0 0.0
  %2346 = vmatmul.mubr.f32.gmra.mrb[0].mxu0 %v1944
  %v2347 = vpop.f32.mrb[0].mxu0
  %v2348 = vadd.f32 0.0, %v2347
  %v2349 = vpop.f32.mrb[0].mxu0
  %v2350 = vadd.f32 0.0, %v2349
  %2351 = vdwg.mxu0
  %2352 = vmatprep.subr.mxu0 %v394
  %2353 = vmatpush1.msra.mxu0 %v393
  %2354 = vmatprep.subr.mxu0 %v398
  %2355 = vmatpush1.msra.mxu0 %v397
  %2356 = vmatprep.subr.mxu0 %v402
  %2357 = vmatpush1.msra.mxu0 %v401
  %2358 = vmatprep.subr.mxu0 %v406
  %2359 = vmatpush1.msra.mxu0 %v405
  %2360 = vmatprep.subr.mxu0 %v410
  %2361 = vmatpush1.msra.mxu0 %v409
  %2362 = vmatprep.subr.mxu0 %v414
  %2363 = vmatpush1.msra.mxu0 %v413
  %2364 = vmatprep.subr.mxu0 %v418
  %2365 = vmatpush1.msra.mxu0 %v417
  %2366 = vmatprep.subr.mxu0 %v422
  %2367 = vmatpush1.msra.mxu0 %v421
  %2368 = vmatprep.subr.mxu0 %v426
  %2369 = vmatpush1.msra.mxu0 %v425
  %2370 = vmatprep.subr.mxu0 %v430
  %2371 = vmatpush1.msra.mxu0 %v429
  %2372 = vmatprep.subr.mxu0 %v434
  %2373 = vmatpush1.msra.mxu0 %v433
  %2374 = vmatprep.subr.mxu0 %v438
  %2375 = vmatpush1.msra.mxu0 %v437
  %2376 = vmatprep.subr.mxu0 %v442
  %2377 = vmatpush1.msra.mxu0 %v441
  %2378 = vmatprep.subr.mxu0 %v446
  %2379 = vmatpush1.msra.mxu0 %v445
  %2380 = vmatprep.subr.mxu0 %v450
  %2381 = vmatpush1.msra.mxu0 %v449
  %2382 = vmatprep.subr.mxu0 %v454
  %2383 = vmatpush1.msra.mxu0 %v453
  %2384 = vmatprep.subr.mxu0 0.0
  %2385 = vmatpush1.msra.mxu0 0.0
  %2386 = vmatprep.subr.mxu0 0.0
  %2387 = vmatpush1.msra.mxu0 0.0
  %2388 = vmatprep.subr.mxu0 0.0
  %2389 = vmatpush1.msra.mxu0 0.0
  %2390 = vmatprep.subr.mxu0 0.0
  %2391 = vmatpush1.msra.mxu0 0.0
  %2392 = vmatprep.subr.mxu0 0.0
  %2393 = vmatpush1.msra.mxu0 0.0
  %2394 = vmatprep.subr.mxu0 0.0
  %2395 = vmatpush1.msra.mxu0 0.0
  %2396 = vmatprep.subr.mxu0 0.0
  %2397 = vmatpush1.msra.mxu0 0.0
  %2398 = vmatprep.subr.mxu0 0.0
  %2399 = vmatpush1.msra.mxu0 0.0
  %2400 = vmatprep.subr.mxu0 0.0
  %2401 = vmatpush1.msra.mxu0 0.0
  %2402 = vmatprep.subr.mxu0 0.0
  %2403 = vmatpush1.msra.mxu0 0.0
  %2404 = vmatprep.subr.mxu0 0.0
  %2405 = vmatpush1.msra.mxu0 0.0
  %2406 = vmatprep.subr.mxu0 0.0
  %2407 = vmatpush1.msra.mxu0 0.0
  %2408 = vmatprep.subr.mxu0 0.0
  %2409 = vmatpush1.msra.mxu0 0.0
  %2410 = vmatprep.subr.mxu0 0.0
  %2411 = vmatpush1.msra.mxu0 0.0
  %2412 = vmatprep.subr.mxu0 0.0
  %2413 = vmatpush1.msra.mxu0 0.0
  %2414 = vmatprep.subr.mxu0 0.0
  %2415 = vmatpush1.msra.mxu0 0.0
  %2416 = vmatprep.mubr.f32.mxu0 0.0
  %2417 = vmatmul.mubr.f32.gmra.mrb[0].mxu0 %v1944
  %v2418 = vpop.f32.mrb[0].mxu0
  %v2419 = vadd.f32 0.0, %v2418
  %v2420 = vpop.f32.mrb[0].mxu0
  %v2421 = vadd.f32 0.0, %v2420
  %2422 = vdwg.mxu0
  %v2423 = vadd.f32 %v2277, %v2348
  %v2424 = vadd.f32 %v2278, %v2350
  %v2425 = vadd.f32 %v2279, %v2419
  %v2426 = vadd.f32 %v2280, %v2421
  %v2427 = vxor.u32 %v2423, 2147483648
  %v2428 = vmul.f32 %v2427, 1.442695
  %v2429 = vpow.pop %v2428
  %v2430 = vadd.f32 %v2429, 1.0
  %v2431 = vrcp.pop %v2430
  %v2432 = vmul.f32 1.0, %v2431
  %v2433 = vxor.u32 %v2424, 2147483648
  %v2434 = vmul.f32 %v2433, 1.442695
  %v2435 = vpow.pop %v2434
  %v2436 = vadd.f32 %v2435, 1.0
  %v2437 = vrcp.pop %v2436
  %v2438 = vmul.f32 1.0, %v2437
  %v2439 = vtanh.pop %v2425
  %v2440 = vxor.u32 %v2426, 2147483648
  %v2441 = vmul.f32 %v2440, 1.442695
  %v2442 = vpow.pop %v2441
  %v2443 = vadd.f32 %v2442, 1.0
  %v2444 = vrcp.pop %v2443
  %v2445 = vmul.f32 1.0, %v2444
  %v2446 = vmul.f32 %v2438, %v1942
  %v2447 = vmul.f32 %v2432, %v2439
  %v2448 = vadd.f32 %v2446, %v2447
  %v2449 = vtanh.pop %v2448
  %v2450 = vmul.f32 %v2445, %v2449
  %2451 = vmatprep.subr.mxu0 %v800
  %2452 = vmatpush1.msra.mxu0 %v799
  %2453 = vmatprep.subr.mxu0 %v804
  %2454 = vmatpush1.msra.mxu0 %v803
  %2455 = vmatprep.subr.mxu0 %v808
  %2456 = vmatpush1.msra.mxu0 %v807
  %2457 = vmatprep.subr.mxu0 %v812
  %2458 = vmatpush1.msra.mxu0 %v811
  %2459 = vmatprep.subr.mxu0 %v816
  %2460 = vmatpush1.msra.mxu0 %v815
  %2461 = vmatprep.subr.mxu0 %v820
  %2462 = vmatpush1.msra.mxu0 %v819
  %2463 = vmatprep.subr.mxu0 %v824
  %2464 = vmatpush1.msra.mxu0 %v823
  %2465 = vmatprep.subr.mxu0 %v828
  %2466 = vmatpush1.msra.mxu0 %v827
  %2467 = vmatprep.subr.mxu0 %v832
  %2468 = vmatpush1.msra.mxu0 %v831
  %2469 = vmatprep.subr.mxu0 %v836
  %2470 = vmatpush1.msra.mxu0 %v835
  %2471 = vmatprep.subr.mxu0 %v840
  %2472 = vmatpush1.msra.mxu0 %v839
  %2473 = vmatprep.subr.mxu0 %v844
  %2474 = vmatpush1.msra.mxu0 %v843
  %2475 = vmatprep.subr.mxu0 %v848
  %2476 = vmatpush1.msra.mxu0 %v847
  %2477 = vmatprep.subr.mxu0 %v852
  %2478 = vmatpush1.msra.mxu0 %v851
  %2479 = vmatprep.subr.mxu0 %v856
  %2480 = vmatpush1.msra.mxu0 %v855
  %2481 = vmatprep.subr.mxu0 %v860
  %2482 = vmatpush1.msra.mxu0 %v859
  %2483 = vmatprep.subr.mxu0 %v864
  %2484 = vmatpush1.msra.mxu0 %v863
  %2485 = vmatprep.subr.mxu0 %v868
  %2486 = vmatpush1.msra.mxu0 %v867
  %2487 = vmatprep.subr.mxu0 %v872
  %2488 = vmatpush1.msra.mxu0 %v871
  %2489 = vmatprep.subr.mxu0 %v876
  %2490 = vmatpush1.msra.mxu0 %v875
  %2491 = vmatprep.subr.mxu0 %v880
  %2492 = vmatpush1.msra.mxu0 %v879
  %2493 = vmatprep.subr.mxu0 %v884
  %2494 = vmatpush1.msra.mxu0 %v883
  %2495 = vmatprep.subr.mxu0 %v888
  %2496 = vmatpush1.msra.mxu0 %v887
  %2497 = vmatprep.subr.mxu0 %v892
  %2498 = vmatpush1.msra.mxu0 %v891
  %2499 = vmatprep.subr.mxu0 %v896
  %2500 = vmatpush1.msra.mxu0 %v895
  %2501 = vmatprep.subr.mxu0 %v900
  %2502 = vmatpush1.msra.mxu0 %v899
  %2503 = vmatprep.subr.mxu0 %v904
  %2504 = vmatpush1.msra.mxu0 %v903
  %2505 = vmatprep.subr.mxu0 %v908
  %2506 = vmatpush1.msra.mxu0 %v907
  %2507 = vmatprep.subr.mxu0 %v912
  %2508 = vmatpush1.msra.mxu0 %v911
  %2509 = vmatprep.subr.mxu0 %v916
  %2510 = vmatpush1.msra.mxu0 %v915
  %2511 = vmatprep.subr.mxu0 %v920
  %2512 = vmatpush1.msra.mxu0 %v919
  %2513 = vmatprep.subr.mxu0 %v924
  %2514 = vmatpush1.msra.mxu0 %v923
  %2515 = vmatprep.mubr.f32.mxu0 %v2110
  %2516 = vmatmul.mubr.f32.gmra.mrb[0].mxu0 %v1944
  %v2517 = vpop.f32.mrb[0].mxu0
  %v2518 = vadd.f32 %v932, %v2517
  %v2519 = vpop.f32.mrb[0].mxu0
  %v2520 = vadd.f32 %v936, %v2519
  %2521 = vdwg.mxu0
  %2522 = vmatprep.subr.mxu0 %v802
  %2523 = vmatpush1.msra.mxu0 %v801
  %2524 = vmatprep.subr.mxu0 %v806
  %2525 = vmatpush1.msra.mxu0 %v805
  %2526 = vmatprep.subr.mxu0 %v810
  %2527 = vmatpush1.msra.mxu0 %v809
  %2528 = vmatprep.subr.mxu0 %v814
  %2529 = vmatpush1.msra.mxu0 %v813
  %2530 = vmatprep.subr.mxu0 %v818
  %2531 = vmatpush1.msra.mxu0 %v817
  %2532 = vmatprep.subr.mxu0 %v822
  %2533 = vmatpush1.msra.mxu0 %v821
  %2534 = vmatprep.subr.mxu0 %v826
  %2535 = vmatpush1.msra.mxu0 %v825
  %2536 = vmatprep.subr.mxu0 %v830
  %2537 = vmatpush1.msra.mxu0 %v829
  %2538 = vmatprep.subr.mxu0 %v834
  %2539 = vmatpush1.msra.mxu0 %v833
  %2540 = vmatprep.subr.mxu0 %v838
  %2541 = vmatpush1.msra.mxu0 %v837
  %2542 = vmatprep.subr.mxu0 %v842
  %2543 = vmatpush1.msra.mxu0 %v841
  %2544 = vmatprep.subr.mxu0 %v846
  %2545 = vmatpush1.msra.mxu0 %v845
  %2546 = vmatprep.subr.mxu0 %v850
  %2547 = vmatpush1.msra.mxu0 %v849
  %2548 = vmatprep.subr.mxu0 %v854
  %2549 = vmatpush1.msra.mxu0 %v853
  %2550 = vmatprep.subr.mxu0 %v858
  %2551 = vmatpush1.msra.mxu0 %v857
  %2552 = vmatprep.subr.mxu0 %v862
  %2553 = vmatpush1.msra.mxu0 %v861
  %2554 = vmatprep.subr.mxu0 %v866
  %2555 = vmatpush1.msra.mxu0 %v865
  %2556 = vmatprep.subr.mxu0 %v870
  %2557 = vmatpush1.msra.mxu0 %v869
  %2558 = vmatprep.subr.mxu0 %v874
  %2559 = vmatpush1.msra.mxu0 %v873
  %2560 = vmatprep.subr.mxu0 %v878
  %2561 = vmatpush1.msra.mxu0 %v877
  %2562 = vmatprep.subr.mxu0 %v882
  %2563 = vmatpush1.msra.mxu0 %v881
  %2564 = vmatprep.subr.mxu0 %v886
  %2565 = vmatpush1.msra.mxu0 %v885
  %2566 = vmatprep.subr.mxu0 %v890
  %2567 = vmatpush1.msra.mxu0 %v889
  %2568 = vmatprep.subr.mxu0 %v894
  %2569 = vmatpush1.msra.mxu0 %v893
  %2570 = vmatprep.subr.mxu0 %v898
  %2571 = vmatpush1.msra.mxu0 %v897
  %2572 = vmatprep.subr.mxu0 %v902
  %2573 = vmatpush1.msra.mxu0 %v901
  %2574 = vmatprep.subr.mxu0 %v906
  %2575 = vmatpush1.msra.mxu0 %v905
  %2576 = vmatprep.subr.mxu0 %v910
  %2577 = vmatpush1.msra.mxu0 %v909
  %2578 = vmatprep.subr.mxu0 %v914
  %2579 = vmatpush1.msra.mxu0 %v913
  %2580 = vmatprep.subr.mxu0 %v918
  %2581 = vmatpush1.msra.mxu0 %v917
  %2582 = vmatprep.subr.mxu0 %v922
  %2583 = vmatpush1.msra.mxu0 %v921
  %2584 = vmatprep.subr.mxu0 %v926
  %2585 = vmatpush1.msra.mxu0 %v925
  %2586 = vmatprep.mubr.f32.mxu0 %v2110
  %2587 = vmatmul.mubr.f32.gmra.mrb[0].mxu0 %v1944
  %v2588 = vpop.f32.mrb[0].mxu0
  %v2589 = vadd.f32 %v940, %v2588
  %v2590 = vpop.f32.mrb[0].mxu0
  %v2591 = vadd.f32 %v944, %v2590
  %2592 = vdwg.mxu0
  %v2593 = vxor.u32 %v2518, 2147483648
  %v2594 = vmul.f32 %v2593, 1.442695
  %v2595 = vpow.pop %v2594
  %v2596 = vadd.f32 %v2595, 1.0
  %v2597 = vrcp.pop %v2596
  %v2598 = vmul.f32 1.0, %v2597
  %v2599 = vxor.u32 %v2520, 2147483648
  %v2600 = vmul.f32 %v2599, 1.442695
  %v2601 = vpow.pop %v2600
  %v2602 = vadd.f32 %v2601, 1.0
  %v2603 = vrcp.pop %v2602
  %v2604 = vmul.f32 1.0, %v2603
  %v2605 = vtanh.pop %v2589
  %v2606 = vxor.u32 %v2591, 2147483648
  %v2607 = vmul.f32 %v2606, 1.442695
  %v2608 = vpow.pop %v2607
  %v2609 = vadd.f32 %v2608, 1.0
  %v2610 = vrcp.pop %v2609
  %v2611 = vmul.f32 1.0, %v2610
  %v2612 = vmul.f32 %v2604, %v2108
  %v2613 = vmul.f32 %v2598, %v2605
  %v2614 = vadd.f32 %v2612, %v2613
  %v2615 = vtanh.pop %v2614
  %v2616 = vmul.f32 %v2611, %v2615
  %2617 = vmatprep.subr.mxu0 %v1456
  %2618 = vmatpush1.msra.mxu0 %v1455
  %2619 = vmatprep.subr.mxu0 %v1460
  %2620 = vmatpush1.msra.mxu0 %v1459
  %2621 = vmatprep.subr.mxu0 %v1464
  %2622 = vmatpush1.msra.mxu0 %v1463
  %2623 = vmatprep.subr.mxu0 %v1468
  %2624 = vmatpush1.msra.mxu0 %v1467
  %2625 = vmatprep.subr.mxu0 %v1472
  %2626 = vmatpush1.msra.mxu0 %v1471
  %2627 = vmatprep.subr.mxu0 %v1476
  %2628 = vmatpush1.msra.mxu0 %v1475
  %2629 = vmatprep.subr.mxu0 %v1480
  %2630 = vmatpush1.msra.mxu0 %v1479
  %2631 = vmatprep.subr.mxu0 %v1484
  %2632 = vmatpush1.msra.mxu0 %v1483
  %2633 = vmatprep.subr.mxu0 %v1488
  %2634 = vmatpush1.msra.mxu0 %v1487
  %2635 = vmatprep.subr.mxu0 %v1492
  %2636 = vmatpush1.msra.mxu0 %v1491
  %2637 = vmatprep.subr.mxu0 %v1496
  %2638 = vmatpush1.msra.mxu0 %v1495
  %2639 = vmatprep.subr.mxu0 %v1500
  %2640 = vmatpush1.msra.mxu0 %v1499
  %2641 = vmatprep.subr.mxu0 %v1504
  %2642 = vmatpush1.msra.mxu0 %v1503
  %2643 = vmatprep.subr.mxu0 %v1508
  %2644 = vmatpush1.msra.mxu0 %v1507
  %2645 = vmatprep.subr.mxu0 %v1512
  %2646 = vmatpush1.msra.mxu0 %v1511
  %2647 = vmatprep.subr.mxu0 %v1516
  %2648 = vmatpush1.msra.mxu0 %v1515
  %2649 = vmatprep.subr.mxu0 %v1520
  %2650 = vmatpush1.msra.mxu0 %v1519
  %2651 = vmatprep.subr.mxu0 %v1524
  %2652 = vmatpush1.msra.mxu0 %v1523
  %2653 = vmatprep.subr.mxu0 %v1528
  %2654 = vmatpush1.msra.mxu0 %v1527
  %2655 = vmatprep.subr.mxu0 %v1532
  %2656 = vmatpush1.msra.mxu0 %v1531
  %2657 = vmatprep.subr.mxu0 %v1536
  %2658 = vmatpush1.msra.mxu0 %v1535
  %2659 = vmatprep.subr.mxu0 %v1540
  %2660 = vmatpush1.msra.mxu0 %v1539
  %2661 = vmatprep.subr.mxu0 %v1544
  %2662 = vmatpush1.msra.mxu0 %v1543
  %2663 = vmatprep.subr.mxu0 %v1548
  %2664 = vmatpush1.msra.mxu0 %v1547
  %2665 = vmatprep.subr.mxu0 %v1552
  %2666 = vmatpush1.msra.mxu0 %v1551
  %2667 = vmatprep.subr.mxu0 %v1556
  %2668 = vmatpush1.msra.mxu0 %v1555
  %2669 = vmatprep.subr.mxu0 %v1560
  %2670 = vmatpush1.msra.mxu0 %v1559
  %2671 = vmatprep.subr.mxu0 %v1564
  %2672 = vmatpush1.msra.mxu0 %v1563
  %2673 = vmatprep.subr.mxu0 %v1568
  %2674 = vmatpush1.msra.mxu0 %v1567
  %2675 = vmatprep.subr.mxu0 %v1572
  %2676 = vmatpush1.msra.mxu0 %v1571
  %2677 = vmatprep.subr.mxu0 %v1576
  %2678 = vmatpush1.msra.mxu0 %v1575
  %2679 = vmatprep.subr.mxu0 %v1580
  %2680 = vmatpush1.msra.mxu0 %v1579
  %2681 = vmatprep.mubr.f32.mxu0 %v2276
  %2682 = vmatmul.mubr.f32.gmra.mrb[0].mxu0 %v2110
  %v2683 = vpop.f32.mrb[0].mxu0
  %v2684 = vadd.f32 %v1588, %v2683
  %v2685 = vpop.f32.mrb[0].mxu0
  %v2686 = vadd.f32 %v1592, %v2685
  %2687 = vdwg.mxu0
  %2688 = vmatprep.subr.mxu0 %v1458
  %2689 = vmatpush1.msra.mxu0 %v1457
  %2690 = vmatprep.subr.mxu0 %v1462
  %2691 = vmatpush1.msra.mxu0 %v1461
  %2692 = vmatprep.subr.mxu0 %v1466
  %2693 = vmatpush1.msra.mxu0 %v1465
  %2694 = vmatprep.subr.mxu0 %v1470
  %2695 = vmatpush1.msra.mxu0 %v1469
  %2696 = vmatprep.subr.mxu0 %v1474
  %2697 = vmatpush1.msra.mxu0 %v1473
  %2698 = vmatprep.subr.mxu0 %v1478
  %2699 = vmatpush1.msra.mxu0 %v1477
  %2700 = vmatprep.subr.mxu0 %v1482
  %2701 = vmatpush1.msra.mxu0 %v1481
  %2702 = vmatprep.subr.mxu0 %v1486
  %2703 = vmatpush1.msra.mxu0 %v1485
  %2704 = vmatprep.subr.mxu0 %v1490
  %2705 = vmatpush1.msra.mxu0 %v1489
  %2706 = vmatprep.subr.mxu0 %v1494
  %2707 = vmatpush1.msra.mxu0 %v1493
  %2708 = vmatprep.subr.mxu0 %v1498
  %2709 = vmatpush1.msra.mxu0 %v1497
  %2710 = vmatprep.subr.mxu0 %v1502
  %2711 = vmatpush1.msra.mxu0 %v1501
  %2712 = vmatprep.subr.mxu0 %v1506
  %2713 = vmatpush1.msra.mxu0 %v1505
  %2714 = vmatprep.subr.mxu0 %v1510
  %2715 = vmatpush1.msra.mxu0 %v1509
  %2716 = vmatprep.subr.mxu0 %v1514
  %2717 = vmatpush1.msra.mxu0 %v1513
  %2718 = vmatprep.subr.mxu0 %v1518
  %2719 = vmatpush1.msra.mxu0 %v1517
  %2720 = vmatprep.subr.mxu0 %v1522
  %2721 = vmatpush1.msra.mxu0 %v1521
  %2722 = vmatprep.subr.mxu0 %v1526
  %2723 = vmatpush1.msra.mxu0 %v1525
  %2724 = vmatprep.subr.mxu0 %v1530
  %2725 = vmatpush1.msra.mxu0 %v1529
  %2726 = vmatprep.subr.mxu0 %v1534
  %2727 = vmatpush1.msra.mxu0 %v1533
  %2728 = vmatprep.subr.mxu0 %v1538
  %2729 = vmatpush1.msra.mxu0 %v1537
  %2730 = vmatprep.subr.mxu0 %v1542
  %2731 = vmatpush1.msra.mxu0 %v1541
  %2732 = vmatprep.subr.mxu0 %v1546
  %2733 = vmatpush1.msra.mxu0 %v1545
  %2734 = vmatprep.subr.mxu0 %v1550
  %2735 = vmatpush1.msra.mxu0 %v1549
  %2736 = vmatprep.subr.mxu0 %v1554
  %2737 = vmatpush1.msra.mxu0 %v1553
  %2738 = vmatprep.subr.mxu0 %v1558
  %2739 = vmatpush1.msra.mxu0 %v1557
  %2740 = vmatprep.subr.mxu0 %v1562
  %2741 = vmatpush1.msra.mxu0 %v1561
  %2742 = vmatprep.subr.mxu0 %v1566
  %2743 = vmatpush1.msra.mxu0 %v1565
  %2744 = vmatprep.subr.mxu0 %v1570
  %2745 = vmatpush1.msra.mxu0 %v1569
  %2746 = vmatprep.subr.mxu0 %v1574
  %2747 = vmatpush1.msra.mxu0 %v1573
  %2748 = vmatprep.subr.mxu0 %v1578
  %2749 = vmatpush1.msra.mxu0 %v1577
  %2750 = vmatprep.subr.mxu0 %v1582
  %2751 = vmatpush1.msra.mxu0 %v1581
  %2752 = vmatprep.mubr.f32.mxu0 %v2276
  %2753 = vmatmul.mubr.f32.gmra.mrb[0].mxu0 %v2110
  %v2754 = vpop.f32.mrb[0].mxu0
  %v2755 = vadd.f32 %v1596, %v2754
  %v2756 = vpop.f32.mrb[0].mxu0
  %v2757 = vadd.f32 %v1600, %v2756
  %2758 = vdwg.mxu0
  %v2759 = vxor.u32 %v2684, 2147483648
  %v2760 = vmul.f32 %v2759, 1.442695
  %v2761 = vpow.pop %v2760
  %v2762 = vadd.f32 %v2761, 1.0
  %v2763 = vrcp.pop %v2762
  %v2764 = vmul.f32 1.0, %v2763
  %v2765 = vxor.u32 %v2686, 2147483648
  %v2766 = vmul.f32 %v2765, 1.442695
  %v2767 = vpow.pop %v2766
  %v2768 = vadd.f32 %v2767, 1.0
  %v2769 = vrcp.pop %v2768
  %v2770 = vmul.f32 1.0, %v2769
  %v2771 = vtanh.pop %v2755
  %v2772 = vxor.u32 %v2757, 2147483648
  %v2773 = vmul.f32 %v2772, 1.442695
  %v2774 = vpow.pop %v2773
  %v2775 = vadd.f32 %v2774, 1.0
  %v2776 = vrcp.pop %v2775
  %v2777 = vmul.f32 1.0, %v2776
  %v2778 = vmul.f32 %v2770, %v2274
  %v2779 = vmul.f32 %v2764, %v2771
  %v2780 = vadd.f32 %v2778, %v2779
  %v2781 = vtanh.pop %v2780
  %v2782 = vmul.f32 %v2777, %v2781
  %v2783 = vld [vmem:[#allocation2 + $0xa0] sm:$0xff]
  %v2784 = vld [vmem:[#allocation2 + $0xa8] sm:$0xff]
  %v2785 = vld [vmem:[#allocation2 + $0xb0] sm:$0xff]
  %v2786 = vld [vmem:[#allocation2 + $0xb8] sm:$0xff]
  %2787 = vmatprep.subr.mxu0 %v392
  %2788 = vmatpush1.msra.mxu0 %v391
  %2789 = vmatprep.subr.mxu0 %v396
  %2790 = vmatpush1.msra.mxu0 %v395
  %2791 = vmatprep.subr.mxu0 %v400
  %2792 = vmatpush1.msra.mxu0 %v399
  %2793 = vmatprep.subr.mxu0 %v404
  %2794 = vmatpush1.msra.mxu0 %v403
  %2795 = vmatprep.subr.mxu0 %v408
  %2796 = vmatpush1.msra.mxu0 %v407
  %2797 = vmatprep.subr.mxu0 %v412
  %2798 = vmatpush1.msra.mxu0 %v411
  %2799 = vmatprep.subr.mxu0 %v416
  %2800 = vmatpush1.msra.mxu0 %v415
  %2801 = vmatprep.subr.mxu0 %v420
  %2802 = vmatpush1.msra.mxu0 %v419
  %2803 = vmatprep.subr.mxu0 %v424
  %2804 = vmatpush1.msra.mxu0 %v423
  %2805 = vmatprep.subr.mxu0 %v428
  %2806 = vmatpush1.msra.mxu0 %v427
  %2807 = vmatprep.subr.mxu0 %v432
  %2808 = vmatpush1.msra.mxu0 %v431
  %2809 = vmatprep.subr.mxu0 %v436
  %2810 = vmatpush1.msra.mxu0 %v435
  %2811 = vmatprep.subr.mxu0 %v440
  %2812 = vmatpush1.msra.mxu0 %v439
  %2813 = vmatprep.subr.mxu0 %v444
  %2814 = vmatpush1.msra.mxu0 %v443
  %2815 = vmatprep.subr.mxu0 %v448
  %2816 = vmatpush1.msra.mxu0 %v447
  %2817 = vmatprep.subr.mxu0 %v452
  %2818 = vmatpush1.msra.mxu0 %v451
  %2819 = vmatprep.subr.mxu0 0.0
  %2820 = vmatpush1.msra.mxu0 0.0
  %2821 = vmatprep.subr.mxu0 0.0
  %2822 = vmatpush1.msra.mxu0 0.0
  %2823 = vmatprep.subr.mxu0 0.0
  %2824 = vmatpush1.msra.mxu0 0.0
  %2825 = vmatprep.subr.mxu0 0.0
  %2826 = vmatpush1.msra.mxu0 0.0
  %2827 = vmatprep.subr.mxu0 0.0
  %2828 = vmatpush1.msra.mxu0 0.0
  %2829 = vmatprep.subr.mxu0 0.0
  %2830 = vmatpush1.msra.mxu0 0.0
  %2831 = vmatprep.subr.mxu0 0.0
  %2832 = vmatpush1.msra.mxu0 0.0
  %2833 = vmatprep.subr.mxu0 0.0
  %2834 = vmatpush1.msra.mxu0 0.0
  %2835 = vmatprep.subr.mxu0 0.0
  %2836 = vmatpush1.msra.mxu0 0.0
  %2837 = vmatprep.subr.mxu0 0.0
  %2838 = vmatpush1.msra.mxu0 0.0
  %2839 = vmatprep.subr.mxu0 0.0
  %2840 = vmatpush1.msra.mxu0 0.0
  %2841 = vmatprep.subr.mxu0 0.0
  %2842 = vmatpush1.msra.mxu0 0.0
  %2843 = vmatprep.subr.mxu0 0.0
  %2844 = vmatpush1.msra.mxu0 0.0
  %2845 = vmatprep.subr.mxu0 0.0
  %2846 = vmatpush1.msra.mxu0 0.0
  %2847 = vmatprep.subr.mxu0 0.0
  %2848 = vmatpush1.msra.mxu0 0.0
  %2849 = vmatprep.subr.mxu0 0.0
  %2850 = vmatpush1.msra.mxu0 0.0
  %2851 = vmatprep.mubr.f32.mxu0 0.0
  %2852 = vmatmul.mubr.f32.gmra.mrb[0].mxu0 %v2450
  %v2853 = vpop.f32.mrb[0].mxu0
  %v2854 = vadd.f32 0.0, %v2853
  %v2855 = vpop.f32.mrb[0].mxu0
  %v2856 = vadd.f32 0.0, %v2855
  %2857 = vdwg.mxu0
  %2858 = vmatprep.subr.mxu0 %v394
  %2859 = vmatpush1.msra.mxu0 %v393
  %2860 = vmatprep.subr.mxu0 %v398
  %2861 = vmatpush1.msra.mxu0 %v397
  %2862 = vmatprep.subr.mxu0 %v402
  %2863 = vmatpush1.msra.mxu0 %v401
  %2864 = vmatprep.subr.mxu0 %v406
  %2865 = vmatpush1.msra.mxu0 %v405
  %2866 = vmatprep.subr.mxu0 %v410
  %2867 = vmatpush1.msra.mxu0 %v409
  %2868 = vmatprep.subr.mxu0 %v414
  %2869 = vmatpush1.msra.mxu0 %v413
  %2870 = vmatprep.subr.mxu0 %v418
  %2871 = vmatpush1.msra.mxu0 %v417
  %2872 = vmatprep.subr.mxu0 %v422
  %2873 = vmatpush1.msra.mxu0 %v421
  %2874 = vmatprep.subr.mxu0 %v426
  %2875 = vmatpush1.msra.mxu0 %v425
  %2876 = vmatprep.subr.mxu0 %v430
  %2877 = vmatpush1.msra.mxu0 %v429
  %2878 = vmatprep.subr.mxu0 %v434
  %2879 = vmatpush1.msra.mxu0 %v433
  %2880 = vmatprep.subr.mxu0 %v438
  %2881 = vmatpush1.msra.mxu0 %v437
  %2882 = vmatprep.subr.mxu0 %v442
  %2883 = vmatpush1.msra.mxu0 %v441
  %2884 = vmatprep.subr.mxu0 %v446
  %2885 = vmatpush1.msra.mxu0 %v445
  %2886 = vmatprep.subr.mxu0 %v450
  %2887 = vmatpush1.msra.mxu0 %v449
  %2888 = vmatprep.subr.mxu0 %v454
  %2889 = vmatpush1.msra.mxu0 %v453
  %2890 = vmatprep.subr.mxu0 0.0
  %2891 = vmatpush1.msra.mxu0 0.0
  %2892 = vmatprep.subr.mxu0 0.0
  %2893 = vmatpush1.msra.mxu0 0.0
  %2894 = vmatprep.subr.mxu0 0.0
  %2895 = vmatpush1.msra.mxu0 0.0
  %2896 = vmatprep.subr.mxu0 0.0
  %2897 = vmatpush1.msra.mxu0 0.0
  %2898 = vmatprep.subr.mxu0 0.0
  %2899 = vmatpush1.msra.mxu0 0.0
  %2900 = vmatprep.subr.mxu0 0.0
  %2901 = vmatpush1.msra.mxu0 0.0
  %2902 = vmatprep.subr.mxu0 0.0
  %2903 = vmatpush1.msra.mxu0 0.0
  %2904 = vmatprep.subr.mxu0 0.0
  %2905 = vmatpush1.msra.mxu0 0.0
  %2906 = vmatprep.subr.mxu0 0.0
  %2907 = vmatpush1.msra.mxu0 0.0
  %2908 = vmatprep.subr.mxu0 0.0
  %2909 = vmatpush1.msra.mxu0 0.0
  %2910 = vmatprep.subr.mxu0 0.0
  %2911 = vmatpush1.msra.mxu0 0.0
  %2912 = vmatprep.subr.mxu0 0.0
  %2913 = vmatpush1.msra.mxu0 0.0
  %2914 = vmatprep.subr.mxu0 0.0
  %2915 = vmatpush1.msra.mxu0 0.0
  %2916 = vmatprep.subr.mxu0 0.0
  %2917 = vmatpush1.msra.mxu0 0.0
  %2918 = vmatprep.subr.mxu0 0.0
  %2919 = vmatpush1.msra.mxu0 0.0
  %2920 = vmatprep.subr.mxu0 0.0
  %2921 = vmatpush1.msra.mxu0 0.0
  %2922 = vmatprep.mubr.f32.mxu0 0.0
  %2923 = vmatmul.mubr.f32.gmra.mrb[0].mxu0 %v2450
  %v2924 = vpop.f32.mrb[0].mxu0
  %v2925 = vadd.f32 0.0, %v2924
  %v2926 = vpop.f32.mrb[0].mxu0
  %v2927 = vadd.f32 0.0, %v2926
  %2928 = vdwg.mxu0
  %v2929 = vadd.f32 %v2783, %v2854
  %v2930 = vadd.f32 %v2784, %v2856
  %v2931 = vadd.f32 %v2785, %v2925
  %v2932 = vadd.f32 %v2786, %v2927
  %v2933 = vxor.u32 %v2929, 2147483648
  %v2934 = vmul.f32 %v2933, 1.442695
  %v2935 = vpow.pop %v2934
  %v2936 = vadd.f32 %v2935, 1.0
  %v2937 = vrcp.pop %v2936
  %v2938 = vmul.f32 1.0, %v2937
  %v2939 = vxor.u32 %v2930, 2147483648
  %v2940 = vmul.f32 %v2939, 1.442695
  %v2941 = vpow.pop %v2940
  %v2942 = vadd.f32 %v2941, 1.0
  %v2943 = vrcp.pop %v2942
  %v2944 = vmul.f32 1.0, %v2943
  %v2945 = vtanh.pop %v2931
  %v2946 = vxor.u32 %v2932, 2147483648
  %v2947 = vmul.f32 %v2946, 1.442695
  %v2948 = vpow.pop %v2947
  %v2949 = vadd.f32 %v2948, 1.0
  %v2950 = vrcp.pop %v2949
  %v2951 = vmul.f32 1.0, %v2950
  %v2952 = vmul.f32 %v2944, %v2448
  %v2953 = vmul.f32 %v2938, %v2945
  %v2954 = vadd.f32 %v2952, %v2953
  %v2955 = vtanh.pop %v2954
  %v2956 = vmul.f32 %v2951, %v2955
  %2957 = vmatprep.subr.mxu0 %v800
  %2958 = vmatpush1.msra.mxu0 %v799
  %2959 = vmatprep.subr.mxu0 %v804
  %2960 = vmatpush1.msra.mxu0 %v803
  %2961 = vmatprep.subr.mxu0 %v808
  %2962 = vmatpush1.msra.mxu0 %v807
  %2963 = vmatprep.subr.mxu0 %v812
  %2964 = vmatpush1.msra.mxu0 %v811
  %2965 = vmatprep.subr.mxu0 %v816
  %2966 = vmatpush1.msra.mxu0 %v815
  %2967 = vmatprep.subr.mxu0 %v820
  %2968 = vmatpush1.msra.mxu0 %v819
  %2969 = vmatprep.subr.mxu0 %v824
  %2970 = vmatpush1.msra.mxu0 %v823
  %2971 = vmatprep.subr.mxu0 %v828
  %2972 = vmatpush1.msra.mxu0 %v827
  %2973 = vmatprep.subr.mxu0 %v832
  %2974 = vmatpush1.msra.mxu0 %v831
  %2975 = vmatprep.subr.mxu0 %v836
  %2976 = vmatpush1.msra.mxu0 %v835
  %2977 = vmatprep.subr.mxu0 %v840
  %2978 = vmatpush1.msra.mxu0 %v839
  %2979 = vmatprep.subr.mxu0 %v844
  %2980 = vmatpush1.msra.mxu0 %v843
  %2981 = vmatprep.subr.mxu0 %v848
  %2982 = vmatpush1.msra.mxu0 %v847
  %2983 = vmatprep.subr.mxu0 %v852
  %2984 = vmatpush1.msra.mxu0 %v851
  %2985 = vmatprep.subr.mxu0 %v856
  %2986 = vmatpush1.msra.mxu0 %v855
  %2987 = vmatprep.subr.mxu0 %v860
  %2988 = vmatpush1.msra.mxu0 %v859
  %2989 = vmatprep.subr.mxu0 %v864
  %2990 = vmatpush1.msra.mxu0 %v863
  %2991 = vmatprep.subr.mxu0 %v868
  %2992 = vmatpush1.msra.mxu0 %v867
  %2993 = vmatprep.subr.mxu0 %v872
  %2994 = vmatpush1.msra.mxu0 %v871
  %2995 = vmatprep.subr.mxu0 %v876
  %2996 = vmatpush1.msra.mxu0 %v875
  %2997 = vmatprep.subr.mxu0 %v880
  %2998 = vmatpush1.msra.mxu0 %v879
  %2999 = vmatprep.subr.mxu0 %v884
  %3000 = vmatpush1.msra.mxu0 %v883
  %3001 = vmatprep.subr.mxu0 %v888
  %3002 = vmatpush1.msra.mxu0 %v887
  %3003 = vmatprep.subr.mxu0 %v892
  %3004 = vmatpush1.msra.mxu0 %v891
  %3005 = vmatprep.subr.mxu0 %v896
  %3006 = vmatpush1.msra.mxu0 %v895
  %3007 = vmatprep.subr.mxu0 %v900
  %3008 = vmatpush1.msra.mxu0 %v899
  %3009 = vmatprep.subr.mxu0 %v904
  %3010 = vmatpush1.msra.mxu0 %v903
  %3011 = vmatprep.subr.mxu0 %v908
  %3012 = vmatpush1.msra.mxu0 %v907
  %3013 = vmatprep.subr.mxu0 %v912
  %3014 = vmatpush1.msra.mxu0 %v911
  %3015 = vmatprep.subr.mxu0 %v916
  %3016 = vmatpush1.msra.mxu0 %v915
  %3017 = vmatprep.subr.mxu0 %v920
  %3018 = vmatpush1.msra.mxu0 %v919
  %3019 = vmatprep.subr.mxu0 %v924
  %3020 = vmatpush1.msra.mxu0 %v923
  %3021 = vmatprep.mubr.f32.mxu0 %v2616
  %3022 = vmatmul.mubr.f32.gmra.mrb[0].mxu0 %v2450
  %v3023 = vpop.f32.mrb[0].mxu0
  %v3024 = vadd.f32 %v932, %v3023
  %v3025 = vpop.f32.mrb[0].mxu0
  %v3026 = vadd.f32 %v936, %v3025
  %3027 = vdwg.mxu0
  %3028 = vmatprep.subr.mxu0 %v802
  %3029 = vmatpush1.msra.mxu0 %v801
  %3030 = vmatprep.subr.mxu0 %v806
  %3031 = vmatpush1.msra.mxu0 %v805
  %3032 = vmatprep.subr.mxu0 %v810
  %3033 = vmatpush1.msra.mxu0 %v809
  %3034 = vmatprep.subr.mxu0 %v814
  %3035 = vmatpush1.msra.mxu0 %v813
  %3036 = vmatprep.subr.mxu0 %v818
  %3037 = vmatpush1.msra.mxu0 %v817
  %3038 = vmatprep.subr.mxu0 %v822
  %3039 = vmatpush1.msra.mxu0 %v821
  %3040 = vmatprep.subr.mxu0 %v826
  %3041 = vmatpush1.msra.mxu0 %v825
  %3042 = vmatprep.subr.mxu0 %v830
  %3043 = vmatpush1.msra.mxu0 %v829
  %3044 = vmatprep.subr.mxu0 %v834
  %3045 = vmatpush1.msra.mxu0 %v833
  %3046 = vmatprep.subr.mxu0 %v838
  %3047 = vmatpush1.msra.mxu0 %v837
  %3048 = vmatprep.subr.mxu0 %v842
  %3049 = vmatpush1.msra.mxu0 %v841
  %3050 = vmatprep.subr.mxu0 %v846
  %3051 = vmatpush1.msra.mxu0 %v845
  %3052 = vmatprep.subr.mxu0 %v850
  %3053 = vmatpush1.msra.mxu0 %v849
  %3054 = vmatprep.subr.mxu0 %v854
  %3055 = vmatpush1.msra.mxu0 %v853
  %3056 = vmatprep.subr.mxu0 %v858
  %3057 = vmatpush1.msra.mxu0 %v857
  %3058 = vmatprep.subr.mxu0 %v862
  %3059 = vmatpush1.msra.mxu0 %v861
  %3060 = vmatprep.subr.mxu0 %v866
  %3061 = vmatpush1.msra.mxu0 %v865
  %3062 = vmatprep.subr.mxu0 %v870
  %3063 = vmatpush1.msra.mxu0 %v869
  %3064 = vmatprep.subr.mxu0 %v874
  %3065 = vmatpush1.msra.mxu0 %v873
  %3066 = vmatprep.subr.mxu0 %v878
  %3067 = vmatpush1.msra.mxu0 %v877
  %3068 = vmatprep.subr.mxu0 %v882
  %3069 = vmatpush1.msra.mxu0 %v881
  %3070 = vmatprep.subr.mxu0 %v886
  %3071 = vmatpush1.msra.mxu0 %v885
  %3072 = vmatprep.subr.mxu0 %v890
  %3073 = vmatpush1.msra.mxu0 %v889
  %3074 = vmatprep.subr.mxu0 %v894
  %3075 = vmatpush1.msra.mxu0 %v893
  %3076 = vmatprep.subr.mxu0 %v898
  %3077 = vmatpush1.msra.mxu0 %v897
  %3078 = vmatprep.subr.mxu0 %v902
  %3079 = vmatpush1.msra.mxu0 %v901
  %3080 = vmatprep.subr.mxu0 %v906
  %3081 = vmatpush1.msra.mxu0 %v905
  %3082 = vmatprep.subr.mxu0 %v910
  %3083 = vmatpush1.msra.mxu0 %v909
  %3084 = vmatprep.subr.mxu0 %v914
  %3085 = vmatpush1.msra.mxu0 %v913
  %3086 = vmatprep.subr.mxu0 %v918
  %3087 = vmatpush1.msra.mxu0 %v917
  %3088 = vmatprep.subr.mxu0 %v922
  %3089 = vmatpush1.msra.mxu0 %v921
  %3090 = vmatprep.subr.mxu0 %v926
  %3091 = vmatpush1.msra.mxu0 %v925
  %3092 = vmatprep.mubr.f32.mxu0 %v2616
  %3093 = vmatmul.mubr.f32.gmra.mrb[0].mxu0 %v2450
  %v3094 = vpop.f32.mrb[0].mxu0
  %v3095 = vadd.f32 %v940, %v3094
  %v3096 = vpop.f32.mrb[0].mxu0
  %v3097 = vadd.f32 %v944, %v3096
  %3098 = vdwg.mxu0
  %v3099 = vxor.u32 %v3024, 2147483648
  %v3100 = vmul.f32 %v3099, 1.442695
  %v3101 = vpow.pop %v3100
  %v3102 = vadd.f32 %v3101, 1.0
  %v3103 = vrcp.pop %v3102
  %v3104 = vmul.f32 1.0, %v3103
  %v3105 = vxor.u32 %v3026, 2147483648
  %v3106 = vmul.f32 %v3105, 1.442695
  %v3107 = vpow.pop %v3106
  %v3108 = vadd.f32 %v3107, 1.0
  %v3109 = vrcp.pop %v3108
  %v3110 = vmul.f32 1.0, %v3109
  %v3111 = vtanh.pop %v3095
  %v3112 = vxor.u32 %v3097, 2147483648
  %v3113 = vmul.f32 %v3112, 1.442695
  %v3114 = vpow.pop %v3113
  %v3115 = vadd.f32 %v3114, 1.0
  %v3116 = vrcp.pop %v3115
  %v3117 = vmul.f32 1.0, %v3116
  %v3118 = vmul.f32 %v3110, %v2614
  %v3119 = vmul.f32 %v3104, %v3111
  %v3120 = vadd.f32 %v3118, %v3119
  %v3121 = vtanh.pop %v3120
  %v3122 = vmul.f32 %v3117, %v3121
  %3123 = vmatprep.subr.mxu0 %v1456
  %3124 = vmatpush1.msra.mxu0 %v1455
  %3125 = vmatprep.subr.mxu0 %v1460
  %3126 = vmatpush1.msra.mxu0 %v1459
  %3127 = vmatprep.subr.mxu0 %v1464
  %3128 = vmatpush1.msra.mxu0 %v1463
  %3129 = vmatprep.subr.mxu0 %v1468
  %3130 = vmatpush1.msra.mxu0 %v1467
  %3131 = vmatprep.subr.mxu0 %v1472
  %3132 = vmatpush1.msra.mxu0 %v1471
  %3133 = vmatprep.subr.mxu0 %v1476
  %3134 = vmatpush1.msra.mxu0 %v1475
  %3135 = vmatprep.subr.mxu0 %v1480
  %3136 = vmatpush1.msra.mxu0 %v1479
  %3137 = vmatprep.subr.mxu0 %v1484
  %3138 = vmatpush1.msra.mxu0 %v1483
  %3139 = vmatprep.subr.mxu0 %v1488
  %3140 = vmatpush1.msra.mxu0 %v1487
  %3141 = vmatprep.subr.mxu0 %v1492
  %3142 = vmatpush1.msra.mxu0 %v1491
  %3143 = vmatprep.subr.mxu0 %v1496
  %3144 = vmatpush1.msra.mxu0 %v1495
  %3145 = vmatprep.subr.mxu0 %v1500
  %3146 = vmatpush1.msra.mxu0 %v1499
  %3147 = vmatprep.subr.mxu0 %v1504
  %3148 = vmatpush1.msra.mxu0 %v1503
  %3149 = vmatprep.subr.mxu0 %v1508
  %3150 = vmatpush1.msra.mxu0 %v1507
  %3151 = vmatprep.subr.mxu0 %v1512
  %3152 = vmatpush1.msra.mxu0 %v1511
  %3153 = vmatprep.subr.mxu0 %v1516
  %3154 = vmatpush1.msra.mxu0 %v1515
  %3155 = vmatprep.subr.mxu0 %v1520
  %3156 = vmatpush1.msra.mxu0 %v1519
  %3157 = vmatprep.subr.mxu0 %v1524
  %3158 = vmatpush1.msra.mxu0 %v1523
  %3159 = vmatprep.subr.mxu0 %v1528
  %3160 = vmatpush1.msra.mxu0 %v1527
  %3161 = vmatprep.subr.mxu0 %v1532
  %3162 = vmatpush1.msra.mxu0 %v1531
  %3163 = vmatprep.subr.mxu0 %v1536
  %3164 = vmatpush1.msra.mxu0 %v1535
  %3165 = vmatprep.subr.mxu0 %v1540
  %3166 = vmatpush1.msra.mxu0 %v1539
  %3167 = vmatprep.subr.mxu0 %v1544
  %3168 = vmatpush1.msra.mxu0 %v1543
  %3169 = vmatprep.subr.mxu0 %v1548
  %3170 = vmatpush1.msra.mxu0 %v1547
  %3171 = vmatprep.subr.mxu0 %v1552
  %3172 = vmatpush1.msra.mxu0 %v1551
  %3173 = vmatprep.subr.mxu0 %v1556
  %3174 = vmatpush1.msra.mxu0 %v1555
  %3175 = vmatprep.subr.mxu0 %v1560
  %3176 = vmatpush1.msra.mxu0 %v1559
  %3177 = vmatprep.subr.mxu0 %v1564
  %3178 = vmatpush1.msra.mxu0 %v1563
  %3179 = vmatprep.subr.mxu0 %v1568
  %3180 = vmatpush1.msra.mxu0 %v1567
  %3181 = vmatprep.subr.mxu0 %v1572
  %3182 = vmatpush1.msra.mxu0 %v1571
  %3183 = vmatprep.subr.mxu0 %v1576
  %3184 = vmatpush1.msra.mxu0 %v1575
  %3185 = vmatprep.subr.mxu0 %v1580
  %3186 = vmatpush1.msra.mxu0 %v1579
  %3187 = vmatprep.mubr.f32.mxu0 %v2782
  %3188 = vmatmul.mubr.f32.gmra.mrb[0].mxu0 %v2616
  %v3189 = vpop.f32.mrb[0].mxu0
  %v3190 = vadd.f32 %v1588, %v3189
  %v3191 = vpop.f32.mrb[0].mxu0
  %v3192 = vadd.f32 %v1592, %v3191
  %3193 = vdwg.mxu0
  %3194 = vmatprep.subr.mxu0 %v1458
  %3195 = vmatpush1.msra.mxu0 %v1457
  %3196 = vmatprep.subr.mxu0 %v1462
  %3197 = vmatpush1.msra.mxu0 %v1461
  %3198 = vmatprep.subr.mxu0 %v1466
  %3199 = vmatpush1.msra.mxu0 %v1465
  %3200 = vmatprep.subr.mxu0 %v1470
  %3201 = vmatpush1.msra.mxu0 %v1469
  %3202 = vmatprep.subr.mxu0 %v1474
  %3203 = vmatpush1.msra.mxu0 %v1473
  %3204 = vmatprep.subr.mxu0 %v1478
  %3205 = vmatpush1.msra.mxu0 %v1477
  %3206 = vmatprep.subr.mxu0 %v1482
  %3207 = vmatpush1.msra.mxu0 %v1481
  %3208 = vmatprep.subr.mxu0 %v1486
  %3209 = vmatpush1.msra.mxu0 %v1485
  %3210 = vmatprep.subr.mxu0 %v1490
  %3211 = vmatpush1.msra.mxu0 %v1489
  %3212 = vmatprep.subr.mxu0 %v1494
  %3213 = vmatpush1.msra.mxu0 %v1493
  %3214 = vmatprep.subr.mxu0 %v1498
  %3215 = vmatpush1.msra.mxu0 %v1497
  %3216 = vmatprep.subr.mxu0 %v1502
  %3217 = vmatpush1.msra.mxu0 %v1501
  %3218 = vmatprep.subr.mxu0 %v1506
  %3219 = vmatpush1.msra.mxu0 %v1505
  %3220 = vmatprep.subr.mxu0 %v1510
  %3221 = vmatpush1.msra.mxu0 %v1509
  %3222 = vmatprep.subr.mxu0 %v1514
  %3223 = vmatpush1.msra.mxu0 %v1513
  %3224 = vmatprep.subr.mxu0 %v1518
  %3225 = vmatpush1.msra.mxu0 %v1517
  %3226 = vmatprep.subr.mxu0 %v1522
  %3227 = vmatpush1.msra.mxu0 %v1521
  %3228 = vmatprep.subr.mxu0 %v1526
  %3229 = vmatpush1.msra.mxu0 %v1525
  %3230 = vmatprep.subr.mxu0 %v1530
  %3231 = vmatpush1.msra.mxu0 %v1529
  %3232 = vmatprep.subr.mxu0 %v1534
  %3233 = vmatpush1.msra.mxu0 %v1533
  %3234 = vmatprep.subr.mxu0 %v1538
  %3235 = vmatpush1.msra.mxu0 %v1537
  %3236 = vmatprep.subr.mxu0 %v1542
  %3237 = vmatpush1.msra.mxu0 %v1541
  %3238 = vmatprep.subr.mxu0 %v1546
  %3239 = vmatpush1.msra.mxu0 %v1545
  %3240 = vmatprep.subr.mxu0 %v1550
  %3241 = vmatpush1.msra.mxu0 %v1549
  %3242 = vmatprep.subr.mxu0 %v1554
  %3243 = vmatpush1.msra.mxu0 %v1553
  %3244 = vmatprep.subr.mxu0 %v1558
  %3245 = vmatpush1.msra.mxu0 %v1557
  %3246 = vmatprep.subr.mxu0 %v1562
  %3247 = vmatpush1.msra.mxu0 %v1561
  %3248 = vmatprep.subr.mxu0 %v1566
  %3249 = vmatpush1.msra.mxu0 %v1565
  %3250 = vmatprep.subr.mxu0 %v1570
  %3251 = vmatpush1.msra.mxu0 %v1569
  %3252 = vmatprep.subr.mxu0 %v1574
  %3253 = vmatpush1.msra.mxu0 %v1573
  %3254 = vmatprep.subr.mxu0 %v1578
  %3255 = vmatpush1.msra.mxu0 %v1577
  %3256 = vmatprep.subr.mxu0 %v1582
  %3257 = vmatpush1.msra.mxu0 %v1581
  %3258 = vmatprep.mubr.f32.mxu0 %v2782
  %3259 = vmatmul.mubr.f32.gmra.mrb[0].mxu0 %v2616
  %v3260 = vpop.f32.mrb[0].mxu0
  %v3261 = vadd.f32 %v1596, %v3260
  %v3262 = vpop.f32.mrb[0].mxu0
  %v3263 = vadd.f32 %v1600, %v3262
  %3264 = vdwg.mxu0
  %v3265 = vxor.u32 %v3190, 2147483648
  %v3266 = vmul.f32 %v3265, 1.442695
  %v3267 = vpow.pop %v3266
  %v3268 = vadd.f32 %v3267, 1.0
  %v3269 = vrcp.pop %v3268
  %v3270 = vmul.f32 1.0, %v3269
  %v3271 = vxor.u32 %v3192, 2147483648
  %v3272 = vmul.f32 %v3271, 1.442695
  %v3273 = vpow.pop %v3272
  %v3274 = vadd.f32 %v3273, 1.0
  %v3275 = vrcp.pop %v3274
  %v3276 = vmul.f32 1.0, %v3275
  %v3277 = vtanh.pop %v3261
  %v3278 = vxor.u32 %v3263, 2147483648
  %v3279 = vmul.f32 %v3278, 1.442695
  %v3280 = vpow.pop %v3279
  %v3281 = vadd.f32 %v3280, 1.0
  %v3282 = vrcp.pop %v3281
  %v3283 = vmul.f32 1.0, %v3282
  %v3284 = vmul.f32 %v3276, %v2780
  %v3285 = vmul.f32 %v3270, %v3277
  %v3286 = vadd.f32 %v3284, %v3285
  %v3287 = vtanh.pop %v3286
  %v3288 = vmul.f32 %v3283, %v3287
  %v3289 = vld [vmem:[#allocation2 + $0xc0] sm:$0xff]
  %v3290 = vld [vmem:[#allocation2 + $0xc8] sm:$0xff]
  %v3291 = vld [vmem:[#allocation2 + $0xd0] sm:$0xff]
  %v3292 = vld [vmem:[#allocation2 + $0xd8] sm:$0xff]
  %3293 = vmatprep.subr.mxu0 %v392
  %3294 = vmatpush1.msra.mxu0 %v391
  %3295 = vmatprep.subr.mxu0 %v396
  %3296 = vmatpush1.msra.mxu0 %v395
  %3297 = vmatprep.subr.mxu0 %v400
  %3298 = vmatpush1.msra.mxu0 %v399
  %3299 = vmatprep.subr.mxu0 %v404
  %3300 = vmatpush1.msra.mxu0 %v403
  %3301 = vmatprep.subr.mxu0 %v408
  %3302 = vmatpush1.msra.mxu0 %v407
  %3303 = vmatprep.subr.mxu0 %v412
  %3304 = vmatpush1.msra.mxu0 %v411
  %3305 = vmatprep.subr.mxu0 %v416
  %3306 = vmatpush1.msra.mxu0 %v415
  %3307 = vmatprep.subr.mxu0 %v420
  %3308 = vmatpush1.msra.mxu0 %v419
  %3309 = vmatprep.subr.mxu0 %v424
  %3310 = vmatpush1.msra.mxu0 %v423
  %3311 = vmatprep.subr.mxu0 %v428
  %3312 = vmatpush1.msra.mxu0 %v427
  %3313 = vmatprep.subr.mxu0 %v432
  %3314 = vmatpush1.msra.mxu0 %v431
  %3315 = vmatprep.subr.mxu0 %v436
  %3316 = vmatpush1.msra.mxu0 %v435
  %3317 = vmatprep.subr.mxu0 %v440
  %3318 = vmatpush1.msra.mxu0 %v439
  %3319 = vmatprep.subr.mxu0 %v444
  %3320 = vmatpush1.msra.mxu0 %v443
  %3321 = vmatprep.subr.mxu0 %v448
  %3322 = vmatpush1.msra.mxu0 %v447
  %3323 = vmatprep.subr.mxu0 %v452
  %3324 = vmatpush1.msra.mxu0 %v451
  %3325 = vmatprep.subr.mxu0 0.0
  %3326 = vmatpush1.msra.mxu0 0.0
  %3327 = vmatprep.subr.mxu0 0.0
  %3328 = vmatpush1.msra.mxu0 0.0
  %3329 = vmatprep.subr.mxu0 0.0
  %3330 = vmatpush1.msra.mxu0 0.0
  %3331 = vmatprep.subr.mxu0 0.0
  %3332 = vmatpush1.msra.mxu0 0.0
  %3333 = vmatprep.subr.mxu0 0.0
  %3334 = vmatpush1.msra.mxu0 0.0
  %3335 = vmatprep.subr.mxu0 0.0
  %3336 = vmatpush1.msra.mxu0 0.0
  %3337 = vmatprep.subr.mxu0 0.0
  %3338 = vmatpush1.msra.mxu0 0.0
  %3339 = vmatprep.subr.mxu0 0.0
  %3340 = vmatpush1.msra.mxu0 0.0
  %3341 = vmatprep.subr.mxu0 0.0
  %3342 = vmatpush1.msra.mxu0 0.0
  %3343 = vmatprep.subr.mxu0 0.0
  %3344 = vmatpush1.msra.mxu0 0.0
  %3345 = vmatprep.subr.mxu0 0.0
  %3346 = vmatpush1.msra.mxu0 0.0
  %3347 = vmatprep.subr.mxu0 0.0
  %3348 = vmatpush1.msra.mxu0 0.0
  %3349 = vmatprep.subr.mxu0 0.0
  %3350 = vmatpush1.msra.mxu0 0.0
  %3351 = vmatprep.subr.mxu0 0.0
  %3352 = vmatpush1.msra.mxu0 0.0
  %3353 = vmatprep.subr.mxu0 0.0
  %3354 = vmatpush1.msra.mxu0 0.0
  %3355 = vmatprep.subr.mxu0 0.0
  %3356 = vmatpush1.msra.mxu0 0.0
  %3357 = vmatprep.mubr.f32.mxu0 0.0
  %3358 = vmatmul.mubr.f32.gmra.mrb[0].mxu0 %v2956
  %v3359 = vpop.f32.mrb[0].mxu0
  %v3360 = vadd.f32 0.0, %v3359
  %v3361 = vpop.f32.mrb[0].mxu0
  %v3362 = vadd.f32 0.0, %v3361
  %3363 = vdwg.mxu0
  %3364 = vmatprep.subr.mxu0 %v394
  %3365 = vmatpush1.msra.mxu0 %v393
  %3366 = vmatprep.subr.mxu0 %v398
  %3367 = vmatpush1.msra.mxu0 %v397
  %3368 = vmatprep.subr.mxu0 %v402
  %3369 = vmatpush1.msra.mxu0 %v401
  %3370 = vmatprep.subr.mxu0 %v406
  %3371 = vmatpush1.msra.mxu0 %v405
  %3372 = vmatprep.subr.mxu0 %v410
  %3373 = vmatpush1.msra.mxu0 %v409
  %3374 = vmatprep.subr.mxu0 %v414
  %3375 = vmatpush1.msra.mxu0 %v413
  %3376 = vmatprep.subr.mxu0 %v418
  %3377 = vmatpush1.msra.mxu0 %v417
  %3378 = vmatprep.subr.mxu0 %v422
  %3379 = vmatpush1.msra.mxu0 %v421
  %3380 = vmatprep.subr.mxu0 %v426
  %3381 = vmatpush1.msra.mxu0 %v425
  %3382 = vmatprep.subr.mxu0 %v430
  %3383 = vmatpush1.msra.mxu0 %v429
  %3384 = vmatprep.subr.mxu0 %v434
  %3385 = vmatpush1.msra.mxu0 %v433
  %3386 = vmatprep.subr.mxu0 %v438
  %3387 = vmatpush1.msra.mxu0 %v437
  %3388 = vmatprep.subr.mxu0 %v442
  %3389 = vmatpush1.msra.mxu0 %v441
  %3390 = vmatprep.subr.mxu0 %v446
  %3391 = vmatpush1.msra.mxu0 %v445
  %3392 = vmatprep.subr.mxu0 %v450
  %3393 = vmatpush1.msra.mxu0 %v449
  %3394 = vmatprep.subr.mxu0 %v454
  %3395 = vmatpush1.msra.mxu0 %v453
  %3396 = vmatprep.subr.mxu0 0.0
  %3397 = vmatpush1.msra.mxu0 0.0
  %3398 = vmatprep.subr.mxu0 0.0
  %3399 = vmatpush1.msra.mxu0 0.0
  %3400 = vmatprep.subr.mxu0 0.0
  %3401 = vmatpush1.msra.mxu0 0.0
  %3402 = vmatprep.subr.mxu0 0.0
  %3403 = vmatpush1.msra.mxu0 0.0
  %3404 = vmatprep.subr.mxu0 0.0
  %3405 = vmatpush1.msra.mxu0 0.0
  %3406 = vmatprep.subr.mxu0 0.0
  %3407 = vmatpush1.msra.mxu0 0.0
  %3408 = vmatprep.subr.mxu0 0.0
  %3409 = vmatpush1.msra.mxu0 0.0
  %3410 = vmatprep.subr.mxu0 0.0
  %3411 = vmatpush1.msra.mxu0 0.0
  %3412 = vmatprep.subr.mxu0 0.0
  %3413 = vmatpush1.msra.mxu0 0.0
  %3414 = vmatprep.subr.mxu0 0.0
  %3415 = vmatpush1.msra.mxu0 0.0
  %3416 = vmatprep.subr.mxu0 0.0
  %3417 = vmatpush1.msra.mxu0 0.0
  %3418 = vmatprep.subr.mxu0 0.0
  %3419 = vmatpush1.msra.mxu0 0.0
  %3420 = vmatprep.subr.mxu0 0.0
  %3421 = vmatpush1.msra.mxu0 0.0
  %3422 = vmatprep.subr.mxu0 0.0
  %3423 = vmatpush1.msra.mxu0 0.0
  %3424 = vmatprep.subr.mxu0 0.0
  %3425 = vmatpush1.msra.mxu0 0.0
  %3426 = vmatprep.subr.mxu0 0.0
  %3427 = vmatpush1.msra.mxu0 0.0
  %3428 = vmatprep.mubr.f32.mxu0 0.0
  %3429 = vmatmul.mubr.f32.gmra.mrb[0].mxu0 %v2956
  %v3430 = vpop.f32.mrb[0].mxu0
  %v3431 = vadd.f32 0.0, %v3430
  %v3432 = vpop.f32.mrb[0].mxu0
  %v3433 = vadd.f32 0.0, %v3432
  %3434 = vdwg.mxu0
  %v3435 = vadd.f32 %v3289, %v3360
  %v3436 = vadd.f32 %v3290, %v3362
  %v3437 = vadd.f32 %v3291, %v3431
  %v3438 = vadd.f32 %v3292, %v3433
  %v3439 = vxor.u32 %v3435, 2147483648
  %v3440 = vmul.f32 %v3439, 1.442695
  %v3441 = vpow.pop %v3440
  %v3442 = vadd.f32 %v3441, 1.0
  %v3443 = vrcp.pop %v3442
  %v3444 = vmul.f32 1.0, %v3443
  %v3445 = vxor.u32 %v3436, 2147483648
  %v3446 = vmul.f32 %v3445, 1.442695
  %v3447 = vpow.pop %v3446
  %v3448 = vadd.f32 %v3447, 1.0
  %v3449 = vrcp.pop %v3448
  %v3450 = vmul.f32 1.0, %v3449
  %v3451 = vtanh.pop %v3437
  %v3452 = vxor.u32 %v3438, 2147483648
  %v3453 = vmul.f32 %v3452, 1.442695
  %v3454 = vpow.pop %v3453
  %v3455 = vadd.f32 %v3454, 1.0
  %v3456 = vrcp.pop %v3455
  %v3457 = vmul.f32 1.0, %v3456
  %v3458 = vmul.f32 %v3450, %v2954
  %v3459 = vmul.f32 %v3444, %v3451
  %v3460 = vadd.f32 %v3458, %v3459
  %v3461 = vtanh.pop %v3460
  %v3462 = vmul.f32 %v3457, %v3461
  %3463 = vmatprep.subr.mxu0 %v800
  %3464 = vmatpush1.msra.mxu0 %v799
  %3465 = vmatprep.subr.mxu0 %v804
  %3466 = vmatpush1.msra.mxu0 %v803
  %3467 = vmatprep.subr.mxu0 %v808
  %3468 = vmatpush1.msra.mxu0 %v807
  %3469 = vmatprep.subr.mxu0 %v812
  %3470 = vmatpush1.msra.mxu0 %v811
  %3471 = vmatprep.subr.mxu0 %v816
  %3472 = vmatpush1.msra.mxu0 %v815
  %3473 = vmatprep.subr.mxu0 %v820
  %3474 = vmatpush1.msra.mxu0 %v819
  %3475 = vmatprep.subr.mxu0 %v824
  %3476 = vmatpush1.msra.mxu0 %v823
  %3477 = vmatprep.subr.mxu0 %v828
  %3478 = vmatpush1.msra.mxu0 %v827
  %3479 = vmatprep.subr.mxu0 %v832
  %3480 = vmatpush1.msra.mxu0 %v831
  %3481 = vmatprep.subr.mxu0 %v836
  %3482 = vmatpush1.msra.mxu0 %v835
  %3483 = vmatprep.subr.mxu0 %v840
  %3484 = vmatpush1.msra.mxu0 %v839
  %3485 = vmatprep.subr.mxu0 %v844
  %3486 = vmatpush1.msra.mxu0 %v843
  %3487 = vmatprep.subr.mxu0 %v848
  %3488 = vmatpush1.msra.mxu0 %v847
  %3489 = vmatprep.subr.mxu0 %v852
  %3490 = vmatpush1.msra.mxu0 %v851
  %3491 = vmatprep.subr.mxu0 %v856
  %3492 = vmatpush1.msra.mxu0 %v855
  %3493 = vmatprep.subr.mxu0 %v860
  %3494 = vmatpush1.msra.mxu0 %v859
  %3495 = vmatprep.subr.mxu0 %v864
  %3496 = vmatpush1.msra.mxu0 %v863
  %3497 = vmatprep.subr.mxu0 %v868
  %3498 = vmatpush1.msra.mxu0 %v867
  %3499 = vmatprep.subr.mxu0 %v872
  %3500 = vmatpush1.msra.mxu0 %v871
  %3501 = vmatprep.subr.mxu0 %v876
  %3502 = vmatpush1.msra.mxu0 %v875
  %3503 = vmatprep.subr.mxu0 %v880
  %3504 = vmatpush1.msra.mxu0 %v879
  %3505 = vmatprep.subr.mxu0 %v884
  %3506 = vmatpush1.msra.mxu0 %v883
  %3507 = vmatprep.subr.mxu0 %v888
  %3508 = vmatpush1.msra.mxu0 %v887
  %3509 = vmatprep.subr.mxu0 %v892
  %3510 = vmatpush1.msra.mxu0 %v891
  %3511 = vmatprep.subr.mxu0 %v896
  %3512 = vmatpush1.msra.mxu0 %v895
  %3513 = vmatprep.subr.mxu0 %v900
  %3514 = vmatpush1.msra.mxu0 %v899
  %3515 = vmatprep.subr.mxu0 %v904
  %3516 = vmatpush1.msra.mxu0 %v903
  %3517 = vmatprep.subr.mxu0 %v908
  %3518 = vmatpush1.msra.mxu0 %v907
  %3519 = vmatprep.subr.mxu0 %v912
  %3520 = vmatpush1.msra.mxu0 %v911
  %3521 = vmatprep.subr.mxu0 %v916
  %3522 = vmatpush1.msra.mxu0 %v915
  %3523 = vmatprep.subr.mxu0 %v920
  %3524 = vmatpush1.msra.mxu0 %v919
  %3525 = vmatprep.subr.mxu0 %v924
  %3526 = vmatpush1.msra.mxu0 %v923
  %3527 = vmatprep.mubr.f32.mxu0 %v3122
  %3528 = vmatmul.mubr.f32.gmra.mrb[0].mxu0 %v2956
  %v3529 = vpop.f32.mrb[0].mxu0
  %v3530 = vadd.f32 %v932, %v3529
  %v3531 = vpop.f32.mrb[0].mxu0
  %v3532 = vadd.f32 %v936, %v3531
  %3533 = vdwg.mxu0
  %3534 = vmatprep.subr.mxu0 %v802
  %3535 = vmatpush1.msra.mxu0 %v801
  %3536 = vmatprep.subr.mxu0 %v806
  %3537 = vmatpush1.msra.mxu0 %v805
  %3538 = vmatprep.subr.mxu0 %v810
  %3539 = vmatpush1.msra.mxu0 %v809
  %3540 = vmatprep.subr.mxu0 %v814
  %3541 = vmatpush1.msra.mxu0 %v813
  %3542 = vmatprep.subr.mxu0 %v818
  %3543 = vmatpush1.msra.mxu0 %v817
  %3544 = vmatprep.subr.mxu0 %v822
  %3545 = vmatpush1.msra.mxu0 %v821
  %3546 = vmatprep.subr.mxu0 %v826
  %3547 = vmatpush1.msra.mxu0 %v825
  %3548 = vmatprep.subr.mxu0 %v830
  %3549 = vmatpush1.msra.mxu0 %v829
  %3550 = vmatprep.subr.mxu0 %v834
  %3551 = vmatpush1.msra.mxu0 %v833
  %3552 = vmatprep.subr.mxu0 %v838
  %3553 = vmatpush1.msra.mxu0 %v837
  %3554 = vmatprep.subr.mxu0 %v842
  %3555 = vmatpush1.msra.mxu0 %v841
  %3556 = vmatprep.subr.mxu0 %v846
  %3557 = vmatpush1.msra.mxu0 %v845
  %3558 = vmatprep.subr.mxu0 %v850
  %3559 = vmatpush1.msra.mxu0 %v849
  %3560 = vmatprep.subr.mxu0 %v854
  %3561 = vmatpush1.msra.mxu0 %v853
  %3562 = vmatprep.subr.mxu0 %v858
  %3563 = vmatpush1.msra.mxu0 %v857
  %3564 = vmatprep.subr.mxu0 %v862
  %3565 = vmatpush1.msra.mxu0 %v861
  %3566 = vmatprep.subr.mxu0 %v866
  %3567 = vmatpush1.msra.mxu0 %v865
  %3568 = vmatprep.subr.mxu0 %v870
  %3569 = vmatpush1.msra.mxu0 %v869
  %3570 = vmatprep.subr.mxu0 %v874
  %3571 = vmatpush1.msra.mxu0 %v873
  %3572 = vmatprep.subr.mxu0 %v878
  %3573 = vmatpush1.msra.mxu0 %v877
  %3574 = vmatprep.subr.mxu0 %v882
  %3575 = vmatpush1.msra.mxu0 %v881
  %3576 = vmatprep.subr.mxu0 %v886
  %3577 = vmatpush1.msra.mxu0 %v885
  %3578 = vmatprep.subr.mxu0 %v890
  %3579 = vmatpush1.msra.mxu0 %v889
  %3580 = vmatprep.subr.mxu0 %v894
  %3581 = vmatpush1.msra.mxu0 %v893
  %3582 = vmatprep.subr.mxu0 %v898
  %3583 = vmatpush1.msra.mxu0 %v897
  %3584 = vmatprep.subr.mxu0 %v902
  %3585 = vmatpush1.msra.mxu0 %v901
  %3586 = vmatprep.subr.mxu0 %v906
  %3587 = vmatpush1.msra.mxu0 %v905
  %3588 = vmatprep.subr.mxu0 %v910
  %3589 = vmatpush1.msra.mxu0 %v909
  %3590 = vmatprep.subr.mxu0 %v914
  %3591 = vmatpush1.msra.mxu0 %v913
  %3592 = vmatprep.subr.mxu0 %v918
  %3593 = vmatpush1.msra.mxu0 %v917
  %3594 = vmatprep.subr.mxu0 %v922
  %3595 = vmatpush1.msra.mxu0 %v921
  %3596 = vmatprep.subr.mxu0 %v926
  %3597 = vmatpush1.msra.mxu0 %v925
  %3598 = vmatprep.mubr.f32.mxu0 %v3122
  %3599 = vmatmul.mubr.f32.gmra.mrb[0].mxu0 %v2956
  %v3600 = vpop.f32.mrb[0].mxu0
  %v3601 = vadd.f32 %v940, %v3600
  %v3602 = vpop.f32.mrb[0].mxu0
  %v3603 = vadd.f32 %v944, %v3602
  %3604 = vdwg.mxu0
  %v3605 = vxor.u32 %v3530, 2147483648
  %v3606 = vmul.f32 %v3605, 1.442695
  %v3607 = vpow.pop %v3606
  %v3608 = vadd.f32 %v3607, 1.0
  %v3609 = vrcp.pop %v3608
  %v3610 = vmul.f32 1.0, %v3609
  %v3611 = vxor.u32 %v3532, 2147483648
  %v3612 = vmul.f32 %v3611, 1.442695
  %v3613 = vpow.pop %v3612
  %v3614 = vadd.f32 %v3613, 1.0
  %v3615 = vrcp.pop %v3614
  %v3616 = vmul.f32 1.0, %v3615
  %v3617 = vtanh.pop %v3601
  %v3618 = vxor.u32 %v3603, 2147483648
  %v3619 = vmul.f32 %v3618, 1.442695
  %v3620 = vpow.pop %v3619
  %v3621 = vadd.f32 %v3620, 1.0
  %v3622 = vrcp.pop %v3621
  %v3623 = vmul.f32 1.0, %v3622
  %v3624 = vmul.f32 %v3616, %v3120
  %v3625 = vmul.f32 %v3610, %v3617
  %v3626 = vadd.f32 %v3624, %v3625
  %v3627 = vtanh.pop %v3626
  %v3628 = vmul.f32 %v3623, %v3627
  %3629 = vmatprep.subr.mxu0 %v1456
  %3630 = vmatpush1.msra.mxu0 %v1455
  %3631 = vmatprep.subr.mxu0 %v1460
  %3632 = vmatpush1.msra.mxu0 %v1459
  %3633 = vmatprep.subr.mxu0 %v1464
  %3634 = vmatpush1.msra.mxu0 %v1463
  %3635 = vmatprep.subr.mxu0 %v1468
  %3636 = vmatpush1.msra.mxu0 %v1467
  %3637 = vmatprep.subr.mxu0 %v1472
  %3638 = vmatpush1.msra.mxu0 %v1471
  %3639 = vmatprep.subr.mxu0 %v1476
  %3640 = vmatpush1.msra.mxu0 %v1475
  %3641 = vmatprep.subr.mxu0 %v1480
  %3642 = vmatpush1.msra.mxu0 %v1479
  %3643 = vmatprep.subr.mxu0 %v1484
  %3644 = vmatpush1.msra.mxu0 %v1483
  %3645 = vmatprep.subr.mxu0 %v1488
  %3646 = vmatpush1.msra.mxu0 %v1487
  %3647 = vmatprep.subr.mxu0 %v1492
  %3648 = vmatpush1.msra.mxu0 %v1491
  %3649 = vmatprep.subr.mxu0 %v1496
  %3650 = vmatpush1.msra.mxu0 %v1495
  %3651 = vmatprep.subr.mxu0 %v1500
  %3652 = vmatpush1.msra.mxu0 %v1499
  %3653 = vmatprep.subr.mxu0 %v1504
  %3654 = vmatpush1.msra.mxu0 %v1503
  %3655 = vmatprep.subr.mxu0 %v1508
  %3656 = vmatpush1.msra.mxu0 %v1507
  %3657 = vmatprep.subr.mxu0 %v1512
  %3658 = vmatpush1.msra.mxu0 %v1511
  %3659 = vmatprep.subr.mxu0 %v1516
  %3660 = vmatpush1.msra.mxu0 %v1515
  %3661 = vmatprep.subr.mxu0 %v1520
  %3662 = vmatpush1.msra.mxu0 %v1519
  %3663 = vmatprep.subr.mxu0 %v1524
  %3664 = vmatpush1.msra.mxu0 %v1523
  %3665 = vmatprep.subr.mxu0 %v1528
  %3666 = vmatpush1.msra.mxu0 %v1527
  %3667 = vmatprep.subr.mxu0 %v1532
  %3668 = vmatpush1.msra.mxu0 %v1531
  %3669 = vmatprep.subr.mxu0 %v1536
  %3670 = vmatpush1.msra.mxu0 %v1535
  %3671 = vmatprep.subr.mxu0 %v1540
  %3672 = vmatpush1.msra.mxu0 %v1539
  %3673 = vmatprep.subr.mxu0 %v1544
  %3674 = vmatpush1.msra.mxu0 %v1543
  %3675 = vmatprep.subr.mxu0 %v1548
  %3676 = vmatpush1.msra.mxu0 %v1547
  %3677 = vmatprep.subr.mxu0 %v1552
  %3678 = vmatpush1.msra.mxu0 %v1551
  %3679 = vmatprep.subr.mxu0 %v1556
  %3680 = vmatpush1.msra.mxu0 %v1555
  %3681 = vmatprep.subr.mxu0 %v1560
  %3682 = vmatpush1.msra.mxu0 %v1559
  %3683 = vmatprep.subr.mxu0 %v1564
  %3684 = vmatpush1.msra.mxu0 %v1563
  %3685 = vmatprep.subr.mxu0 %v1568
  %3686 = vmatpush1.msra.mxu0 %v1567
  %3687 = vmatprep.subr.mxu0 %v1572
  %3688 = vmatpush1.msra.mxu0 %v1571
  %3689 = vmatprep.subr.mxu0 %v1576
  %3690 = vmatpush1.msra.mxu0 %v1575
  %3691 = vmatprep.subr.mxu0 %v1580
  %3692 = vmatpush1.msra.mxu0 %v1579
  %3693 = vmatprep.mubr.f32.mxu0 %v3288
  %3694 = vmatmul.mubr.f32.gmra.mrb[0].mxu0 %v3122
  %v3695 = vpop.f32.mrb[0].mxu0
  %v3696 = vadd.f32 %v1588, %v3695
  %v3697 = vpop.f32.mrb[0].mxu0
  %v3698 = vadd.f32 %v1592, %v3697
  %3699 = vdwg.mxu0
  %3700 = vmatprep.subr.mxu0 %v1458
  %3701 = vmatpush1.msra.mxu0 %v1457
  %3702 = vmatprep.subr.mxu0 %v1462
  %3703 = vmatpush1.msra.mxu0 %v1461
  %3704 = vmatprep.subr.mxu0 %v1466
  %3705 = vmatpush1.msra.mxu0 %v1465
  %3706 = vmatprep.subr.mxu0 %v1470
  %3707 = vmatpush1.msra.mxu0 %v1469
  %3708 = vmatprep.subr.mxu0 %v1474
  %3709 = vmatpush1.msra.mxu0 %v1473
  %3710 = vmatprep.subr.mxu0 %v1478
  %3711 = vmatpush1.msra.mxu0 %v1477
  %3712 = vmatprep.subr.mxu0 %v1482
  %3713 = vmatpush1.msra.mxu0 %v1481
  %3714 = vmatprep.subr.mxu0 %v1486
  %3715 = vmatpush1.msra.mxu0 %v1485
  %3716 = vmatprep.subr.mxu0 %v1490
  %3717 = vmatpush1.msra.mxu0 %v1489
  %3718 = vmatprep.subr.mxu0 %v1494
  %3719 = vmatpush1.msra.mxu0 %v1493
  %3720 = vmatprep.subr.mxu0 %v1498
  %3721 = vmatpush1.msra.mxu0 %v1497
  %3722 = vmatprep.subr.mxu0 %v1502
  %3723 = vmatpush1.msra.mxu0 %v1501
  %3724 = vmatprep.subr.mxu0 %v1506
  %3725 = vmatpush1.msra.mxu0 %v1505
  %3726 = vmatprep.subr.mxu0 %v1510
  %3727 = vmatpush1.msra.mxu0 %v1509
  %3728 = vmatprep.subr.mxu0 %v1514
  %3729 = vmatpush1.msra.mxu0 %v1513
  %3730 = vmatprep.subr.mxu0 %v1518
  %3731 = vmatpush1.msra.mxu0 %v1517
  %3732 = vmatprep.subr.mxu0 %v1522
  %3733 = vmatpush1.msra.mxu0 %v1521
  %3734 = vmatprep.subr.mxu0 %v1526
  %3735 = vmatpush1.msra.mxu0 %v1525
  %3736 = vmatprep.subr.mxu0 %v1530
  %3737 = vmatpush1.msra.mxu0 %v1529
  %3738 = vmatprep.subr.mxu0 %v1534
  %3739 = vmatpush1.msra.mxu0 %v1533
  %3740 = vmatprep.subr.mxu0 %v1538
  %3741 = vmatpush1.msra.mxu0 %v1537
  %3742 = vmatprep.subr.mxu0 %v1542
  %3743 = vmatpush1.msra.mxu0 %v1541
  %3744 = vmatprep.subr.mxu0 %v1546
  %3745 = vmatpush1.msra.mxu0 %v1545
  %3746 = vmatprep.subr.mxu0 %v1550
  %3747 = vmatpush1.msra.mxu0 %v1549
  %3748 = vmatprep.subr.mxu0 %v1554
  %3749 = vmatpush1.msra.mxu0 %v1553
  %3750 = vmatprep.subr.mxu0 %v1558
  %3751 = vmatpush1.msra.mxu0 %v1557
  %3752 = vmatprep.subr.mxu0 %v1562
  %3753 = vmatpush1.msra.mxu0 %v1561
  %3754 = vmatprep.subr.mxu0 %v1566
  %3755 = vmatpush1.msra.mxu0 %v1565
  %3756 = vmatprep.subr.mxu0 %v1570
  %3757 = vmatpush1.msra.mxu0 %v1569
  %3758 = vmatprep.subr.mxu0 %v1574
  %3759 = vmatpush1.msra.mxu0 %v1573
  %3760 = vmatprep.subr.mxu0 %v1578
  %3761 = vmatpush1.msra.mxu0 %v1577
  %3762 = vmatprep.subr.mxu0 %v1582
  %3763 = vmatpush1.msra.mxu0 %v1581
  %3764 = vmatprep.mubr.f32.mxu0 %v3288
  %3765 = vmatmul.mubr.f32.gmra.mrb[0].mxu0 %v3122
  %v3766 = vpop.f32.mrb[0].mxu0
  %v3767 = vadd.f32 %v1596, %v3766
  %v3768 = vpop.f32.mrb[0].mxu0
  %v3769 = vadd.f32 %v1600, %v3768
  %3770 = vdwg.mxu0
  %v3771 = vxor.u32 %v3696, 2147483648
  %v3772 = vmul.f32 %v3771, 1.442695
  %v3773 = vpow.pop %v3772
  %v3774 = vadd.f32 %v3773, 1.0
  %v3775 = vrcp.pop %v3774
  %v3776 = vmul.f32 1.0, %v3775
  %v3777 = vxor.u32 %v3698, 2147483648
  %v3778 = vmul.f32 %v3777, 1.442695
  %v3779 = vpow.pop %v3778
  %v3780 = vadd.f32 %v3779, 1.0
  %v3781 = vrcp.pop %v3780
  %v3782 = vmul.f32 1.0, %v3781
  %v3783 = vtanh.pop %v3767
  %v3784 = vxor.u32 %v3769, 2147483648
  %v3785 = vmul.f32 %v3784, 1.442695
  %v3786 = vpow.pop %v3785
  %v3787 = vadd.f32 %v3786, 1.0
  %v3788 = vrcp.pop %v3787
  %v3789 = vmul.f32 1.0, %v3788
  %v3790 = vmul.f32 %v3782, %v3286
  %v3791 = vmul.f32 %v3776, %v3783
  %v3792 = vadd.f32 %v3790, %v3791
  %v3793 = vtanh.pop %v3792
  %v3794 = vmul.f32 %v3789, %v3793
  %v3795 = vld [vmem:[#allocation2 + $0xe0] sm:$0xff]
  %v3796 = vld [vmem:[#allocation2 + $0xe8] sm:$0xff]
  %v3797 = vld [vmem:[#allocation2 + $0xf0] sm:$0xff]
  %v3798 = vld [vmem:[#allocation2 + $0xf8] sm:$0xff]
  %3799 = vmatprep.subr.mxu0 %v392
  %3800 = vmatpush1.msra.mxu0 %v391
  %3801 = vmatprep.subr.mxu0 %v396
  %3802 = vmatpush1.msra.mxu0 %v395
  %3803 = vmatprep.subr.mxu0 %v400
  %3804 = vmatpush1.msra.mxu0 %v399
  %3805 = vmatprep.subr.mxu0 %v404
  %3806 = vmatpush1.msra.mxu0 %v403
  %3807 = vmatprep.subr.mxu0 %v408
  %3808 = vmatpush1.msra.mxu0 %v407
  %3809 = vmatprep.subr.mxu0 %v412
  %3810 = vmatpush1.msra.mxu0 %v411
  %3811 = vmatprep.subr.mxu0 %v416
  %3812 = vmatpush1.msra.mxu0 %v415
  %3813 = vmatprep.subr.mxu0 %v420
  %3814 = vmatpush1.msra.mxu0 %v419
  %3815 = vmatprep.subr.mxu0 %v424
  %3816 = vmatpush1.msra.mxu0 %v423
  %3817 = vmatprep.subr.mxu0 %v428
  %3818 = vmatpush1.msra.mxu0 %v427
  %3819 = vmatprep.subr.mxu0 %v432
  %3820 = vmatpush1.msra.mxu0 %v431
  %3821 = vmatprep.subr.mxu0 %v436
  %3822 = vmatpush1.msra.mxu0 %v435
  %3823 = vmatprep.subr.mxu0 %v440
  %3824 = vmatpush1.msra.mxu0 %v439
  %3825 = vmatprep.subr.mxu0 %v444
  %3826 = vmatpush1.msra.mxu0 %v443
  %3827 = vmatprep.subr.mxu0 %v448
  %3828 = vmatpush1.msra.mxu0 %v447
  %3829 = vmatprep.subr.mxu0 %v452
  %3830 = vmatpush1.msra.mxu0 %v451
  %3831 = vmatprep.subr.mxu0 0.0
  %3832 = vmatpush1.msra.mxu0 0.0
  %3833 = vmatprep.subr.mxu0 0.0
  %3834 = vmatpush1.msra.mxu0 0.0
  %3835 = vmatprep.subr.mxu0 0.0
  %3836 = vmatpush1.msra.mxu0 0.0
  %3837 = vmatprep.subr.mxu0 0.0
  %3838 = vmatpush1.msra.mxu0 0.0
  %3839 = vmatprep.subr.mxu0 0.0
  %3840 = vmatpush1.msra.mxu0 0.0
  %3841 = vmatprep.subr.mxu0 0.0
  %3842 = vmatpush1.msra.mxu0 0.0
  %3843 = vmatprep.subr.mxu0 0.0
  %3844 = vmatpush1.msra.mxu0 0.0
  %3845 = vmatprep.subr.mxu0 0.0
  %3846 = vmatpush1.msra.mxu0 0.0
  %3847 = vmatprep.subr.mxu0 0.0
  %3848 = vmatpush1.msra.mxu0 0.0
  %3849 = vmatprep.subr.mxu0 0.0
  %3850 = vmatpush1.msra.mxu0 0.0
  %3851 = vmatprep.subr.mxu0 0.0
  %3852 = vmatpush1.msra.mxu0 0.0
  %3853 = vmatprep.subr.mxu0 0.0
  %3854 = vmatpush1.msra.mxu0 0.0
  %3855 = vmatprep.subr.mxu0 0.0
  %3856 = vmatpush1.msra.mxu0 0.0
  %3857 = vmatprep.subr.mxu0 0.0
  %3858 = vmatpush1.msra.mxu0 0.0
  %3859 = vmatprep.subr.mxu0 0.0
  %3860 = vmatpush1.msra.mxu0 0.0
  %3861 = vmatprep.subr.mxu0 0.0
  %3862 = vmatpush1.msra.mxu0 0.0
  %3863 = vmatprep.mubr.f32.mxu0 0.0
  %3864 = vmatmul.mubr.f32.gmra.mrb[0].mxu0 %v3462
  %v3865 = vpop.f32.mrb[0].mxu0
  %v3866 = vadd.f32 0.0, %v3865
  %v3867 = vpop.f32.mrb[0].mxu0
  %v3868 = vadd.f32 0.0, %v3867
  %3869 = vdwg.mxu0
  %3870 = vmatprep.subr.mxu0 %v394
  %3871 = vmatpush1.msra.mxu0 %v393
  %3872 = vmatprep.subr.mxu0 %v398
  %3873 = vmatpush1.msra.mxu0 %v397
  %3874 = vmatprep.subr.mxu0 %v402
  %3875 = vmatpush1.msra.mxu0 %v401
  %3876 = vmatprep.subr.mxu0 %v406
  %3877 = vmatpush1.msra.mxu0 %v405
  %3878 = vmatprep.subr.mxu0 %v410
  %3879 = vmatpush1.msra.mxu0 %v409
  %3880 = vmatprep.subr.mxu0 %v414
  %3881 = vmatpush1.msra.mxu0 %v413
  %3882 = vmatprep.subr.mxu0 %v418
  %3883 = vmatpush1.msra.mxu0 %v417
  %3884 = vmatprep.subr.mxu0 %v422
  %3885 = vmatpush1.msra.mxu0 %v421
  %3886 = vmatprep.subr.mxu0 %v426
  %3887 = vmatpush1.msra.mxu0 %v425
  %3888 = vmatprep.subr.mxu0 %v430
  %3889 = vmatpush1.msra.mxu0 %v429
  %3890 = vmatprep.subr.mxu0 %v434
  %3891 = vmatpush1.msra.mxu0 %v433
  %3892 = vmatprep.subr.mxu0 %v438
  %3893 = vmatpush1.msra.mxu0 %v437
  %3894 = vmatprep.subr.mxu0 %v442
  %3895 = vmatpush1.msra.mxu0 %v441
  %3896 = vmatprep.subr.mxu0 %v446
  %3897 = vmatpush1.msra.mxu0 %v445
  %3898 = vmatprep.subr.mxu0 %v450
  %3899 = vmatpush1.msra.mxu0 %v449
  %3900 = vmatprep.subr.mxu0 %v454
  %3901 = vmatpush1.msra.mxu0 %v453
  %3902 = vmatprep.subr.mxu0 0.0
  %3903 = vmatpush1.msra.mxu0 0.0
  %3904 = vmatprep.subr.mxu0 0.0
  %3905 = vmatpush1.msra.mxu0 0.0
  %3906 = vmatprep.subr.mxu0 0.0
  %3907 = vmatpush1.msra.mxu0 0.0
  %3908 = vmatprep.subr.mxu0 0.0
  %3909 = vmatpush1.msra.mxu0 0.0
  %3910 = vmatprep.subr.mxu0 0.0
  %3911 = vmatpush1.msra.mxu0 0.0
  %3912 = vmatprep.subr.mxu0 0.0
  %3913 = vmatpush1.msra.mxu0 0.0
  %3914 = vmatprep.subr.mxu0 0.0
  %3915 = vmatpush1.msra.mxu0 0.0
  %3916 = vmatprep.subr.mxu0 0.0
  %3917 = vmatpush1.msra.mxu0 0.0
  %3918 = vmatprep.subr.mxu0 0.0
  %3919 = vmatpush1.msra.mxu0 0.0
  %3920 = vmatprep.subr.mxu0 0.0
  %3921 = vmatpush1.msra.mxu0 0.0
  %3922 = vmatprep.subr.mxu0 0.0
  %3923 = vmatpush1.msra.mxu0 0.0
  %3924 = vmatprep.subr.mxu0 0.0
  %3925 = vmatpush1.msra.mxu0 0.0
  %3926 = vmatprep.subr.mxu0 0.0
  %3927 = vmatpush1.msra.mxu0 0.0
  %3928 = vmatprep.subr.mxu0 0.0
  %3929 = vmatpush1.msra.mxu0 0.0
  %3930 = vmatprep.subr.mxu0 0.0
  %3931 = vmatpush1.msra.mxu0 0.0
  %3932 = vmatprep.subr.mxu0 0.0
  %3933 = vmatpush1.msra.mxu0 0.0
  %3934 = vmatprep.mubr.f32.mxu0 0.0
  %3935 = vmatmul.mubr.f32.gmra.mrb[0].mxu0 %v3462
  %v3936 = vpop.f32.mrb[0].mxu0
  %v3937 = vadd.f32 0.0, %v3936
  %v3938 = vpop.f32.mrb[0].mxu0
  %v3939 = vadd.f32 0.0, %v3938
  %3940 = vdwg.mxu0
  %v3941 = vadd.f32 %v3795, %v3866
  %v3942 = vadd.f32 %v3796, %v3868
  %v3943 = vadd.f32 %v3797, %v3937
  %v3944 = vadd.f32 %v3798, %v3939
  %v3945 = vxor.u32 %v3941, 2147483648
  %v3946 = vmul.f32 %v3945, 1.442695
  %v3947 = vpow.pop %v3946
  %v3948 = vadd.f32 %v3947, 1.0
  %v3949 = vrcp.pop %v3948
  %v3950 = vmul.f32 1.0, %v3949
  %v3951 = vxor.u32 %v3942, 2147483648
  %v3952 = vmul.f32 %v3951, 1.442695
  %v3953 = vpow.pop %v3952
  %v3954 = vadd.f32 %v3953, 1.0
  %v3955 = vrcp.pop %v3954
  %v3956 = vmul.f32 1.0, %v3955
  %v3957 = vtanh.pop %v3943
  %v3958 = vxor.u32 %v3944, 2147483648
  %v3959 = vmul.f32 %v3958, 1.442695
  %v3960 = vpow.pop %v3959
  %v3961 = vadd.f32 %v3960, 1.0
  %v3962 = vrcp.pop %v3961
  %v3963 = vmul.f32 1.0, %v3962
  %v3964 = vmul.f32 %v3956, %v3460
  %v3965 = vmul.f32 %v3950, %v3957
  %v3966 = vadd.f32 %v3964, %v3965
  %v3967 = vtanh.pop %v3966
  %v3968 = vmul.f32 %v3963, %v3967
  %3969 = vmatprep.subr.mxu0 %v800
  %3970 = vmatpush1.msra.mxu0 %v799
  %3971 = vmatprep.subr.mxu0 %v804
  %3972 = vmatpush1.msra.mxu0 %v803
  %3973 = vmatprep.subr.mxu0 %v808
  %3974 = vmatpush1.msra.mxu0 %v807
  %3975 = vmatprep.subr.mxu0 %v812
  %3976 = vmatpush1.msra.mxu0 %v811
  %3977 = vmatprep.subr.mxu0 %v816
  %3978 = vmatpush1.msra.mxu0 %v815
  %3979 = vmatprep.subr.mxu0 %v820
  %3980 = vmatpush1.msra.mxu0 %v819
  %3981 = vmatprep.subr.mxu0 %v824
  %3982 = vmatpush1.msra.mxu0 %v823
  %3983 = vmatprep.subr.mxu0 %v828
  %3984 = vmatpush1.msra.mxu0 %v827
  %3985 = vmatprep.subr.mxu0 %v832
  %3986 = vmatpush1.msra.mxu0 %v831
  %3987 = vmatprep.subr.mxu0 %v836
  %3988 = vmatpush1.msra.mxu0 %v835
  %3989 = vmatprep.subr.mxu0 %v840
  %3990 = vmatpush1.msra.mxu0 %v839
  %3991 = vmatprep.subr.mxu0 %v844
  %3992 = vmatpush1.msra.mxu0 %v843
  %3993 = vmatprep.subr.mxu0 %v848
  %3994 = vmatpush1.msra.mxu0 %v847
  %3995 = vmatprep.subr.mxu0 %v852
  %3996 = vmatpush1.msra.mxu0 %v851
  %3997 = vmatprep.subr.mxu0 %v856
  %3998 = vmatpush1.msra.mxu0 %v855
  %3999 = vmatprep.subr.mxu0 %v860
  %4000 = vmatpush1.msra.mxu0 %v859
  %4001 = vmatprep.subr.mxu0 %v864
  %4002 = vmatpush1.msra.mxu0 %v863
  %4003 = vmatprep.subr.mxu0 %v868
  %4004 = vmatpush1.msra.mxu0 %v867
  %4005 = vmatprep.subr.mxu0 %v872
  %4006 = vmatpush1.msra.mxu0 %v871
  %4007 = vmatprep.subr.mxu0 %v876
  %4008 = vmatpush1.msra.mxu0 %v875
  %4009 = vmatprep.subr.mxu0 %v880
  %4010 = vmatpush1.msra.mxu0 %v879
  %4011 = vmatprep.subr.mxu0 %v884
  %4012 = vmatpush1.msra.mxu0 %v883
  %4013 = vmatprep.subr.mxu0 %v888
  %4014 = vmatpush1.msra.mxu0 %v887
  %4015 = vmatprep.subr.mxu0 %v892
  %4016 = vmatpush1.msra.mxu0 %v891
  %4017 = vmatprep.subr.mxu0 %v896
  %4018 = vmatpush1.msra.mxu0 %v895
  %4019 = vmatprep.subr.mxu0 %v900
  %4020 = vmatpush1.msra.mxu0 %v899
  %4021 = vmatprep.subr.mxu0 %v904
  %4022 = vmatpush1.msra.mxu0 %v903
  %4023 = vmatprep.subr.mxu0 %v908
  %4024 = vmatpush1.msra.mxu0 %v907
  %4025 = vmatprep.subr.mxu0 %v912
  %4026 = vmatpush1.msra.mxu0 %v911
  %4027 = vmatprep.subr.mxu0 %v916
  %4028 = vmatpush1.msra.mxu0 %v915
  %4029 = vmatprep.subr.mxu0 %v920
  %4030 = vmatpush1.msra.mxu0 %v919
  %4031 = vmatprep.subr.mxu0 %v924
  %4032 = vmatpush1.msra.mxu0 %v923
  %4033 = vmatprep.mubr.f32.mxu0 %v3628
  %4034 = vmatmul.mubr.f32.gmra.mrb[0].mxu0 %v3462
  %v4035 = vpop.f32.mrb[0].mxu0
  %v4036 = vadd.f32 %v932, %v4035
  %v4037 = vpop.f32.mrb[0].mxu0
  %v4038 = vadd.f32 %v936, %v4037
  %4039 = vdwg.mxu0
  %4040 = vmatprep.subr.mxu0 %v802
  %4041 = vmatpush1.msra.mxu0 %v801
  %4042 = vmatprep.subr.mxu0 %v806
  %4043 = vmatpush1.msra.mxu0 %v805
  %4044 = vmatprep.subr.mxu0 %v810
  %4045 = vmatpush1.msra.mxu0 %v809
  %4046 = vmatprep.subr.mxu0 %v814
  %4047 = vmatpush1.msra.mxu0 %v813
  %4048 = vmatprep.subr.mxu0 %v818
  %4049 = vmatpush1.msra.mxu0 %v817
  %4050 = vmatprep.subr.mxu0 %v822
  %4051 = vmatpush1.msra.mxu0 %v821
  %4052 = vmatprep.subr.mxu0 %v826
  %4053 = vmatpush1.msra.mxu0 %v825
  %4054 = vmatprep.subr.mxu0 %v830
  %4055 = vmatpush1.msra.mxu0 %v829
  %4056 = vmatprep.subr.mxu0 %v834
  %4057 = vmatpush1.msra.mxu0 %v833
  %4058 = vmatprep.subr.mxu0 %v838
  %4059 = vmatpush1.msra.mxu0 %v837
  %4060 = vmatprep.subr.mxu0 %v842
  %4061 = vmatpush1.msra.mxu0 %v841
  %4062 = vmatprep.subr.mxu0 %v846
  %4063 = vmatpush1.msra.mxu0 %v845
  %4064 = vmatprep.subr.mxu0 %v850
  %4065 = vmatpush1.msra.mxu0 %v849
  %4066 = vmatprep.subr.mxu0 %v854
  %4067 = vmatpush1.msra.mxu0 %v853
  %4068 = vmatprep.subr.mxu0 %v858
  %4069 = vmatpush1.msra.mxu0 %v857
  %4070 = vmatprep.subr.mxu0 %v862
  %4071 = vmatpush1.msra.mxu0 %v861
  %4072 = vmatprep.subr.mxu0 %v866
  %4073 = vmatpush1.msra.mxu0 %v865
  %4074 = vmatprep.subr.mxu0 %v870
  %4075 = vmatpush1.msra.mxu0 %v869
  %4076 = vmatprep.subr.mxu0 %v874
  %4077 = vmatpush1.msra.mxu0 %v873
  %4078 = vmatprep.subr.mxu0 %v878
  %4079 = vmatpush1.msra.mxu0 %v877
  %4080 = vmatprep.subr.mxu0 %v882
  %4081 = vmatpush1.msra.mxu0 %v881
  %4082 = vmatprep.subr.mxu0 %v886
  %4083 = vmatpush1.msra.mxu0 %v885
  %4084 = vmatprep.subr.mxu0 %v890
  %4085 = vmatpush1.msra.mxu0 %v889
  %4086 = vmatprep.subr.mxu0 %v894
  %4087 = vmatpush1.msra.mxu0 %v893
  %4088 = vmatprep.subr.mxu0 %v898
  %4089 = vmatpush1.msra.mxu0 %v897
  %4090 = vmatprep.subr.mxu0 %v902
  %4091 = vmatpush1.msra.mxu0 %v901
  %4092 = vmatprep.subr.mxu0 %v906
  %4093 = vmatpush1.msra.mxu0 %v905
  %4094 = vmatprep.subr.mxu0 %v910
  %4095 = vmatpush1.msra.mxu0 %v909
  %4096 = vmatprep.subr.mxu0 %v914
  %4097 = vmatpush1.msra.mxu0 %v913
  %4098 = vmatprep.subr.mxu0 %v918
  %4099 = vmatpush1.msra.mxu0 %v917
  %4100 = vmatprep.subr.mxu0 %v922
  %4101 = vmatpush1.msra.mxu0 %v921
  %4102 = vmatprep.subr.mxu0 %v926
  %4103 = vmatpush1.msra.mxu0 %v925
  %4104 = vmatprep.mubr.f32.mxu0 %v3628
  %4105 = vmatmul.mubr.f32.gmra.mrb[0].mxu0 %v3462
  %v4106 = vpop.f32.mrb[0].mxu0
  %v4107 = vadd.f32 %v940, %v4106
  %v4108 = vpop.f32.mrb[0].mxu0
  %v4109 = vadd.f32 %v944, %v4108
  %4110 = vdwg.mxu0
  %v4111 = vxor.u32 %v4036, 2147483648
  %v4112 = vmul.f32 %v4111, 1.442695
  %v4113 = vpow.pop %v4112
  %v4114 = vadd.f32 %v4113, 1.0
  %v4115 = vrcp.pop %v4114
  %v4116 = vmul.f32 1.0, %v4115
  %v4117 = vxor.u32 %v4038, 2147483648
  %v4118 = vmul.f32 %v4117, 1.442695
  %v4119 = vpow.pop %v4118
  %v4120 = vadd.f32 %v4119, 1.0
  %v4121 = vrcp.pop %v4120
  %v4122 = vmul.f32 1.0, %v4121
  %v4123 = vtanh.pop %v4107
  %v4124 = vxor.u32 %v4109, 2147483648
  %v4125 = vmul.f32 %v4124, 1.442695
  %v4126 = vpow.pop %v4125
  %v4127 = vadd.f32 %v4126, 1.0
  %v4128 = vrcp.pop %v4127
  %v4129 = vmul.f32 1.0, %v4128
  %v4130 = vmul.f32 %v4122, %v3626
  %v4131 = vmul.f32 %v4116, %v4123
  %v4132 = vadd.f32 %v4130, %v4131
  %v4133 = vtanh.pop %v4132
  %v4134 = vmul.f32 %v4129, %v4133
  %4135 = vmatprep.subr.mxu0 %v1456
  %4136 = vmatpush1.msra.mxu0 %v1455
  %4137 = vmatprep.subr.mxu0 %v1460
  %4138 = vmatpush1.msra.mxu0 %v1459
  %4139 = vmatprep.subr.mxu0 %v1464
  %4140 = vmatpush1.msra.mxu0 %v1463
  %4141 = vmatprep.subr.mxu0 %v1468
  %4142 = vmatpush1.msra.mxu0 %v1467
  %4143 = vmatprep.subr.mxu0 %v1472
  %4144 = vmatpush1.msra.mxu0 %v1471
  %4145 = vmatprep.subr.mxu0 %v1476
  %4146 = vmatpush1.msra.mxu0 %v1475
  %4147 = vmatprep.subr.mxu0 %v1480
  %4148 = vmatpush1.msra.mxu0 %v1479
  %4149 = vmatprep.subr.mxu0 %v1484
  %4150 = vmatpush1.msra.mxu0 %v1483
  %4151 = vmatprep.subr.mxu0 %v1488
  %4152 = vmatpush1.msra.mxu0 %v1487
  %4153 = vmatprep.subr.mxu0 %v1492
  %4154 = vmatpush1.msra.mxu0 %v1491
  %4155 = vmatprep.subr.mxu0 %v1496
  %4156 = vmatpush1.msra.mxu0 %v1495
  %4157 = vmatprep.subr.mxu0 %v1500
  %4158 = vmatpush1.msra.mxu0 %v1499
  %4159 = vmatprep.subr.mxu0 %v1504
  %4160 = vmatpush1.msra.mxu0 %v1503
  %4161 = vmatprep.subr.mxu0 %v1508
  %4162 = vmatpush1.msra.mxu0 %v1507
  %4163 = vmatprep.subr.mxu0 %v1512
  %4164 = vmatpush1.msra.mxu0 %v1511
  %4165 = vmatprep.subr.mxu0 %v1516
  %4166 = vmatpush1.msra.mxu0 %v1515
  %4167 = vmatprep.subr.mxu0 %v1520
  %4168 = vmatpush1.msra.mxu0 %v1519
  %4169 = vmatprep.subr.mxu0 %v1524
  %4170 = vmatpush1.msra.mxu0 %v1523
  %4171 = vmatprep.subr.mxu0 %v1528
  %4172 = vmatpush1.msra.mxu0 %v1527
  %4173 = vmatprep.subr.mxu0 %v1532
  %4174 = vmatpush1.msra.mxu0 %v1531
  %4175 = vmatprep.subr.mxu0 %v1536
  %4176 = vmatpush1.msra.mxu0 %v1535
  %4177 = vmatprep.subr.mxu0 %v1540
  %4178 = vmatpush1.msra.mxu0 %v1539
  %4179 = vmatprep.subr.mxu0 %v1544
  %4180 = vmatpush1.msra.mxu0 %v1543
  %4181 = vmatprep.subr.mxu0 %v1548
  %4182 = vmatpush1.msra.mxu0 %v1547
  %4183 = vmatprep.subr.mxu0 %v1552
  %4184 = vmatpush1.msra.mxu0 %v1551
  %4185 = vmatprep.subr.mxu0 %v1556
  %4186 = vmatpush1.msra.mxu0 %v1555
  %4187 = vmatprep.subr.mxu0 %v1560
  %4188 = vmatpush1.msra.mxu0 %v1559
  %4189 = vmatprep.subr.mxu0 %v1564
  %4190 = vmatpush1.msra.mxu0 %v1563
  %4191 = vmatprep.subr.mxu0 %v1568
  %4192 = vmatpush1.msra.mxu0 %v1567
  %4193 = vmatprep.subr.mxu0 %v1572
  %4194 = vmatpush1.msra.mxu0 %v1571
  %4195 = vmatprep.subr.mxu0 %v1576
  %4196 = vmatpush1.msra.mxu0 %v1575
  %4197 = vmatprep.subr.mxu0 %v1580
  %4198 = vmatpush1.msra.mxu0 %v1579
  %4199 = vmatprep.mubr.f32.mxu0 %v3794
  %4200 = vmatmul.mubr.f32.gmra.mrb[0].mxu0 %v3628
  %v4201 = vpop.f32.mrb[0].mxu0
  %v4202 = vadd.f32 %v1588, %v4201
  %v4203 = vpop.f32.mrb[0].mxu0
  %v4204 = vadd.f32 %v1592, %v4203
  %4205 = vdwg.mxu0
  %4206 = vmatprep.subr.mxu0 %v1458
  %4207 = vmatpush1.msra.mxu0 %v1457
  %4208 = vmatprep.subr.mxu0 %v1462
  %4209 = vmatpush1.msra.mxu0 %v1461
  %4210 = vmatprep.subr.mxu0 %v1466
  %4211 = vmatpush1.msra.mxu0 %v1465
  %4212 = vmatprep.subr.mxu0 %v1470
  %4213 = vmatpush1.msra.mxu0 %v1469
  %4214 = vmatprep.subr.mxu0 %v1474
  %4215 = vmatpush1.msra.mxu0 %v1473
  %4216 = vmatprep.subr.mxu0 %v1478
  %4217 = vmatpush1.msra.mxu0 %v1477
  %4218 = vmatprep.subr.mxu0 %v1482
  %4219 = vmatpush1.msra.mxu0 %v1481
  %4220 = vmatprep.subr.mxu0 %v1486
  %4221 = vmatpush1.msra.mxu0 %v1485
  %4222 = vmatprep.subr.mxu0 %v1490
  %4223 = vmatpush1.msra.mxu0 %v1489
  %4224 = vmatprep.subr.mxu0 %v1494
  %4225 = vmatpush1.msra.mxu0 %v1493
  %4226 = vmatprep.subr.mxu0 %v1498
  %4227 = vmatpush1.msra.mxu0 %v1497
  %4228 = vmatprep.subr.mxu0 %v1502
  %4229 = vmatpush1.msra.mxu0 %v1501
  %4230 = vmatprep.subr.mxu0 %v1506
  %4231 = vmatpush1.msra.mxu0 %v1505
  %4232 = vmatprep.subr.mxu0 %v1510
  %4233 = vmatpush1.msra.mxu0 %v1509
  %4234 = vmatprep.subr.mxu0 %v1514
  %4235 = vmatpush1.msra.mxu0 %v1513
  %4236 = vmatprep.subr.mxu0 %v1518
  %4237 = vmatpush1.msra.mxu0 %v1517
  %4238 = vmatprep.subr.mxu0 %v1522
  %4239 = vmatpush1.msra.mxu0 %v1521
  %4240 = vmatprep.subr.mxu0 %v1526
  %4241 = vmatpush1.msra.mxu0 %v1525
  %4242 = vmatprep.subr.mxu0 %v1530
  %4243 = vmatpush1.msra.mxu0 %v1529
  %4244 = vmatprep.subr.mxu0 %v1534
  %4245 = vmatpush1.msra.mxu0 %v1533
  %4246 = vmatprep.subr.mxu0 %v1538
  %4247 = vmatpush1.msra.mxu0 %v1537
  %4248 = vmatprep.subr.mxu0 %v1542
  %4249 = vmatpush1.msra.mxu0 %v1541
  %4250 = vmatprep.subr.mxu0 %v1546
  %4251 = vmatpush1.msra.mxu0 %v1545
  %4252 = vmatprep.subr.mxu0 %v1550
  %4253 = vmatpush1.msra.mxu0 %v1549
  %4254 = vmatprep.subr.mxu0 %v1554
  %4255 = vmatpush1.msra.mxu0 %v1553
  %4256 = vmatprep.subr.mxu0 %v1558
  %4257 = vmatpush1.msra.mxu0 %v1557
  %4258 = vmatprep.subr.mxu0 %v1562
  %4259 = vmatpush1.msra.mxu0 %v1561
  %4260 = vmatprep.subr.mxu0 %v1566
  %4261 = vmatpush1.msra.mxu0 %v1565
  %4262 = vmatprep.subr.mxu0 %v1570
  %4263 = vmatpush1.msra.mxu0 %v1569
  %4264 = vmatprep.subr.mxu0 %v1574
  %4265 = vmatpush1.msra.mxu0 %v1573
  %4266 = vmatprep.subr.mxu0 %v1578
  %4267 = vmatpush1.msra.mxu0 %v1577
  %4268 = vmatprep.subr.mxu0 %v1582
  %4269 = vmatpush1.msra.mxu0 %v1581
  %4270 = vmatprep.mubr.f32.mxu0 %v3794
  %4271 = vmatmul.mubr.f32.gmra.mrb[0].mxu0 %v3628
  %v4272 = vpop.f32.mrb[0].mxu0
  %v4273 = vadd.f32 %v1596, %v4272
  %v4274 = vpop.f32.mrb[0].mxu0
  %v4275 = vadd.f32 %v1600, %v4274
  %4276 = vdwg.mxu0
  %v4277 = vxor.u32 %v4202, 2147483648
  %v4278 = vmul.f32 %v4277, 1.442695
  %v4279 = vpow.pop %v4278
  %v4280 = vadd.f32 %v4279, 1.0
  %v4281 = vrcp.pop %v4280
  %v4282 = vmul.f32 1.0, %v4281
  %v4283 = vxor.u32 %v4204, 2147483648
  %v4284 = vmul.f32 %v4283, 1.442695
  %v4285 = vpow.pop %v4284
  %v4286 = vadd.f32 %v4285, 1.0
  %v4287 = vrcp.pop %v4286
  %v4288 = vmul.f32 1.0, %v4287
  %v4289 = vtanh.pop %v4273
  %v4290 = vxor.u32 %v4275, 2147483648
  %v4291 = vmul.f32 %v4290, 1.442695
  %v4292 = vpow.pop %v4291
  %v4293 = vadd.f32 %v4292, 1.0
  %v4294 = vrcp.pop %v4293
  %v4295 = vmul.f32 1.0, %v4294
  %v4296 = vmul.f32 %v4288, %v3792
  %v4297 = vmul.f32 %v4282, %v4289
  %v4298 = vadd.f32 %v4296, %v4297
  %v4299 = vtanh.pop %v4298
  %v4300 = vmul.f32 %v4295, %v4299
  %4301 = vmatprep.subr.mxu0 %v800
  %4302 = vmatpush1.msra.mxu0 %v799
  %4303 = vmatprep.subr.mxu0 %v804
  %4304 = vmatpush1.msra.mxu0 %v803
  %4305 = vmatprep.subr.mxu0 %v808
  %4306 = vmatpush1.msra.mxu0 %v807
  %4307 = vmatprep.subr.mxu0 %v812
  %4308 = vmatpush1.msra.mxu0 %v811
  %4309 = vmatprep.subr.mxu0 %v816
  %4310 = vmatpush1.msra.mxu0 %v815
  %4311 = vmatprep.subr.mxu0 %v820
  %4312 = vmatpush1.msra.mxu0 %v819
  %4313 = vmatprep.subr.mxu0 %v824
  %4314 = vmatpush1.msra.mxu0 %v823
  %4315 = vmatprep.subr.mxu0 %v828
  %4316 = vmatpush1.msra.mxu0 %v827
  %4317 = vmatprep.subr.mxu0 %v832
  %4318 = vmatpush1.msra.mxu0 %v831
  %4319 = vmatprep.subr.mxu0 %v836
  %4320 = vmatpush1.msra.mxu0 %v835
  %4321 = vmatprep.subr.mxu0 %v840
  %4322 = vmatpush1.msra.mxu0 %v839
  %4323 = vmatprep.subr.mxu0 %v844
  %4324 = vmatpush1.msra.mxu0 %v843
  %4325 = vmatprep.subr.mxu0 %v848
  %4326 = vmatpush1.msra.mxu0 %v847
  %4327 = vmatprep.subr.mxu0 %v852
  %4328 = vmatpush1.msra.mxu0 %v851
  %4329 = vmatprep.subr.mxu0 %v856
  %4330 = vmatpush1.msra.mxu0 %v855
  %4331 = vmatprep.subr.mxu0 %v860
  %4332 = vmatpush1.msra.mxu0 %v859
  %4333 = vmatprep.subr.mxu0 %v864
  %4334 = vmatpush1.msra.mxu0 %v863
  %4335 = vmatprep.subr.mxu0 %v868
  %4336 = vmatpush1.msra.mxu0 %v867
  %4337 = vmatprep.subr.mxu0 %v872
  %4338 = vmatpush1.msra.mxu0 %v871
  %4339 = vmatprep.subr.mxu0 %v876
  %4340 = vmatpush1.msra.mxu0 %v875
  %4341 = vmatprep.subr.mxu0 %v880
  %4342 = vmatpush1.msra.mxu0 %v879
  %4343 = vmatprep.subr.mxu0 %v884
  %4344 = vmatpush1.msra.mxu0 %v883
  %4345 = vmatprep.subr.mxu0 %v888
  %4346 = vmatpush1.msra.mxu0 %v887
  %4347 = vmatprep.subr.mxu0 %v892
  %4348 = vmatpush1.msra.mxu0 %v891
  %4349 = vmatprep.subr.mxu0 %v896
  %4350 = vmatpush1.msra.mxu0 %v895
  %4351 = vmatprep.subr.mxu0 %v900
  %4352 = vmatpush1.msra.mxu0 %v899
  %4353 = vmatprep.subr.mxu0 %v904
  %4354 = vmatpush1.msra.mxu0 %v903
  %4355 = vmatprep.subr.mxu0 %v908
  %4356 = vmatpush1.msra.mxu0 %v907
  %4357 = vmatprep.subr.mxu0 %v912
  %4358 = vmatpush1.msra.mxu0 %v911
  %4359 = vmatprep.subr.mxu0 %v916
  %4360 = vmatpush1.msra.mxu0 %v915
  %4361 = vmatprep.subr.mxu0 %v920
  %4362 = vmatpush1.msra.mxu0 %v919
  %4363 = vmatprep.subr.mxu0 %v924
  %4364 = vmatpush1.msra.mxu0 %v923
  %4365 = vmatprep.mubr.f32.mxu0 %v4134
  %4366 = vmatmul.mubr.f32.gmra.mrb[0].mxu0 %v3968
  %v4367 = vpop.f32.mrb[0].mxu0
  %v4368 = vadd.f32 %v932, %v4367
  %v4369 = vpop.f32.mrb[0].mxu0
  %v4370 = vadd.f32 %v936, %v4369
  %4371 = vdwg.mxu0
  %4372 = vmatprep.subr.mxu0 %v802
  %4373 = vmatpush1.msra.mxu0 %v801
  %4374 = vmatprep.subr.mxu0 %v806
  %4375 = vmatpush1.msra.mxu0 %v805
  %4376 = vmatprep.subr.mxu0 %v810
  %4377 = vmatpush1.msra.mxu0 %v809
  %4378 = vmatprep.subr.mxu0 %v814
  %4379 = vmatpush1.msra.mxu0 %v813
  %4380 = vmatprep.subr.mxu0 %v818
  %4381 = vmatpush1.msra.mxu0 %v817
  %4382 = vmatprep.subr.mxu0 %v822
  %4383 = vmatpush1.msra.mxu0 %v821
  %4384 = vmatprep.subr.mxu0 %v826
  %4385 = vmatpush1.msra.mxu0 %v825
  %4386 = vmatprep.subr.mxu0 %v830
  %4387 = vmatpush1.msra.mxu0 %v829
  %4388 = vmatprep.subr.mxu0 %v834
  %4389 = vmatpush1.msra.mxu0 %v833
  %4390 = vmatprep.subr.mxu0 %v838
  %4391 = vmatpush1.msra.mxu0 %v837
  %4392 = vmatprep.subr.mxu0 %v842
  %4393 = vmatpush1.msra.mxu0 %v841
  %4394 = vmatprep.subr.mxu0 %v846
  %4395 = vmatpush1.msra.mxu0 %v845
  %4396 = vmatprep.subr.mxu0 %v850
  %4397 = vmatpush1.msra.mxu0 %v849
  %4398 = vmatprep.subr.mxu0 %v854
  %4399 = vmatpush1.msra.mxu0 %v853
  %4400 = vmatprep.subr.mxu0 %v858
  %4401 = vmatpush1.msra.mxu0 %v857
  %4402 = vmatprep.subr.mxu0 %v862
  %4403 = vmatpush1.msra.mxu0 %v861
  %4404 = vmatprep.subr.mxu0 %v866
  %4405 = vmatpush1.msra.mxu0 %v865
  %4406 = vmatprep.subr.mxu0 %v870
  %4407 = vmatpush1.msra.mxu0 %v869
  %4408 = vmatprep.subr.mxu0 %v874
  %4409 = vmatpush1.msra.mxu0 %v873
  %4410 = vmatprep.subr.mxu0 %v878
  %4411 = vmatpush1.msra.mxu0 %v877
  %4412 = vmatprep.subr.mxu0 %v882
  %4413 = vmatpush1.msra.mxu0 %v881
  %4414 = vmatprep.subr.mxu0 %v886
  %4415 = vmatpush1.msra.mxu0 %v885
  %4416 = vmatprep.subr.mxu0 %v890
  %4417 = vmatpush1.msra.mxu0 %v889
  %4418 = vmatprep.subr.mxu0 %v894
  %4419 = vmatpush1.msra.mxu0 %v893
  %4420 = vmatprep.subr.mxu0 %v898
  %4421 = vmatpush1.msra.mxu0 %v897
  %4422 = vmatprep.subr.mxu0 %v902
  %4423 = vmatpush1.msra.mxu0 %v901
  %4424 = vmatprep.subr.mxu0 %v906
  %4425 = vmatpush1.msra.mxu0 %v905
  %4426 = vmatprep.subr.mxu0 %v910
  %4427 = vmatpush1.msra.mxu0 %v909
  %4428 = vmatprep.subr.mxu0 %v914
  %4429 = vmatpush1.msra.mxu0 %v913
  %4430 = vmatprep.subr.mxu0 %v918
  %4431 = vmatpush1.msra.mxu0 %v917
  %4432 = vmatprep.subr.mxu0 %v922
  %4433 = vmatpush1.msra.mxu0 %v921
  %4434 = vmatprep.subr.mxu0 %v926
  %4435 = vmatpush1.msra.mxu0 %v925
  %4436 = vmatprep.mubr.f32.mxu0 %v4134
  %4437 = vmatmul.mubr.f32.gmra.mrb[0].mxu0 %v3968
  %v4438 = vpop.f32.mrb[0].mxu0
  %v4439 = vadd.f32 %v940, %v4438
  %v4440 = vpop.f32.mrb[0].mxu0
  %v4441 = vadd.f32 %v944, %v4440
  %4442 = vdwg.mxu0
  %v4443 = vxor.u32 %v4368, 2147483648
  %v4444 = vmul.f32 %v4443, 1.442695
  %v4445 = vpow.pop %v4444
  %v4446 = vadd.f32 %v4445, 1.0
  %v4447 = vrcp.pop %v4446
  %v4448 = vmul.f32 1.0, %v4447
  %v4449 = vxor.u32 %v4370, 2147483648
  %v4450 = vmul.f32 %v4449, 1.442695
  %v4451 = vpow.pop %v4450
  %v4452 = vadd.f32 %v4451, 1.0
  %v4453 = vrcp.pop %v4452
  %v4454 = vmul.f32 1.0, %v4453
  %v4455 = vtanh.pop %v4439
  %v4456 = vxor.u32 %v4441, 2147483648
  %v4457 = vmul.f32 %v4456, 1.442695
  %v4458 = vpow.pop %v4457
  %v4459 = vadd.f32 %v4458, 1.0
  %v4460 = vrcp.pop %v4459
  %v4461 = vmul.f32 1.0, %v4460
  %v4462 = vmul.f32 %v4454, %v4132
  %v4463 = vmul.f32 %v4448, %v4455
  %v4464 = vadd.f32 %v4462, %v4463
  %v4465 = vtanh.pop %v4464
  %v4466 = vmul.f32 %v4461, %v4465
  %4467 = vmatprep.subr.mxu0 %v1456
  %4468 = vmatpush1.msra.mxu0 %v1455
  %4469 = vmatprep.subr.mxu0 %v1460
  %4470 = vmatpush1.msra.mxu0 %v1459
  %4471 = vmatprep.subr.mxu0 %v1464
  %4472 = vmatpush1.msra.mxu0 %v1463
  %4473 = vmatprep.subr.mxu0 %v1468
  %4474 = vmatpush1.msra.mxu0 %v1467
  %4475 = vmatprep.subr.mxu0 %v1472
  %4476 = vmatpush1.msra.mxu0 %v1471
  %4477 = vmatprep.subr.mxu0 %v1476
  %4478 = vmatpush1.msra.mxu0 %v1475
  %4479 = vmatprep.subr.mxu0 %v1480
  %4480 = vmatpush1.msra.mxu0 %v1479
  %4481 = vmatprep.subr.mxu0 %v1484
  %4482 = vmatpush1.msra.mxu0 %v1483
  %4483 = vmatprep.subr.mxu0 %v1488
  %4484 = vmatpush1.msra.mxu0 %v1487
  %4485 = vmatprep.subr.mxu0 %v1492
  %4486 = vmatpush1.msra.mxu0 %v1491
  %4487 = vmatprep.subr.mxu0 %v1496
  %4488 = vmatpush1.msra.mxu0 %v1495
  %4489 = vmatprep.subr.mxu0 %v1500
  %4490 = vmatpush1.msra.mxu0 %v1499
  %4491 = vmatprep.subr.mxu0 %v1504
  %4492 = vmatpush1.msra.mxu0 %v1503
  %4493 = vmatprep.subr.mxu0 %v1508
  %4494 = vmatpush1.msra.mxu0 %v1507
  %4495 = vmatprep.subr.mxu0 %v1512
  %4496 = vmatpush1.msra.mxu0 %v1511
  %4497 = vmatprep.subr.mxu0 %v1516
  %4498 = vmatpush1.msra.mxu0 %v1515
  %4499 = vmatprep.subr.mxu0 %v1520
  %4500 = vmatpush1.msra.mxu0 %v1519
  %4501 = vmatprep.subr.mxu0 %v1524
  %4502 = vmatpush1.msra.mxu0 %v1523
  %4503 = vmatprep.subr.mxu0 %v1528
  %4504 = vmatpush1.msra.mxu0 %v1527
  %4505 = vmatprep.subr.mxu0 %v1532
  %4506 = vmatpush1.msra.mxu0 %v1531
  %4507 = vmatprep.subr.mxu0 %v1536
  %4508 = vmatpush1.msra.mxu0 %v1535
  %4509 = vmatprep.subr.mxu0 %v1540
  %4510 = vmatpush1.msra.mxu0 %v1539
  %4511 = vmatprep.subr.mxu0 %v1544
  %4512 = vmatpush1.msra.mxu0 %v1543
  %4513 = vmatprep.subr.mxu0 %v1548
  %4514 = vmatpush1.msra.mxu0 %v1547
  %4515 = vmatprep.subr.mxu0 %v1552
  %4516 = vmatpush1.msra.mxu0 %v1551
  %4517 = vmatprep.subr.mxu0 %v1556
  %4518 = vmatpush1.msra.mxu0 %v1555
  %4519 = vmatprep.subr.mxu0 %v1560
  %4520 = vmatpush1.msra.mxu0 %v1559
  %4521 = vmatprep.subr.mxu0 %v1564
  %4522 = vmatpush1.msra.mxu0 %v1563
  %4523 = vmatprep.subr.mxu0 %v1568
  %4524 = vmatpush1.msra.mxu0 %v1567
  %4525 = vmatprep.subr.mxu0 %v1572
  %4526 = vmatpush1.msra.mxu0 %v1571
  %4527 = vmatprep.subr.mxu0 %v1576
  %4528 = vmatpush1.msra.mxu0 %v1575
  %4529 = vmatprep.subr.mxu0 %v1580
  %4530 = vmatpush1.msra.mxu0 %v1579
  %4531 = vmatprep.mubr.f32.mxu0 %v4300
  %4532 = vmatmul.mubr.f32.gmra.mrb[0].mxu0 %v4134
  %v4533 = vpop.f32.mrb[0].mxu0
  %v4534 = vadd.f32 %v1588, %v4533
  %v4535 = vpop.f32.mrb[0].mxu0
  %v4536 = vadd.f32 %v1592, %v4535
  %4537 = vdwg.mxu0
  %4538 = vmatprep.subr.mxu0 %v1458
  %4539 = vmatpush1.msra.mxu0 %v1457
  %4540 = vmatprep.subr.mxu0 %v1462
  %4541 = vmatpush1.msra.mxu0 %v1461
  %4542 = vmatprep.subr.mxu0 %v1466
  %4543 = vmatpush1.msra.mxu0 %v1465
  %4544 = vmatprep.subr.mxu0 %v1470
  %4545 = vmatpush1.msra.mxu0 %v1469
  %4546 = vmatprep.subr.mxu0 %v1474
  %4547 = vmatpush1.msra.mxu0 %v1473
  %4548 = vmatprep.subr.mxu0 %v1478
  %4549 = vmatpush1.msra.mxu0 %v1477
  %4550 = vmatprep.subr.mxu0 %v1482
  %4551 = vmatpush1.msra.mxu0 %v1481
  %4552 = vmatprep.subr.mxu0 %v1486
  %4553 = vmatpush1.msra.mxu0 %v1485
  %4554 = vmatprep.subr.mxu0 %v1490
  %4555 = vmatpush1.msra.mxu0 %v1489
  %4556 = vmatprep.subr.mxu0 %v1494
  %4557 = vmatpush1.msra.mxu0 %v1493
  %4558 = vmatprep.subr.mxu0 %v1498
  %4559 = vmatpush1.msra.mxu0 %v1497
  %4560 = vmatprep.subr.mxu0 %v1502
  %4561 = vmatpush1.msra.mxu0 %v1501
  %4562 = vmatprep.subr.mxu0 %v1506
  %4563 = vmatpush1.msra.mxu0 %v1505
  %4564 = vmatprep.subr.mxu0 %v1510
  %4565 = vmatpush1.msra.mxu0 %v1509
  %4566 = vmatprep.subr.mxu0 %v1514
  %4567 = vmatpush1.msra.mxu0 %v1513
  %4568 = vmatprep.subr.mxu0 %v1518
  %4569 = vmatpush1.msra.mxu0 %v1517
  %4570 = vmatprep.subr.mxu0 %v1522
  %4571 = vmatpush1.msra.mxu0 %v1521
  %4572 = vmatprep.subr.mxu0 %v1526
  %4573 = vmatpush1.msra.mxu0 %v1525
  %4574 = vmatprep.subr.mxu0 %v1530
  %4575 = vmatpush1.msra.mxu0 %v1529
  %4576 = vmatprep.subr.mxu0 %v1534
  %4577 = vmatpush1.msra.mxu0 %v1533
  %4578 = vmatprep.subr.mxu0 %v1538
  %4579 = vmatpush1.msra.mxu0 %v1537
  %4580 = vmatprep.subr.mxu0 %v1542
  %4581 = vmatpush1.msra.mxu0 %v1541
  %4582 = vmatprep.subr.mxu0 %v1546
  %4583 = vmatpush1.msra.mxu0 %v1545
  %4584 = vmatprep.subr.mxu0 %v1550
  %4585 = vmatpush1.msra.mxu0 %v1549
  %4586 = vmatprep.subr.mxu0 %v1554
  %4587 = vmatpush1.msra.mxu0 %v1553
  %4588 = vmatprep.subr.mxu0 %v1558
  %4589 = vmatpush1.msra.mxu0 %v1557
  %4590 = vmatprep.subr.mxu0 %v1562
  %4591 = vmatpush1.msra.mxu0 %v1561
  %4592 = vmatprep.subr.mxu0 %v1566
  %4593 = vmatpush1.msra.mxu0 %v1565
  %4594 = vmatprep.subr.mxu0 %v1570
  %4595 = vmatpush1.msra.mxu0 %v1569
  %4596 = vmatprep.subr.mxu0 %v1574
  %4597 = vmatpush1.msra.mxu0 %v1573
  %4598 = vmatprep.subr.mxu0 %v1578
  %4599 = vmatpush1.msra.mxu0 %v1577
  %4600 = vmatprep.subr.mxu0 %v1582
  %4601 = vmatpush1.msra.mxu0 %v1581
  %4602 = vmatprep.mubr.f32.mxu0 %v4300
  %4603 = vmatmul.mubr.f32.gmra.mrb[0].mxu0 %v4134
  %v4604 = vpop.f32.mrb[0].mxu0
  %v4605 = vadd.f32 %v1596, %v4604
  %v4606 = vpop.f32.mrb[0].mxu0
  %v4607 = vadd.f32 %v1600, %v4606
  %4608 = vdwg.mxu0
  %v4609 = vxor.u32 %v4534, 2147483648
  %v4610 = vmul.f32 %v4609, 1.442695
  %v4611 = vpow.pop %v4610
  %v4612 = vadd.f32 %v4611, 1.0
  %v4613 = vrcp.pop %v4612
  %v4614 = vmul.f32 1.0, %v4613
  %v4615 = vxor.u32 %v4536, 2147483648
  %v4616 = vmul.f32 %v4615, 1.442695
  %v4617 = vpow.pop %v4616
  %v4618 = vadd.f32 %v4617, 1.0
  %v4619 = vrcp.pop %v4618
  %v4620 = vmul.f32 1.0, %v4619
  %v4621 = vtanh.pop %v4605
  %v4622 = vxor.u32 %v4607, 2147483648
  %v4623 = vmul.f32 %v4622, 1.442695
  %v4624 = vpow.pop %v4623
  %v4625 = vadd.f32 %v4624, 1.0
  %v4626 = vrcp.pop %v4625
  %v4627 = vmul.f32 1.0, %v4626
  %v4628 = vmul.f32 %v4620, %v4298
  %v4629 = vmul.f32 %v4614, %v4621
  %v4630 = vadd.f32 %v4628, %v4629
  %v4631 = vtanh.pop %v4630
  %v4632 = vmul.f32 %v4627, %v4631
  %4633 = vmatprep.subr.mxu0 %v1456
  %4634 = vmatpush1.msra.mxu0 %v1455
  %4635 = vmatprep.subr.mxu0 %v1460
  %4636 = vmatpush1.msra.mxu0 %v1459
  %4637 = vmatprep.subr.mxu0 %v1464
  %4638 = vmatpush1.msra.mxu0 %v1463
  %4639 = vmatprep.subr.mxu0 %v1468
  %4640 = vmatpush1.msra.mxu0 %v1467
  %4641 = vmatprep.subr.mxu0 %v1472
  %4642 = vmatpush1.msra.mxu0 %v1471
  %4643 = vmatprep.subr.mxu0 %v1476
  %4644 = vmatpush1.msra.mxu0 %v1475
  %4645 = vmatprep.subr.mxu0 %v1480
  %4646 = vmatpush1.msra.mxu0 %v1479
  %4647 = vmatprep.subr.mxu0 %v1484
  %4648 = vmatpush1.msra.mxu0 %v1483
  %4649 = vmatprep.subr.mxu0 %v1488
  %4650 = vmatpush1.msra.mxu0 %v1487
  %4651 = vmatprep.subr.mxu0 %v1492
  %4652 = vmatpush1.msra.mxu0 %v1491
  %4653 = vmatprep.subr.mxu0 %v1496
  %4654 = vmatpush1.msra.mxu0 %v1495
  %4655 = vmatprep.subr.mxu0 %v1500
  %4656 = vmatpush1.msra.mxu0 %v1499
  %4657 = vmatprep.subr.mxu0 %v1504
  %4658 = vmatpush1.msra.mxu0 %v1503
  %4659 = vmatprep.subr.mxu0 %v1508
  %4660 = vmatpush1.msra.mxu0 %v1507
  %4661 = vmatprep.subr.mxu0 %v1512
  %4662 = vmatpush1.msra.mxu0 %v1511
  %4663 = vmatprep.subr.mxu0 %v1516
  %4664 = vmatpush1.msra.mxu0 %v1515
  %4665 = vmatprep.subr.mxu0 %v1520
  %4666 = vmatpush1.msra.mxu0 %v1519
  %4667 = vmatprep.subr.mxu0 %v1524
  %4668 = vmatpush1.msra.mxu0 %v1523
  %4669 = vmatprep.subr.mxu0 %v1528
  %4670 = vmatpush1.msra.mxu0 %v1527
  %4671 = vmatprep.subr.mxu0 %v1532
  %4672 = vmatpush1.msra.mxu0 %v1531
  %4673 = vmatprep.subr.mxu0 %v1536
  %4674 = vmatpush1.msra.mxu0 %v1535
  %4675 = vmatprep.subr.mxu0 %v1540
  %4676 = vmatpush1.msra.mxu0 %v1539
  %4677 = vmatprep.subr.mxu0 %v1544
  %4678 = vmatpush1.msra.mxu0 %v1543
  %4679 = vmatprep.subr.mxu0 %v1548
  %4680 = vmatpush1.msra.mxu0 %v1547
  %4681 = vmatprep.subr.mxu0 %v1552
  %4682 = vmatpush1.msra.mxu0 %v1551
  %4683 = vmatprep.subr.mxu0 %v1556
  %4684 = vmatpush1.msra.mxu0 %v1555
  %4685 = vmatprep.subr.mxu0 %v1560
  %4686 = vmatpush1.msra.mxu0 %v1559
  %4687 = vmatprep.subr.mxu0 %v1564
  %4688 = vmatpush1.msra.mxu0 %v1563
  %4689 = vmatprep.subr.mxu0 %v1568
  %4690 = vmatpush1.msra.mxu0 %v1567
  %4691 = vmatprep.subr.mxu0 %v1572
  %4692 = vmatpush1.msra.mxu0 %v1571
  %4693 = vmatprep.subr.mxu0 %v1576
  %4694 = vmatpush1.msra.mxu0 %v1575
  %4695 = vmatprep.subr.mxu0 %v1580
  %4696 = vmatpush1.msra.mxu0 %v1579
  %4697 = vmatprep.mubr.f32.mxu0 %v4632
  %4698 = vmatmul.mubr.f32.gmra.mrb[0].mxu0 %v4466
  %v4699 = vpop.f32.mrb[0].mxu0
  %v4700 = vadd.f32 %v1588, %v4699
  %v4701 = vpop.f32.mrb[0].mxu0
  %v4702 = vadd.f32 %v1592, %v4701
  %4703 = vdwg.mxu0
  %4704 = vmatprep.subr.mxu0 %v1458
  %4705 = vmatpush1.msra.mxu0 %v1457
  %4706 = vmatprep.subr.mxu0 %v1462
  %4707 = vmatpush1.msra.mxu0 %v1461
  %4708 = vmatprep.subr.mxu0 %v1466
  %4709 = vmatpush1.msra.mxu0 %v1465
  %4710 = vmatprep.subr.mxu0 %v1470
  %4711 = vmatpush1.msra.mxu0 %v1469
  %4712 = vmatprep.subr.mxu0 %v1474
  %4713 = vmatpush1.msra.mxu0 %v1473
  %4714 = vmatprep.subr.mxu0 %v1478
  %4715 = vmatpush1.msra.mxu0 %v1477
  %4716 = vmatprep.subr.mxu0 %v1482
  %4717 = vmatpush1.msra.mxu0 %v1481
  %4718 = vmatprep.subr.mxu0 %v1486
  %4719 = vmatpush1.msra.mxu0 %v1485
  %4720 = vmatprep.subr.mxu0 %v1490
  %4721 = vmatpush1.msra.mxu0 %v1489
  %4722 = vmatprep.subr.mxu0 %v1494
  %4723 = vmatpush1.msra.mxu0 %v1493
  %4724 = vmatprep.subr.mxu0 %v1498
  %4725 = vmatpush1.msra.mxu0 %v1497
  %4726 = vmatprep.subr.mxu0 %v1502
  %4727 = vmatpush1.msra.mxu0 %v1501
  %4728 = vmatprep.subr.mxu0 %v1506
  %4729 = vmatpush1.msra.mxu0 %v1505
  %4730 = vmatprep.subr.mxu0 %v1510
  %4731 = vmatpush1.msra.mxu0 %v1509
  %4732 = vmatprep.subr.mxu0 %v1514
  %4733 = vmatpush1.msra.mxu0 %v1513
  %4734 = vmatprep.subr.mxu0 %v1518
  %4735 = vmatpush1.msra.mxu0 %v1517
  %4736 = vmatprep.subr.mxu0 %v1522
  %4737 = vmatpush1.msra.mxu0 %v1521
  %4738 = vmatprep.subr.mxu0 %v1526
  %4739 = vmatpush1.msra.mxu0 %v1525
  %4740 = vmatprep.subr.mxu0 %v1530
  %4741 = vmatpush1.msra.mxu0 %v1529
  %4742 = vmatprep.subr.mxu0 %v1534
  %4743 = vmatpush1.msra.mxu0 %v1533
  %4744 = vmatprep.subr.mxu0 %v1538
  %4745 = vmatpush1.msra.mxu0 %v1537
  %4746 = vmatprep.subr.mxu0 %v1542
  %4747 = vmatpush1.msra.mxu0 %v1541
  %4748 = vmatprep.subr.mxu0 %v1546
  %4749 = vmatpush1.msra.mxu0 %v1545
  %4750 = vmatprep.subr.mxu0 %v1550
  %4751 = vmatpush1.msra.mxu0 %v1549
  %4752 = vmatprep.subr.mxu0 %v1554
  %4753 = vmatpush1.msra.mxu0 %v1553
  %4754 = vmatprep.subr.mxu0 %v1558
  %4755 = vmatpush1.msra.mxu0 %v1557
  %4756 = vmatprep.subr.mxu0 %v1562
  %4757 = vmatpush1.msra.mxu0 %v1561
  %4758 = vmatprep.subr.mxu0 %v1566
  %4759 = vmatpush1.msra.mxu0 %v1565
  %4760 = vmatprep.subr.mxu0 %v1570
  %4761 = vmatpush1.msra.mxu0 %v1569
  %4762 = vmatprep.subr.mxu0 %v1574
  %4763 = vmatpush1.msra.mxu0 %v1573
  %4764 = vmatprep.subr.mxu0 %v1578
  %4765 = vmatpush1.msra.mxu0 %v1577
  %4766 = vmatprep.subr.mxu0 %v1582
  %4767 = vmatpush1.msra.mxu0 %v1581
  %4768 = vmatprep.mubr.f32.mxu0 %v4632
  %4769 = vmatmul.mubr.f32.gmra.mrb[0].mxu0 %v4466
  %v4770 = vpop.f32.mrb[0].mxu0
  %v4771 = vadd.f32 %v1596, %v4770
  %v4772 = vpop.f32.mrb[0].mxu0
  %v4773 = vadd.f32 %v1600, %v4772
  %4774 = vdwg.mxu0
  %v4775 = vxor.u32 %v4700, 2147483648
  %v4776 = vmul.f32 %v4775, 1.442695
  %v4777 = vpow.pop %v4776
  %v4778 = vadd.f32 %v4777, 1.0
  %v4779 = vrcp.pop %v4778
  %v4780 = vmul.f32 1.0, %v4779
  %v4781 = vxor.u32 %v4702, 2147483648
  %v4782 = vmul.f32 %v4781, 1.442695
  %v4783 = vpow.pop %v4782
  %v4784 = vadd.f32 %v4783, 1.0
  %v4785 = vrcp.pop %v4784
  %v4786 = vmul.f32 1.0, %v4785
  %v4787 = vtanh.pop %v4771
  %v4788 = vxor.u32 %v4773, 2147483648
  %v4789 = vmul.f32 %v4788, 1.442695
  %v4790 = vpow.pop %v4789
  %v4791 = vadd.f32 %v4790, 1.0
  %v4792 = vrcp.pop %v4791
  %v4793 = vmul.f32 1.0, %v4792
  %v4794 = vmul.f32 %v4786, %v4630
  %v4795 = vmul.f32 %v4780, %v4787
  %v4796 = vadd.f32 %v4794, %v4795
  %v4797 = vtanh.pop %v4796
  %v4798 = vmul.f32 %v4793, %v4797
  %v4799 = vld [vmem:[%s8] sm:$0xff]
  %v4800 = vld [vmem:[%s8 + $0x8] sm:$0xff]
  %v4801 = vld [vmem:[%s8 + $0x10] sm:$0xff]
  %v4802 = vld [vmem:[%s8 + $0x18] sm:$0xff]
  %v4803 = vld [vmem:[%s8 + $0x20] sm:$0xff]
  %v4804 = vld [vmem:[%s8 + $0x28] sm:$0xff]
  %v4805 = vld [vmem:[%s8 + $0x30] sm:$0xff]
  %v4806 = vld [vmem:[%s8 + $0x38] sm:$0xff]
  %v4807 = vld [vmem:[%s8 + $0x40] sm:$0xff]
  %v4808 = vld [vmem:[%s8 + $0x48] sm:$0xff]
  %v4809 = vld [vmem:[%s8 + $0x50] sm:$0xff]
  %v4810 = vld [vmem:[%s8 + $0x58] sm:$0xff]
  %v4811 = vld [vmem:[%s8 + $0x60] sm:$0xff]
  %v4812 = vld [vmem:[%s8 + $0x68] sm:$0xff]
  %v4813 = vld [vmem:[%s8 + $0x70] sm:$0xff]
  %v4814 = vld [vmem:[%s8 + $0x78] sm:$0xff]
  %v4815 = vld [vmem:[%s9] sm:$0x1]
  %v4817 = vlaneseq
  %v4818 = vshrl.u32 %v4817, 7
  %v4819 = vsub.s32 0, %v4818
  %v4820 = vrot.slane %v4815, %v4819
  %4822 = vmatprep.subr.mxu0 0.0
  %4823 = vmatpush1.msra.mxu0 %v4799
  %4824 = vmatprep.subr.mxu0 0.0
  %4825 = vmatpush1.msra.mxu0 %v4800
  %4826 = vmatprep.subr.mxu0 0.0
  %4827 = vmatpush1.msra.mxu0 %v4801
  %4828 = vmatprep.subr.mxu0 0.0
  %4829 = vmatpush1.msra.mxu0 %v4802
  %4830 = vmatprep.subr.mxu0 0.0
  %4831 = vmatpush1.msra.mxu0 %v4803
  %4832 = vmatprep.subr.mxu0 0.0
  %4833 = vmatpush1.msra.mxu0 %v4804
  %4834 = vmatprep.subr.mxu0 0.0
  %4835 = vmatpush1.msra.mxu0 %v4805
  %4836 = vmatprep.subr.mxu0 0.0
  %4837 = vmatpush1.msra.mxu0 %v4806
  %4838 = vmatprep.subr.mxu0 0.0
  %4839 = vmatpush1.msra.mxu0 %v4807
  %4840 = vmatprep.subr.mxu0 0.0
  %4841 = vmatpush1.msra.mxu0 %v4808
  %4842 = vmatprep.subr.mxu0 0.0
  %4843 = vmatpush1.msra.mxu0 %v4809
  %4844 = vmatprep.subr.mxu0 0.0
  %4845 = vmatpush1.msra.mxu0 %v4810
  %4846 = vmatprep.subr.mxu0 0.0
  %4847 = vmatpush1.msra.mxu0 %v4811
  %4848 = vmatprep.subr.mxu0 0.0
  %4849 = vmatpush1.msra.mxu0 %v4812
  %4850 = vmatprep.subr.mxu0 0.0
  %4851 = vmatpush1.msra.mxu0 %v4813
  %4852 = vmatprep.subr.mxu0 0.0
  %4853 = vmatpush1.msra.mxu0 %v4814
  %4854 = vmatprep.subr.mxu0 0.0
  %4855 = vmatpush1.msra.mxu0 0.0
  %4856 = vmatprep.subr.mxu0 0.0
  %4857 = vmatpush1.msra.mxu0 0.0
  %4858 = vmatprep.subr.mxu0 0.0
  %4859 = vmatpush1.msra.mxu0 0.0
  %4860 = vmatprep.subr.mxu0 0.0
  %4861 = vmatpush1.msra.mxu0 0.0
  %4862 = vmatprep.subr.mxu0 0.0
  %4863 = vmatpush1.msra.mxu0 0.0
  %4864 = vmatprep.subr.mxu0 0.0
  %4865 = vmatpush1.msra.mxu0 0.0
  %4866 = vmatprep.subr.mxu0 0.0
  %4867 = vmatpush1.msra.mxu0 0.0
  %4868 = vmatprep.subr.mxu0 0.0
  %4869 = vmatpush1.msra.mxu0 0.0
  %4870 = vmatprep.subr.mxu0 0.0
  %4871 = vmatpush1.msra.mxu0 0.0
  %4872 = vmatprep.subr.mxu0 0.0
  %4873 = vmatpush1.msra.mxu0 0.0
  %4874 = vmatprep.subr.mxu0 0.0
  %4875 = vmatpush1.msra.mxu0 0.0
  %4876 = vmatprep.subr.mxu0 0.0
  %4877 = vmatpush1.msra.mxu0 0.0
  %4878 = vmatprep.subr.mxu0 0.0
  %4879 = vmatpush1.msra.mxu0 0.0
  %4880 = vmatprep.subr.mxu0 0.0
  %4881 = vmatpush1.msra.mxu0 0.0
  %4882 = vmatprep.subr.mxu0 0.0
  %4883 = vmatpush1.msra.mxu0 0.0
  %4884 = vmatprep.subr.mxu0 0.0
  %4885 = vmatpush1.msra.mxu0 0.0
  %4886 = vmatprep.mubr.f32.mxu0 0.0
  %4887 = vmatmul.mubr.f32.gmra.mrb[0].mxu0 %v1770
  %v4888 = vpop.f32.mrb[0].mxu0
  %v4889 = vadd.f32 %v4820, %v4888
  %v4890 = vpop.f32.mrb[0].mxu0
  %4891 = vmatprep.mubr.f32.mxu0 0.0
  %4892 = vmatmul.mubr.f32.gmra.mrb[0].mxu0 %v2276
  %v4893 = vpop.f32.mrb[0].mxu0
  %v4894 = vadd.f32 %v4820, %v4893
  %v4895 = vpop.f32.mrb[0].mxu0
  %4896 = vmatprep.mubr.f32.mxu0 0.0
  %4897 = vmatmul.mubr.f32.gmra.mrb[0].mxu0 %v2782
  %v4898 = vpop.f32.mrb[0].mxu0
  %v4899 = vadd.f32 %v4820, %v4898
  %v4900 = vpop.f32.mrb[0].mxu0
  %4901 = vmatprep.mubr.f32.mxu0 0.0
  %4902 = vmatmul.mubr.f32.gmra.mrb[0].mxu0 %v3288
  %v4903 = vpop.f32.mrb[0].mxu0
  %v4904 = vadd.f32 %v4820, %v4903
  %v4905 = vpop.f32.mrb[0].mxu0
  %4906 = vmatprep.mubr.f32.mxu0 0.0
  %4907 = vmatmul.mubr.f32.gmra.mrb[0].mxu0 %v3794
  %v4908 = vpop.f32.mrb[0].mxu0
  %v4909 = vadd.f32 %v4820, %v4908
  %v4910 = vpop.f32.mrb[0].mxu0
  %4911 = vmatprep.mubr.f32.mxu0 0.0
  %4912 = vmatmul.mubr.f32.gmra.mrb[0].mxu0 %v4300
  %v4913 = vpop.f32.mrb[0].mxu0
  %v4914 = vadd.f32 %v4820, %v4913
  %v4915 = vpop.f32.mrb[0].mxu0
  %4916 = vmatprep.mubr.f32.mxu0 0.0
  %4917 = vmatmul.mubr.f32.gmra.mrb[0].mxu0 %v4632
  %v4918 = vpop.f32.mrb[0].mxu0
  %v4919 = vadd.f32 %v4820, %v4918
  %v4920 = vpop.f32.mrb[0].mxu0
  %4921 = vmatprep.mubr.f32.mxu0 0.0
  %4922 = vmatmul.mubr.f32.gmra.mrb[0].mxu0 %v4798
  %v4923 = vpop.f32.mrb[0].mxu0
  %v4924 = vadd.f32 %v4820, %v4923
  %v4925 = vpop.f32.mrb[0].mxu0
  %4926 = vdwg.mxu0
  %4927 = vst [vmem:[%s10] sm:$0xff] %v4889
  %4928 = vst [vmem:[%s10 + $0x8] sm:$0xff] %v4894
  %4929 = vst [vmem:[%s10 + $0x10] sm:$0xff] %v4899
  %4930 = vst [vmem:[%s10 + $0x18] sm:$0xff] %v4904
  %4931 = vst [vmem:[%s10 + $0x20] sm:$0xff] %v4909
  %4932 = vst [vmem:[%s10 + $0x28] sm:$0xff] %v4914
  %4933 = vst [vmem:[%s10 + $0x30] sm:$0xff] %v4919
  %4934 = vst [vmem:[%s10 + $0x38] sm:$0xff] %v4924
  // Predicated region
  $region42: #{sales_model_forward.1} parent=0 // pred_check
    _
  $region43: #{sales_model_forward.1} parent=0 // pred_check_branch
    %4936 = sbr.rel (0) target = $region45
  $region44: #{sales_model_forward.1} parent=0 // pred_region
    _
  $region45: #{sales_model_forward.1} parent=0 // pred_fallthru
    _
  // Predicated region
  $region46: #{sales_model_forward.1} parent=0 // pred_check
    _
  $region47: #{sales_model_forward.1} parent=0 // pred_check_branch
    %4938 = sbr.rel (0) target = $region49
  $region48: #{sales_model_forward.1} parent=0 // pred_region
    _
  $region49: #{sales_model_forward.1} parent=0 // pred_fallthru
    _

</llo_original>
